<compile_context>
chip_gen: v7x
topology: tpu7x:2x2x1
jax: 0.10.0
libtpu: 0.0.40
codegen_flags: <defaults>
</compile_context>

<pallas_src>
import jax
import jax.numpy as jnp
from jax import lax
from jax.experimental import pallas as pl
from jax.experimental.pallas import tpu as pltpu

NEG_SLOPE = 0.01  # nn.LeakyReLU default


def _leaky(x):
    return jnp.where(x >= 0, x, NEG_SLOPE * x)


# --------------------------- fused forward kernel -------------------------- #
def make_fused_kernel(num_layers, N, res_alpha):
    bf16 = jnp.bfloat16

    def kernel(x_ref, *refs):
        nw = num_layers * 7 + 4
        w_refs = refs[:nw]
        adj_ref, feat_ref, logits_ref = refs[nw:]

        node0 = x_ref[0]                                        # (N, D) f32

        # diagonal mask built once, reused across all layers
        row = lax.broadcasted_iota(jnp.int32, (N, N), 0)
        col = lax.broadcasted_iota(jnp.int32, (N, N), 1)
        diag = row == col
        neg_diag = jnp.where(diag, 1e8, 0.0)                    # softmax diag penalty

        def make_xij(c):
            # exp(-|c_i - c_j|) flattened over pairs, cast once for the MXU.
            diff = jnp.abs(c[:, None, :] - c[None, :, :])       # (N, N, dc)
            return jnp.exp(-diff).reshape(N * N, c.shape[-1]).astype(bf16)

        # node features kept as channel chunks (node_concat without concatenate)
        chunks = [node0]                                        # f32, (N, dc)
        chunks_bf = [node0.astype(bf16)]                        # bf16 copies for MXU
        xij_chunks = [make_xij(node0)]                          # cached pairwise exp

        for l in range(num_layers):
            (w0_ref, w1_ref, w2_ref, wo_ref, bo_ref,
             wa_ref, wb_ref) = w_refs[l * 7:(l + 1) * 7]
            H2 = w0_ref.shape[1]
            H = w1_ref.shape[1]

            # ---------------- EdgeUpdateNetwork ---------------- #
            w0 = w0_ref[...]                                    # (d_total, 2H) bf16
            acc = jnp.zeros((N * N, H2), jnp.float32)
            off = 0
            for c, xij in zip(chunks, xij_chunks):
                dc = c.shape[-1]
                acc = acc + jnp.dot(xij, w0[off:off + dc, :],
                                    preferred_element_type=jnp.float32)
                off += dc
            h = _leaky(acc)
            h = _leaky(jnp.dot(h.astype(bf16), w1_ref[...],
                               preferred_element_type=jnp.float32))
            h = _leaky(jnp.dot(h.astype(bf16), w2_ref[...],
                               preferred_element_type=jnp.float32))
            # conv_out: VPU multiply + lane reduce (weight stored as (1, H), f32)
            s = jnp.sum(h * wo_ref[...], axis=-1, keepdims=True) + bo_ref[...]
            s = s.reshape(N, N) - neg_diag                      # diag-masked scores
            m = jnp.max(s, axis=-1, keepdims=True)
            p = jnp.exp(s - m)
            adj = p / jnp.sum(p, axis=-1, keepdims=True)        # row softmax, f32
            adj_ref[0, l, :, :] = adj

            # ---------------- NodeUpdateNetwork ---------------- #
            adj_m = jnp.where(diag, 0.0, adj)                   # edge_feat * diag_mask
            denom = jnp.maximum(jnp.sum(jnp.abs(adj_m), axis=-1, keepdims=True), 1e-12)
            adj_n = (adj_m / denom).astype(bf16)                # F.normalize(p=1, dim=-1)
            wa = wa_ref[...]                                    # (d_total, H) bf16
            wb = wb_ref[...]
            hn = jnp.zeros((N, H), jnp.float32)
            off = 0
            for c_bf in chunks_bf:
                dc = c_bf.shape[-1]
                aggr = jnp.dot(adj_n, c_bf,                     # bmm(adj_n, node)
                               preferred_element_type=jnp.float32)
                hn = hn + jnp.dot(c_bf, wa[off:off + dc, :],
                                  preferred_element_type=jnp.float32)
                hn = hn + jnp.dot(aggr.astype(bf16), wb[off:off + dc, :],
                                  preferred_element_type=jnp.float32)
                off += dc
            new_chunk = _leaky(hn)                              # node_concat chunk
            chunks.append(new_chunk)
            chunks_bf.append(new_chunk.astype(bf16))
            if l + 1 < num_layers:                              # only needed by next edge layer
                xij_chunks.append(make_xij(new_chunk))

        # ------------------------- fc1 / fc2 ------------------------- #
        fcw1_ref, fcb1_ref, fcw2_ref, fcb2_ref = w_refs[num_layers * 7:]
        inp_dim = fcw1_ref.shape[1]
        fcw1 = fcw1_ref[...]
        acc = jnp.zeros((N, inp_dim), jnp.float32)
        off = 0
        for c_bf in chunks_bf:
            dc = c_bf.shape[-1]
            acc = acc + jnp.dot(c_bf, fcw1[off:off + dc, :],
                                preferred_element_type=jnp.float32)
            off += dc
        feat = _leaky(acc + fcb1_ref[...])
        if res_alpha != 0.0:                                    # static specialization
            feat = res_alpha * node0 + feat
        feat_ref[0] = feat
        logits_ref[0] = (jnp.dot(feat.astype(bf16), fcw2_ref[...],
                                 preferred_element_type=jnp.float32) + fcb2_ref[...])

    return kernel


# ------------------------------ wrapper ------------------------------------ #
def task_aware_relation_forward(all_emb, params, res_alpha=0.0, return_emb=False):
    B, N, D = all_emb.shape
    layers = params["layers"]
    L = len(layers)
    fc_w1, fc_b1, fc_w2, fc_b2 = params["fc"]
    inp_dim = fc_w1.shape[1]
    num_class = fc_w2.shape[1]
    bf16 = jnp.bfloat16

    flat_args = [all_emb]
    in_specs = [pl.BlockSpec((1, N, D), lambda b: (b, 0, 0))]

    def add_full(a):
        flat_args.append(a)
        in_specs.append(pl.BlockSpec(a.shape, lambda b, nd=a.ndim: (0,) * nd))

    for layer in layers:
        w0, w1, w2, wo, bo = layer["edge"]
        wa, wb = layer["node"]
        add_full(w0.astype(bf16))       # conv0 (bias-free)
        add_full(w1.astype(bf16))       # conv1
        add_full(w2.astype(bf16))       # conv2
        add_full(wo)                    # conv_out weight (1, H), f32 (VPU path)
        add_full(bo)                    # conv_out bias (1, 1), f32
        add_full(wa.astype(bf16))       # node conv0 weight, node half
        add_full(wb.astype(bf16))       # node conv0 weight, aggr half
    add_full(fc_w1.astype(bf16))
    add_full(fc_b1)
    add_full(fc_w2.astype(bf16))
    add_full(fc_b2)

    kern = make_fused_kernel(num_layers=L, N=N, res_alpha=float(res_alpha))
    adj_all, feat, logits = pl.pallas_call(
        kern,
        out_shape=(jax.ShapeDtypeStruct((B, L, N, N), jnp.float32),
                   jax.ShapeDtypeStruct((B, N, inp_dim), jnp.float32),
                   jax.ShapeDtypeStruct((B, N, num_class), jnp.float32)),
        grid=(B,),
        in_specs=in_specs,
        out_specs=(pl.BlockSpec((1, L, N, N), lambda b: (b, 0, 0, 0)),
                   pl.BlockSpec((1, N, inp_dim), lambda b: (b, 0, 0)),
                   pl.BlockSpec((1, N, num_class), lambda b: (b, 0, 0))),
        compiler_params=pltpu.CompilerParams(dimension_semantics=("parallel",)),
    )(*flat_args)

    s_logits = logits[:, :-1, :]
    q_logits = logits[:, -1, :]
    edge_feat_list = [adj_all[:, l:l + 1] for l in range(L)]   # torch (B,1,N,N) layout
    if return_emb:
        return s_logits, q_logits, edge_feat_list, feat[:, :-1, :], feat[:, -1, :]
    return s_logits, q_logits, edge_feat_list


# ------------------------------ parameters --------------------------------- #
def init_params(key, inp_dim, hidden_dim, num_layers, num_class):
    def w(key, shape, scale=0.1):
        return scale * jax.random.normal(key, shape, jnp.float32)

    params = {"layers": []}
    d = inp_dim
    keys = jax.random.split(key, num_layers * 8 + 4)
    ki = iter(range(len(keys)))
    for _ in range(num_layers):
        h = hidden_dim
        edge = (w(keys[next(ki)], (d, 2 * h)),      # conv0 (bias-free)
                w(keys[next(ki)], (2 * h, h)),      # conv1
                w(keys[next(ki)], (h, h)),          # conv2
                w(keys[next(ki)], (1, h)),          # conv_out weight (stored (1,H))
                w(keys[next(ki)], (1, 1)))          # conv_out bias
        node = (w(keys[next(ki)], (d, h)),          # node conv0 weight, node half
                w(keys[next(ki)], (d, h)))          # node conv0 weight, aggr half
        next(ki)                                    # keep key cadence per layer
        params["layers"].append({"edge": edge, "node": node})
        d = d + hidden_dim                          # node_concat=True
    params["fc"] = (w(keys[next(ki)], (d, inp_dim)),          # fc1 weight
                    w(keys[next(ki)], (1, inp_dim)),          # fc1 bias
                    w(keys[next(ki)], (inp_dim, num_class)),  # fc2 weight
                    w(keys[next(ki)], (1, num_class)))        # fc2 bias
    return params


if __name__ == "__main__":
    B, N = 2, 8                    # (batch, nodes) ; last node is the query
    inp_dim, hidden_dim = 32, 32
    num_layers, num_class = 2, 2   # edge_n_layer=3 -> node_n_layer=1 structure

    key = jax.random.PRNGKey(0)
    kx, kp = jax.random.split(key)
    all_emb = jax.random.normal(kx, (B, N, inp_dim), jnp.float32)
    params = init_params(kp, inp_dim, hidden_dim, num_layers, num_class)

    s_logits, q_logits, edge_feat_list = task_aware_relation_forward(
        all_emb, params, res_alpha=0.0)
    jax.block_until_ready((s_logits, q_logits, edge_feat_list))
    assert s_logits.shape == (B, N - 1, num_class)
    assert q_logits.shape == (B, num_class)
    assert all(a.shape == (B, 1, N, N) for a in edge_feat_list)
    assert bool(jnp.all(jnp.isfinite(s_logits))) and bool(jnp.all(jnp.isfinite(q_logits)))
    # adjacency rows are softmax outputs -> each row sums to ~1
    row_sums = edge_feat_list[0].sum(-1)
    assert bool(jnp.allclose(row_sums, 1.0, atol=1e-4))
    print("KERNEL_OK")
</pallas_src>

<mosaic_0001>
module attributes {stable_mosaic.version = 11 : i64} {
  func.func @kernel(%arg0: i32, %arg1: memref<1x8x32xf32, #tpu.memory_space<vmem>>, %arg2: memref<32x64xbf16, #tpu.memory_space<vmem>>, %arg3: memref<64x32xbf16, #tpu.memory_space<vmem>>, %arg4: memref<32x32xbf16, #tpu.memory_space<vmem>>, %arg5: memref<1x32xf32, #tpu.memory_space<vmem>>, %arg6: memref<1x1xf32, #tpu.memory_space<vmem>>, %arg7: memref<32x32xbf16, #tpu.memory_space<vmem>>, %arg8: memref<32x32xbf16, #tpu.memory_space<vmem>>, %arg9: memref<64x64xbf16, #tpu.memory_space<vmem>>, %arg10: memref<64x32xbf16, #tpu.memory_space<vmem>>, %arg11: memref<32x32xbf16, #tpu.memory_space<vmem>>, %arg12: memref<1x32xf32, #tpu.memory_space<vmem>>, %arg13: memref<1x1xf32, #tpu.memory_space<vmem>>, %arg14: memref<64x32xbf16, #tpu.memory_space<vmem>>, %arg15: memref<64x32xbf16, #tpu.memory_space<vmem>>, %arg16: memref<96x32xbf16, #tpu.memory_space<vmem>>, %arg17: memref<1x32xf32, #tpu.memory_space<vmem>>, %arg18: memref<32x2xbf16, #tpu.memory_space<vmem>>, %arg19: memref<1x2xf32, #tpu.memory_space<vmem>>, %arg20: memref<1x2x8x8xf32, #tpu.memory_space<vmem>>, %arg21: memref<1x8x32xf32, #tpu.memory_space<vmem>>, %arg22: memref<1x8x2xf32, #tpu.memory_space<vmem>>) attributes {dimension_semantics = [#tpu.dimension_semantics<parallel>], iteration_bounds = array<i64: 2>, scalar_prefetch = 0 : i64, scratch_operands = 0 : i64, tpu.core_type = #tpu.core_type<tc>, window_params = [{transform_indices = @transform_0, window_bounds = array<i64: 1, 8, 32>}, {pipeline_mode = #tpu.pipeline_mode<synchronous>, transform_indices = @transform_1, window_bounds = array<i64: 32, 64>}, {pipeline_mode = #tpu.pipeline_mode<synchronous>, transform_indices = @transform_2, window_bounds = array<i64: 64, 32>}, {pipeline_mode = #tpu.pipeline_mode<synchronous>, transform_indices = @transform_3, window_bounds = array<i64: 32, 32>}, {pipeline_mode = #tpu.pipeline_mode<synchronous>, transform_indices = @transform_4, window_bounds = array<i64: 1, 32>}, {pipeline_mode = #tpu.pipeline_mode<synchronous>, transform_indices = @transform_5, window_bounds = array<i64: 1, 1>}, {pipeline_mode = #tpu.pipeline_mode<synchronous>, transform_indices = @transform_6, window_bounds = array<i64: 32, 32>}, {pipeline_mode = #tpu.pipeline_mode<synchronous>, transform_indices = @transform_7, window_bounds = array<i64: 32, 32>}, {pipeline_mode = #tpu.pipeline_mode<synchronous>, transform_indices = @transform_8, window_bounds = array<i64: 64, 64>}, {pipeline_mode = #tpu.pipeline_mode<synchronous>, transform_indices = @transform_9, window_bounds = array<i64: 64, 32>}, {pipeline_mode = #tpu.pipeline_mode<synchronous>, transform_indices = @transform_10, window_bounds = array<i64: 32, 32>}, {pipeline_mode = #tpu.pipeline_mode<synchronous>, transform_indices = @transform_11, window_bounds = array<i64: 1, 32>}, {pipeline_mode = #tpu.pipeline_mode<synchronous>, transform_indices = @transform_12, window_bounds = array<i64: 1, 1>}, {pipeline_mode = #tpu.pipeline_mode<synchronous>, transform_indices = @transform_13, window_bounds = array<i64: 64, 32>}, {pipeline_mode = #tpu.pipeline_mode<synchronous>, transform_indices = @transform_14, window_bounds = array<i64: 64, 32>}, {pipeline_mode = #tpu.pipeline_mode<synchronous>, transform_indices = @transform_15, window_bounds = array<i64: 96, 32>}, {pipeline_mode = #tpu.pipeline_mode<synchronous>, transform_indices = @transform_16, window_bounds = array<i64: 1, 32>}, {pipeline_mode = #tpu.pipeline_mode<synchronous>, transform_indices = @transform_17, window_bounds = array<i64: 32, 2>}, {pipeline_mode = #tpu.pipeline_mode<synchronous>, transform_indices = @transform_18, window_bounds = array<i64: 1, 2>}, {transform_indices = @transform_19, window_bounds = array<i64: 1, 2, 8, 8>}, {transform_indices = @transform_20, window_bounds = array<i64: 1, 8, 32>}, {transform_indices = @transform_21, window_bounds = array<i64: 1, 8, 2>}]} {
    %c0 = arith.constant 0 : index
    %c0_0 = arith.constant 0 : index
    %c0_1 = arith.constant 0 : index
    %0 = vector.load %arg1[%c0, %c0_0, %c0_1] : memref<1x8x32xf32, #tpu.memory_space<vmem>>, vector<1x8x32xf32>
    %1 = vector.shape_cast %0 : vector<1x8x32xf32> to vector<8x32xf32>
    %2 = tpu.iota {dimensions = array<i32: 0>} : vector<8x8xi32>
    %3 = tpu.iota {dimensions = array<i32: 1>} : vector<8x8xi32>
    %4 = arith.cmpi eq, %2, %3 : vector<8x8xi32>
    %cst = arith.constant 1.000000e+08 : f32
    %cst_2 = arith.constant 0.000000e+00 : f32
    %5 = vector.broadcast %cst : f32 to vector<8x8xf32>
    %6 = vector.broadcast %cst_2 : f32 to vector<8x8xf32>
    %7 = arith.select %4, %5, %6 : vector<8x8xi1>, vector<8x8xf32>
    %8 = arith.truncf %1 : vector<8x32xf32> to vector<8x32xbf16>
    %9 = vector.shape_cast %1 : vector<8x32xf32> to vector<8x1x32xf32>
    %10 = vector.shape_cast %1 : vector<8x32xf32> to vector<1x8x32xf32>
    %11 = vector.broadcast %9 : vector<8x1x32xf32> to vector<8x8x32xf32>
    %12 = vector.broadcast %10 : vector<1x8x32xf32> to vector<8x8x32xf32>
    %13 = arith.subf %11, %12 : vector<8x8x32xf32>
    %14 = math.absf %13 : vector<8x8x32xf32>
    %cst_3 = arith.constant 0.000000e+00 : f32
    %15 = vector.broadcast %cst_3 : f32 to vector<8x8x32xf32>
    %16 = arith.subf %15, %14 : vector<8x8x32xf32>
    %17 = math.exp %16 : vector<8x8x32xf32>
    %18 = vector.shape_cast %17 : vector<8x8x32xf32> to vector<64x32xf32>
    %19 = arith.truncf %18 : vector<64x32xf32> to vector<64x32xbf16>
    %c0_4 = arith.constant 0 : index
    %c0_5 = arith.constant 0 : index
    %20 = vector.load %arg2[%c0_4, %c0_5] : memref<32x64xbf16, #tpu.memory_space<vmem>>, vector<32x64xbf16>
    %cst_6 = arith.constant 0.000000e+00 : f32
    %21 = vector.broadcast %cst_6 : f32 to vector<64x64xf32>
    %cst_7 = arith.constant dense<0.000000e+00> : vector<64x64xf32>
    %22 = tpu.matmul %19, %20, %cst_7 {dimension_numbers = #tpu.dot_dimension_numbers<[1], [0], [0], [1], [0, 0, 1, 1], [], []>} : vector<64x32xbf16>, vector<32x64xbf16>, vector<64x64xf32> -> vector<64x64xf32>
    %23 = arith.addf %21, %22 : vector<64x64xf32>
    %cst_8 = arith.constant 0.000000e+00 : f32
    %24 = vector.broadcast %cst_8 : f32 to vector<64x64xf32>
    %25 = arith.cmpf oge, %23, %24 : vector<64x64xf32>
    %cst_9 = arith.constant 0.00999999977 : f32
    %26 = vector.broadcast %cst_9 : f32 to vector<64x64xf32>
    %27 = arith.mulf %26, %23 : vector<64x64xf32>
    %28 = arith.select %25, %23, %27 : vector<64x64xi1>, vector<64x64xf32>
    %29 = arith.truncf %28 : vector<64x64xf32> to vector<64x64xbf16>
    %c0_10 = arith.constant 0 : index
    %c0_11 = arith.constant 0 : index
    %30 = vector.load %arg3[%c0_10, %c0_11] : memref<64x32xbf16, #tpu.memory_space<vmem>>, vector<64x32xbf16>
    %cst_12 = arith.constant dense<0.000000e+00> : vector<64x32xf32>
    %31 = tpu.matmul %29, %30, %cst_12 {dimension_numbers = #tpu.dot_dimension_numbers<[1], [0], [0], [1], [0, 0, 1, 1], [], []>} : vector<64x64xbf16>, vector<64x32xbf16>, vector<64x32xf32> -> vector<64x32xf32>
    %cst_13 = arith.constant 0.000000e+00 : f32
    %32 = vector.broadcast %cst_13 : f32 to vector<64x32xf32>
    %33 = arith.cmpf oge, %31, %32 : vector<64x32xf32>
    %cst_14 = arith.constant 0.00999999977 : f32
    %34 = vector.broadcast %cst_14 : f32 to vector<64x32xf32>
    %35 = arith.mulf %34, %31 : vector<64x32xf32>
    %36 = arith.select %33, %31, %35 : vector<64x32xi1>, vector<64x32xf32>
    %37 = arith.truncf %36 : vector<64x32xf32> to vector<64x32xbf16>
    %c0_15 = arith.constant 0 : index
    %c0_16 = arith.constant 0 : index
    %38 = vector.load %arg4[%c0_15, %c0_16] : memref<32x32xbf16, #tpu.memory_space<vmem>>, vector<32x32xbf16>
    %cst_17 = arith.constant dense<0.000000e+00> : vector<64x32xf32>
    %39 = tpu.matmul %37, %38, %cst_17 {dimension_numbers = #tpu.dot_dimension_numbers<[1], [0], [0], [1], [0, 0, 1, 1], [], []>} : vector<64x32xbf16>, vector<32x32xbf16>, vector<64x32xf32> -> vector<64x32xf32>
    %cst_18 = arith.constant 0.000000e+00 : f32
    %40 = vector.broadcast %cst_18 : f32 to vector<64x32xf32>
    %41 = arith.cmpf oge, %39, %40 : vector<64x32xf32>
    %cst_19 = arith.constant 0.00999999977 : f32
    %42 = vector.broadcast %cst_19 : f32 to vector<64x32xf32>
    %43 = arith.mulf %42, %39 : vector<64x32xf32>
    %44 = arith.select %41, %39, %43 : vector<64x32xi1>, vector<64x32xf32>
    %c0_20 = arith.constant 0 : index
    %c0_21 = arith.constant 0 : index
    %45 = vector.load %arg5[%c0_20, %c0_21] : memref<1x32xf32, #tpu.memory_space<vmem>>, vector<1x32xf32>
    %46 = vector.broadcast %45 : vector<1x32xf32> to vector<64x32xf32>
    %47 = arith.mulf %44, %46 : vector<64x32xf32>
    %cst_22 = arith.constant dense<0.000000e+00> : vector<64xf32>
    %48 = vector.multi_reduction <add>, %47, %cst_22 [1] : vector<64x32xf32> to vector<64xf32>
    %49 = vector.shape_cast %48 : vector<64xf32> to vector<64x1xf32>
    %c0_23 = arith.constant 0 : index
    %c0_24 = arith.constant 0 : index
    %50 = vector.load %arg6[%c0_23, %c0_24] : memref<1x1xf32, #tpu.memory_space<vmem>>, vector<1x1xf32>
    %51 = vector.broadcast %50 : vector<1x1xf32> to vector<64x1xf32>
    %52 = arith.addf %49, %51 : vector<64x1xf32>
    %53 = vector.shape_cast %52 : vector<64x1xf32> to vector<8x8xf32>
    %54 = arith.subf %53, %7 : vector<8x8xf32>
    %cst_25 = arith.constant dense<0xFF800000> : vector<8xf32>
    %55 = vector.multi_reduction <maximumf>, %54, %cst_25 [1] : vector<8x8xf32> to vector<8xf32>
    %56 = vector.shape_cast %55 : vector<8xf32> to vector<8x1xf32>
    %57 = vector.broadcast %56 : vector<8x1xf32> to vector<8x8xf32>
    %58 = arith.subf %54, %57 : vector<8x8xf32>
    %59 = math.exp %58 : vector<8x8xf32>
    %cst_26 = arith.constant dense<0.000000e+00> : vector<8xf32>
    %60 = vector.multi_reduction <add>, %59, %cst_26 [1] : vector<8x8xf32> to vector<8xf32>
    %61 = vector.shape_cast %60 : vector<8xf32> to vector<8x1xf32>
    %62 = vector.broadcast %61 : vector<8x1xf32> to vector<8x8xf32>
    %63 = arith.divf %59, %62 : vector<8x8xf32>
    %c0_27 = arith.constant 0 : index
    %c0_28 = arith.constant 0 : index
    %c0_29 = arith.constant 0 : index
    %c0_30 = arith.constant 0 : index
    %64 = vector.load %arg20[%c0_27, %c0_28, %c0_29, %c0_30] : memref<1x2x8x8xf32, #tpu.memory_space<vmem>>, vector<1x1x8x8xf32>
    %65 = vector.shape_cast %64 : vector<1x1x8x8xf32> to vector<8x8xf32>
    %66 = vector.shape_cast %63 : vector<8x8xf32> to vector<1x1x8x8xf32>
    tpu.vector_store %arg20[%c0_27, %c0_28, %c0_29, %c0_30], %66 {strides = array<i32>} : memref<1x2x8x8xf32, #tpu.memory_space<vmem>>, vector<1x1x8x8xf32>,
    %cst_31 = arith.constant 0.000000e+00 : f32
    %67 = vector.broadcast %cst_31 : f32 to vector<8x8xf32>
    %68 = arith.select %4, %67, %63 : vector<8x8xi1>, vector<8x8xf32>
    %69 = math.absf %68 : vector<8x8xf32>
    %cst_32 = arith.constant dense<0.000000e+00> : vector<8xf32>
    %70 = vector.multi_reduction <add>, %69, %cst_32 [1] : vector<8x8xf32> to vector<8xf32>
    %71 = vector.shape_cast %70 : vector<8xf32> to vector<8x1xf32>
    %cst_33 = arith.constant 9.99999996E-13 : f32
    %72 = vector.broadcast %cst_33 : f32 to vector<8x1xf32>
    %73 = arith.maximumf %71, %72 : vector<8x1xf32>
    %74 = vector.broadcast %73 : vector<8x1xf32> to vector<8x8xf32>
    %75 = arith.divf %68, %74 : vector<8x8xf32>
    %76 = arith.truncf %75 : vector<8x8xf32> to vector<8x8xbf16>
    %c0_34 = arith.constant 0 : index
    %c0_35 = arith.constant 0 : index
    %77 = vector.load %arg7[%c0_34, %c0_35] : memref<32x32xbf16, #tpu.memory_space<vmem>>, vector<32x32xbf16>
    %c0_36 = arith.constant 0 : index
    %c0_37 = arith.constant 0 : index
    %78 = vector.load %arg8[%c0_36, %c0_37] : memref<32x32xbf16, #tpu.memory_space<vmem>>, vector<32x32xbf16>
    %cst_38 = arith.constant 0.000000e+00 : f32
    %79 = vector.broadcast %cst_38 : f32 to vector<8x32xf32>
    %cst_39 = arith.constant dense<0.000000e+00> : vector<8x32xf32>
    %80 = tpu.matmul %76, %8, %cst_39 {dimension_numbers = #tpu.dot_dimension_numbers<[1], [0], [0], [1], [0, 0, 1, 1], [], []>} : vector<8x8xbf16>, vector<8x32xbf16>, vector<8x32xf32> -> vector<8x32xf32>
    %cst_40 = arith.constant dense<0.000000e+00> : vector<8x32xf32>
    %81 = tpu.matmul %8, %77, %cst_40 {dimension_numbers = #tpu.dot_dimension_numbers<[1], [0], [0], [1], [0, 0, 1, 1], [], []>} : vector<8x32xbf16>, vector<32x32xbf16>, vector<8x32xf32> -> vector<8x32xf32>
    %82 = arith.addf %79, %81 : vector<8x32xf32>
    %83 = arith.truncf %80 : vector<8x32xf32> to vector<8x32xbf16>
    %cst_41 = arith.constant dense<0.000000e+00> : vector<8x32xf32>
    %84 = tpu.matmul %83, %78, %cst_41 {dimension_numbers = #tpu.dot_dimension_numbers<[1], [0], [0], [1], [0, 0, 1, 1], [], []>} : vector<8x32xbf16>, vector<32x32xbf16>, vector<8x32xf32> -> vector<8x32xf32>
    %85 = arith.addf %82, %84 : vector<8x32xf32>
    %cst_42 = arith.constant 0.000000e+00 : f32
    %86 = vector.broadcast %cst_42 : f32 to vector<8x32xf32>
    %87 = arith.cmpf oge, %85, %86 : vector<8x32xf32>
    %cst_43 = arith.constant 0.00999999977 : f32
    %88 = vector.broadcast %cst_43 : f32 to vector<8x32xf32>
    %89 = arith.mulf %88, %85 : vector<8x32xf32>
    %90 = arith.select %87, %85, %89 : vector<8x32xi1>, vector<8x32xf32>
    %91 = arith.truncf %90 : vector<8x32xf32> to vector<8x32xbf16>
    %92 = vector.shape_cast %90 : vector<8x32xf32> to vector<8x1x32xf32>
    %93 = vector.shape_cast %90 : vector<8x32xf32> to vector<1x8x32xf32>
    %94 = vector.broadcast %92 : vector<8x1x32xf32> to vector<8x8x32xf32>
    %95 = vector.broadcast %93 : vector<1x8x32xf32> to vector<8x8x32xf32>
    %96 = arith.subf %94, %95 : vector<8x8x32xf32>
    %97 = math.absf %96 : vector<8x8x32xf32>
    %cst_44 = arith.constant 0.000000e+00 : f32
    %98 = vector.broadcast %cst_44 : f32 to vector<8x8x32xf32>
    %99 = arith.subf %98, %97 : vector<8x8x32xf32>
    %100 = math.exp %99 : vector<8x8x32xf32>
    %101 = vector.shape_cast %100 : vector<8x8x32xf32> to vector<64x32xf32>
    %102 = arith.truncf %101 : vector<64x32xf32> to vector<64x32xbf16>
    %c0_45 = arith.constant 0 : index
    %c0_46 = arith.constant 0 : index
    %103 = vector.load %arg9[%c0_45, %c0_46] : memref<64x64xbf16, #tpu.memory_space<vmem>>, vector<64x64xbf16>
    %cst_47 = arith.constant 0.000000e+00 : f32
    %104 = vector.broadcast %cst_47 : f32 to vector<64x64xf32>
    %105 = vector.extract_strided_slice %103 {offsets = [0, 0], sizes = [32, 64], strides = [1, 1]} : vector<64x64xbf16> to vector<32x64xbf16>
    %cst_48 = arith.constant dense<0.000000e+00> : vector<64x64xf32>
    %106 = tpu.matmul %19, %105, %cst_48 {dimension_numbers = #tpu.dot_dimension_numbers<[1], [0], [0], [1], [0, 0, 1, 1], [], []>} : vector<64x32xbf16>, vector<32x64xbf16>, vector<64x64xf32> -> vector<64x64xf32>
    %107 = arith.addf %104, %106 : vector<64x64xf32>
    %108 = vector.extract_strided_slice %103 {offsets = [32, 0], sizes = [32, 64], strides = [1, 1]} : vector<64x64xbf16> to vector<32x64xbf16>
    %cst_49 = arith.constant dense<0.000000e+00> : vector<64x64xf32>
    %109 = tpu.matmul %102, %108, %cst_49 {dimension_numbers = #tpu.dot_dimension_numbers<[1], [0], [0], [1], [0, 0, 1, 1], [], []>} : vector<64x32xbf16>, vector<32x64xbf16>, vector<64x64xf32> -> vector<64x64xf32>
    %110 = arith.addf %107, %109 : vector<64x64xf32>
    %cst_50 = arith.constant 0.000000e+00 : f32
    %111 = vector.broadcast %cst_50 : f32 to vector<64x64xf32>
    %112 = arith.cmpf oge, %110, %111 : vector<64x64xf32>
    %cst_51 = arith.constant 0.00999999977 : f32
    %113 = vector.broadcast %cst_51 : f32 to vector<64x64xf32>
    %114 = arith.mulf %113, %110 : vector<64x64xf32>
    %115 = arith.select %112, %110, %114 : vector<64x64xi1>, vector<64x64xf32>
    %116 = arith.truncf %115 : vector<64x64xf32> to vector<64x64xbf16>
    %c0_52 = arith.constant 0 : index
    %c0_53 = arith.constant 0 : index
    %117 = vector.load %arg10[%c0_52, %c0_53] : memref<64x32xbf16, #tpu.memory_space<vmem>>, vector<64x32xbf16>
    %cst_54 = arith.constant dense<0.000000e+00> : vector<64x32xf32>
    %118 = tpu.matmul %116, %117, %cst_54 {dimension_numbers = #tpu.dot_dimension_numbers<[1], [0], [0], [1], [0, 0, 1, 1], [], []>} : vector<64x64xbf16>, vector<64x32xbf16>, vector<64x32xf32> -> vector<64x32xf32>
    %cst_55 = arith.constant 0.000000e+00 : f32
    %119 = vector.broadcast %cst_55 : f32 to vector<64x32xf32>
    %120 = arith.cmpf oge, %118, %119 : vector<64x32xf32>
    %cst_56 = arith.constant 0.00999999977 : f32
    %121 = vector.broadcast %cst_56 : f32 to vector<64x32xf32>
    %122 = arith.mulf %121, %118 : vector<64x32xf32>
    %123 = arith.select %120, %118, %122 : vector<64x32xi1>, vector<64x32xf32>
    %124 = arith.truncf %123 : vector<64x32xf32> to vector<64x32xbf16>
    %c0_57 = arith.constant 0 : index
    %c0_58 = arith.constant 0 : index
    %125 = vector.load %arg11[%c0_57, %c0_58] : memref<32x32xbf16, #tpu.memory_space<vmem>>, vector<32x32xbf16>
    %cst_59 = arith.constant dense<0.000000e+00> : vector<64x32xf32>
    %126 = tpu.matmul %124, %125, %cst_59 {dimension_numbers = #tpu.dot_dimension_numbers<[1], [0], [0], [1], [0, 0, 1, 1], [], []>} : vector<64x32xbf16>, vector<32x32xbf16>, vector<64x32xf32> -> vector<64x32xf32>
    %cst_60 = arith.constant 0.000000e+00 : f32
    %127 = vector.broadcast %cst_60 : f32 to vector<64x32xf32>
    %128 = arith.cmpf oge, %126, %127 : vector<64x32xf32>
    %cst_61 = arith.constant 0.00999999977 : f32
    %129 = vector.broadcast %cst_61 : f32 to vector<64x32xf32>
    %130 = arith.mulf %129, %126 : vector<64x32xf32>
    %131 = arith.select %128, %126, %130 : vector<64x32xi1>, vector<64x32xf32>
    %c0_62 = arith.constant 0 : index
    %c0_63 = arith.constant 0 : index
    %132 = vector.load %arg12[%c0_62, %c0_63] : memref<1x32xf32, #tpu.memory_space<vmem>>, vector<1x32xf32>
    %133 = vector.broadcast %132 : vector<1x32xf32> to vector<64x32xf32>
    %134 = arith.mulf %131, %133 : vector<64x32xf32>
    %cst_64 = arith.constant dense<0.000000e+00> : vector<64xf32>
    %135 = vector.multi_reduction <add>, %134, %cst_64 [1] : vector<64x32xf32> to vector<64xf32>
    %136 = vector.shape_cast %135 : vector<64xf32> to vector<64x1xf32>
    %c0_65 = arith.constant 0 : index
    %c0_66 = arith.constant 0 : index
    %137 = vector.load %arg13[%c0_65, %c0_66] : memref<1x1xf32, #tpu.memory_space<vmem>>, vector<1x1xf32>
    %138 = vector.broadcast %137 : vector<1x1xf32> to vector<64x1xf32>
    %139 = arith.addf %136, %138 : vector<64x1xf32>
    %140 = vector.shape_cast %139 : vector<64x1xf32> to vector<8x8xf32>
    %141 = arith.subf %140, %7 : vector<8x8xf32>
    %cst_67 = arith.constant dense<0xFF800000> : vector<8xf32>
    %142 = vector.multi_reduction <maximumf>, %141, %cst_67 [1] : vector<8x8xf32> to vector<8xf32>
    %143 = vector.shape_cast %142 : vector<8xf32> to vector<8x1xf32>
    %144 = vector.broadcast %143 : vector<8x1xf32> to vector<8x8xf32>
    %145 = arith.subf %141, %144 : vector<8x8xf32>
    %146 = math.exp %145 : vector<8x8xf32>
    %cst_68 = arith.constant dense<0.000000e+00> : vector<8xf32>
    %147 = vector.multi_reduction <add>, %146, %cst_68 [1] : vector<8x8xf32> to vector<8xf32>
    %148 = vector.shape_cast %147 : vector<8xf32> to vector<8x1xf32>
    %149 = vector.broadcast %148 : vector<8x1xf32> to vector<8x8xf32>
    %150 = arith.divf %146, %149 : vector<8x8xf32>
    %c0_69 = arith.constant 0 : index
    %c1 = arith.constant 1 : index
    %c0_70 = arith.constant 0 : index
    %c0_71 = arith.constant 0 : index
    %151 = vector.load %arg20[%c0_69, %c1, %c0_70, %c0_71] : memref<1x2x8x8xf32, #tpu.memory_space<vmem>>, vector<1x1x8x8xf32>
    %152 = vector.shape_cast %151 : vector<1x1x8x8xf32> to vector<8x8xf32>
    %153 = vector.shape_cast %150 : vector<8x8xf32> to vector<1x1x8x8xf32>
    tpu.vector_store %arg20[%c0_69, %c1, %c0_70, %c0_71], %153 {strides = array<i32>} : memref<1x2x8x8xf32, #tpu.memory_space<vmem>>, vector<1x1x8x8xf32>,
    %cst_72 = arith.constant 0.000000e+00 : f32
    %154 = vector.broadcast %cst_72 : f32 to vector<8x8xf32>
    %155 = arith.select %4, %154, %150 : vector<8x8xi1>, vector<8x8xf32>
    %156 = math.absf %155 : vector<8x8xf32>
    %cst_73 = arith.constant dense<0.000000e+00> : vector<8xf32>
    %157 = vector.multi_reduction <add>, %156, %cst_73 [1] : vector<8x8xf32> to vector<8xf32>
    %158 = vector.shape_cast %157 : vector<8xf32> to vector<8x1xf32>
    %cst_74 = arith.constant 9.99999996E-13 : f32
    %159 = vector.broadcast %cst_74 : f32 to vector<8x1xf32>
    %160 = arith.maximumf %158, %159 : vector<8x1xf32>
    %161 = vector.broadcast %160 : vector<8x1xf32> to vector<8x8xf32>
    %162 = arith.divf %155, %161 : vector<8x8xf32>
    %163 = arith.truncf %162 : vector<8x8xf32> to vector<8x8xbf16>
    %c0_75 = arith.constant 0 : index
    %c0_76 = arith.constant 0 : index
    %164 = vector.load %arg14[%c0_75, %c0_76] : memref<64x32xbf16, #tpu.memory_space<vmem>>, vector<64x32xbf16>
    %c0_77 = arith.constant 0 : index
    %c0_78 = arith.constant 0 : index
    %165 = vector.load %arg15[%c0_77, %c0_78] : memref<64x32xbf16, #tpu.memory_space<vmem>>, vector<64x32xbf16>
    %cst_79 = arith.constant 0.000000e+00 : f32
    %166 = vector.broadcast %cst_79 : f32 to vector<8x32xf32>
    %cst_80 = arith.constant dense<0.000000e+00> : vector<8x32xf32>
    %167 = tpu.matmul %163, %8, %cst_80 {dimension_numbers = #tpu.dot_dimension_numbers<[1], [0], [0], [1], [0, 0, 1, 1], [], []>} : vector<8x8xbf16>, vector<8x32xbf16>, vector<8x32xf32> -> vector<8x32xf32>
    %168 = vector.extract_strided_slice %164 {offsets = [0, 0], sizes = [32, 32], strides = [1, 1]} : vector<64x32xbf16> to vector<32x32xbf16>
    %cst_81 = arith.constant dense<0.000000e+00> : vector<8x32xf32>
    %169 = tpu.matmul %8, %168, %cst_81 {dimension_numbers = #tpu.dot_dimension_numbers<[1], [0], [0], [1], [0, 0, 1, 1], [], []>} : vector<8x32xbf16>, vector<32x32xbf16>, vector<8x32xf32> -> vector<8x32xf32>
    %170 = arith.addf %166, %169 : vector<8x32xf32>
    %171 = arith.truncf %167 : vector<8x32xf32> to vector<8x32xbf16>
    %172 = vector.extract_strided_slice %165 {offsets = [0, 0], sizes = [32, 32], strides = [1, 1]} : vector<64x32xbf16> to vector<32x32xbf16>
    %cst_82 = arith.constant dense<0.000000e+00> : vector<8x32xf32>
    %173 = tpu.matmul %171, %172, %cst_82 {dimension_numbers = #tpu.dot_dimension_numbers<[1], [0], [0], [1], [0, 0, 1, 1], [], []>} : vector<8x32xbf16>, vector<32x32xbf16>, vector<8x32xf32> -> vector<8x32xf32>
    %174 = arith.addf %170, %173 : vector<8x32xf32>
    %cst_83 = arith.constant dense<0.000000e+00> : vector<8x32xf32>
    %175 = tpu.matmul %163, %91, %cst_83 {dimension_numbers = #tpu.dot_dimension_numbers<[1], [0], [0], [1], [0, 0, 1, 1], [], []>} : vector<8x8xbf16>, vector<8x32xbf16>, vector<8x32xf32> -> vector<8x32xf32>
    %176 = vector.extract_strided_slice %164 {offsets = [32, 0], sizes = [32, 32], strides = [1, 1]} : vector<64x32xbf16> to vector<32x32xbf16>
    %cst_84 = arith.constant dense<0.000000e+00> : vector<8x32xf32>
    %177 = tpu.matmul %91, %176, %cst_84 {dimension_numbers = #tpu.dot_dimension_numbers<[1], [0], [0], [1], [0, 0, 1, 1], [], []>} : vector<8x32xbf16>, vector<32x32xbf16>, vector<8x32xf32> -> vector<8x32xf32>
    %178 = arith.addf %174, %177 : vector<8x32xf32>
    %179 = arith.truncf %175 : vector<8x32xf32> to vector<8x32xbf16>
    %180 = vector.extract_strided_slice %165 {offsets = [32, 0], sizes = [32, 32], strides = [1, 1]} : vector<64x32xbf16> to vector<32x32xbf16>
    %cst_85 = arith.constant dense<0.000000e+00> : vector<8x32xf32>
    %181 = tpu.matmul %179, %180, %cst_85 {dimension_numbers = #tpu.dot_dimension_numbers<[1], [0], [0], [1], [0, 0, 1, 1], [], []>} : vector<8x32xbf16>, vector<32x32xbf16>, vector<8x32xf32> -> vector<8x32xf32>
    %182 = arith.addf %178, %181 : vector<8x32xf32>
    %cst_86 = arith.constant 0.000000e+00 : f32
    %183 = vector.broadcast %cst_86 : f32 to vector<8x32xf32>
    %184 = arith.cmpf oge, %182, %183 : vector<8x32xf32>
    %cst_87 = arith.constant 0.00999999977 : f32
    %185 = vector.broadcast %cst_87 : f32 to vector<8x32xf32>
    %186 = arith.mulf %185, %182 : vector<8x32xf32>
    %187 = arith.select %184, %182, %186 : vector<8x32xi1>, vector<8x32xf32>
    %188 = arith.truncf %187 : vector<8x32xf32> to vector<8x32xbf16>
    %c0_88 = arith.constant 0 : index
    %c0_89 = arith.constant 0 : index
    %189 = vector.load %arg16[%c0_88, %c0_89] : memref<96x32xbf16, #tpu.memory_space<vmem>>, vector<96x32xbf16>
    %cst_90 = arith.constant 0.000000e+00 : f32
    %190 = vector.broadcast %cst_90 : f32 to vector<8x32xf32>
    %191 = vector.extract_strided_slice %189 {offsets = [0, 0], sizes = [32, 32], strides = [1, 1]} : vector<96x32xbf16> to vector<32x32xbf16>
    %cst_91 = arith.constant dense<0.000000e+00> : vector<8x32xf32>
    %192 = tpu.matmul %8, %191, %cst_91 {dimension_numbers = #tpu.dot_dimension_numbers<[1], [0], [0], [1], [0, 0, 1, 1], [], []>} : vector<8x32xbf16>, vector<32x32xbf16>, vector<8x32xf32> -> vector<8x32xf32>
    %193 = arith.addf %190, %192 : vector<8x32xf32>
    %194 = vector.extract_strided_slice %189 {offsets = [32, 0], sizes = [32, 32], strides = [1, 1]} : vector<96x32xbf16> to vector<32x32xbf16>
    %cst_92 = arith.constant dense<0.000000e+00> : vector<8x32xf32>
    %195 = tpu.matmul %91, %194, %cst_92 {dimension_numbers = #tpu.dot_dimension_numbers<[1], [0], [0], [1], [0, 0, 1, 1], [], []>} : vector<8x32xbf16>, vector<32x32xbf16>, vector<8x32xf32> -> vector<8x32xf32>
    %196 = arith.addf %193, %195 : vector<8x32xf32>
    %197 = vector.extract_strided_slice %189 {offsets = [64, 0], sizes = [32, 32], strides = [1, 1]} : vector<96x32xbf16> to vector<32x32xbf16>
    %cst_93 = arith.constant dense<0.000000e+00> : vector<8x32xf32>
    %198 = tpu.matmul %188, %197, %cst_93 {dimension_numbers = #tpu.dot_dimension_numbers<[1], [0], [0], [1], [0, 0, 1, 1], [], []>} : vector<8x32xbf16>, vector<32x32xbf16>, vector<8x32xf32> -> vector<8x32xf32>
    %199 = arith.addf %196, %198 : vector<8x32xf32>
    %c0_94 = arith.constant 0 : index
    %c0_95 = arith.constant 0 : index
    %200 = vector.load %arg17[%c0_94, %c0_95] : memref<1x32xf32, #tpu.memory_space<vmem>>, vector<1x32xf32>
    %201 = vector.broadcast %200 : vector<1x32xf32> to vector<8x32xf32>
    %202 = arith.addf %199, %201 : vector<8x32xf32>
    %cst_96 = arith.constant 0.000000e+00 : f32
    %203 = vector.broadcast %cst_96 : f32 to vector<8x32xf32>
    %204 = arith.cmpf oge, %202, %203 : vector<8x32xf32>
    %cst_97 = arith.constant 0.00999999977 : f32
    %205 = vector.broadcast %cst_97 : f32 to vector<8x32xf32>
    %206 = arith.mulf %205, %202 : vector<8x32xf32>
    %207 = arith.select %204, %202, %206 : vector<8x32xi1>, vector<8x32xf32>
    %c0_98 = arith.constant 0 : index
    %c0_99 = arith.constant 0 : index
    %c0_100 = arith.constant 0 : index
    %208 = vector.load %arg21[%c0_98, %c0_99, %c0_100] : memref<1x8x32xf32, #tpu.memory_space<vmem>>, vector<1x8x32xf32>
    %209 = vector.shape_cast %208 : vector<1x8x32xf32> to vector<8x32xf32>
    %210 = vector.shape_cast %207 : vector<8x32xf32> to vector<1x8x32xf32>
    tpu.vector_store %arg21[%c0_98, %c0_99, %c0_100], %210 {strides = array<i32>} : memref<1x8x32xf32, #tpu.memory_space<vmem>>, vector<1x8x32xf32>,
    %211 = arith.truncf %207 : vector<8x32xf32> to vector<8x32xbf16>
    %c0_101 = arith.constant 0 : index
    %c0_102 = arith.constant 0 : index
    %212 = vector.load %arg18[%c0_101, %c0_102] : memref<32x2xbf16, #tpu.memory_space<vmem>>, vector<32x2xbf16>
    %cst_103 = arith.constant dense<0.000000e+00> : vector<8x2xf32>
    %213 = tpu.matmul %211, %212, %cst_103 {dimension_numbers = #tpu.dot_dimension_numbers<[1], [0], [0], [1], [0, 0, 1, 1], [], []>} : vector<8x32xbf16>, vector<32x2xbf16>, vector<8x2xf32> -> vector<8x2xf32>
    %c0_104 = arith.constant 0 : index
    %c0_105 = arith.constant 0 : index
    %214 = vector.load %arg19[%c0_104, %c0_105] : memref<1x2xf32, #tpu.memory_space<vmem>>, vector<1x2xf32>
    %215 = vector.broadcast %214 : vector<1x2xf32> to vector<8x2xf32>
    %216 = arith.addf %213, %215 : vector<8x2xf32>
    %c0_106 = arith.constant 0 : index
    %c0_107 = arith.constant 0 : index
    %c0_108 = arith.constant 0 : index
    %217 = vector.load %arg22[%c0_106, %c0_107, %c0_108] : memref<1x8x2xf32, #tpu.memory_space<vmem>>, vector<1x8x2xf32>
    %218 = vector.shape_cast %217 : vector<1x8x2xf32> to vector<8x2xf32>
    %219 = vector.shape_cast %216 : vector<8x2xf32> to vector<1x8x2xf32>
    tpu.vector_store %arg22[%c0_106, %c0_107, %c0_108], %219 {strides = array<i32>} : memref<1x8x2xf32, #tpu.memory_space<vmem>>, vector<1x8x2xf32>,
    return
  }
  func.func @transform_0(%arg0: i32) -> (i32, i32, i32) {
    %c0_i32 = arith.constant 0 : i32
    %c0_i32_0 = arith.constant 0 : i32
    %c0_i32_1 = arith.constant 0 : i32
    return %arg0, %c0_i32, %c0_i32_0 : i32, i32, i32
  }
  func.func @transform_1(%arg0: i32) -> (i32, i32) {
    %c0_i32 = arith.constant 0 : i32
    %c0_i32_0 = arith.constant 0 : i32
    %c0_i32_1 = arith.constant 0 : i32
    return %c0_i32, %c0_i32_0 : i32, i32
  }
  func.func @transform_2(%arg0: i32) -> (i32, i32) {
    %c0_i32 = arith.constant 0 : i32
    %c0_i32_0 = arith.constant 0 : i32
    %c0_i32_1 = arith.constant 0 : i32
    return %c0_i32, %c0_i32_0 : i32, i32
  }
  func.func @transform_3(%arg0: i32) -> (i32, i32) {
    %c0_i32 = arith.constant 0 : i32
    %c0_i32_0 = arith.constant 0 : i32
    %c0_i32_1 = arith.constant 0 : i32
    return %c0_i32, %c0_i32_0 : i32, i32
  }
  func.func @transform_4(%arg0: i32) -> (i32, i32) {
    %c0_i32 = arith.constant 0 : i32
    %c0_i32_0 = arith.constant 0 : i32
    %c0_i32_1 = arith.constant 0 : i32
    return %c0_i32, %c0_i32_0 : i32, i32
  }
  func.func @transform_5(%arg0: i32) -> (i32, i32) {
    %c0_i32 = arith.constant 0 : i32
    %c0_i32_0 = arith.constant 0 : i32
    %c0_i32_1 = arith.constant 0 : i32
    return %c0_i32, %c0_i32_0 : i32, i32
  }
  func.func @transform_6(%arg0: i32) -> (i32, i32) {
    %c0_i32 = arith.constant 0 : i32
    %c0_i32_0 = arith.constant 0 : i32
    %c0_i32_1 = arith.constant 0 : i32
    return %c0_i32, %c0_i32_0 : i32, i32
  }
  func.func @transform_7(%arg0: i32) -> (i32, i32) {
    %c0_i32 = arith.constant 0 : i32
    %c0_i32_0 = arith.constant 0 : i32
    %c0_i32_1 = arith.constant 0 : i32
    return %c0_i32, %c0_i32_0 : i32, i32
  }
  func.func @transform_8(%arg0: i32) -> (i32, i32) {
    %c0_i32 = arith.constant 0 : i32
    %c0_i32_0 = arith.constant 0 : i32
    %c0_i32_1 = arith.constant 0 : i32
    return %c0_i32, %c0_i32_0 : i32, i32
  }
  func.func @transform_9(%arg0: i32) -> (i32, i32) {
    %c0_i32 = arith.constant 0 : i32
    %c0_i32_0 = arith.constant 0 : i32
    %c0_i32_1 = arith.constant 0 : i32
    return %c0_i32, %c0_i32_0 : i32, i32
  }
  func.func @transform_10(%arg0: i32) -> (i32, i32) {
    %c0_i32 = arith.constant 0 : i32
    %c0_i32_0 = arith.constant 0 : i32
    %c0_i32_1 = arith.constant 0 : i32
    return %c0_i32, %c0_i32_0 : i32, i32
  }
  func.func @transform_11(%arg0: i32) -> (i32, i32) {
    %c0_i32 = arith.constant 0 : i32
    %c0_i32_0 = arith.constant 0 : i32
    %c0_i32_1 = arith.constant 0 : i32
    return %c0_i32, %c0_i32_0 : i32, i32
  }
  func.func @transform_12(%arg0: i32) -> (i32, i32) {
    %c0_i32 = arith.constant 0 : i32
    %c0_i32_0 = arith.constant 0 : i32
    %c0_i32_1 = arith.constant 0 : i32
    return %c0_i32, %c0_i32_0 : i32, i32
  }
  func.func @transform_13(%arg0: i32) -> (i32, i32) {
    %c0_i32 = arith.constant 0 : i32
    %c0_i32_0 = arith.constant 0 : i32
    %c0_i32_1 = arith.constant 0 : i32
    return %c0_i32, %c0_i32_0 : i32, i32
  }
  func.func @transform_14(%arg0: i32) -> (i32, i32) {
    %c0_i32 = arith.constant 0 : i32
    %c0_i32_0 = arith.constant 0 : i32
    %c0_i32_1 = arith.constant 0 : i32
    return %c0_i32, %c0_i32_0 : i32, i32
  }
  func.func @transform_15(%arg0: i32) -> (i32, i32) {
    %c0_i32 = arith.constant 0 : i32
    %c0_i32_0 = arith.constant 0 : i32
    %c0_i32_1 = arith.constant 0 : i32
    return %c0_i32, %c0_i32_0 : i32, i32
  }
  func.func @transform_16(%arg0: i32) -> (i32, i32) {
    %c0_i32 = arith.constant 0 : i32
    %c0_i32_0 = arith.constant 0 : i32
    %c0_i32_1 = arith.constant 0 : i32
    return %c0_i32, %c0_i32_0 : i32, i32
  }
  func.func @transform_17(%arg0: i32) -> (i32, i32) {
    %c0_i32 = arith.constant 0 : i32
    %c0_i32_0 = arith.constant 0 : i32
    %c0_i32_1 = arith.constant 0 : i32
    return %c0_i32, %c0_i32_0 : i32, i32
  }
  func.func @transform_18(%arg0: i32) -> (i32, i32) {
    %c0_i32 = arith.constant 0 : i32
    %c0_i32_0 = arith.constant 0 : i32
    %c0_i32_1 = arith.constant 0 : i32
    return %c0_i32, %c0_i32_0 : i32, i32
  }
  func.func @transform_19(%arg0: i32) -> (i32, i32, i32, i32) {
    %c0_i32 = arith.constant 0 : i32
    %c0_i32_0 = arith.constant 0 : i32
    %c0_i32_1 = arith.constant 0 : i32
    %c0_i32_2 = arith.constant 0 : i32
    return %arg0, %c0_i32, %c0_i32_0, %c0_i32_1 : i32, i32, i32, i32
  }
  func.func @transform_20(%arg0: i32) -> (i32, i32, i32) {
    %c0_i32 = arith.constant 0 : i32
    %c0_i32_0 = arith.constant 0 : i32
    %c0_i32_1 = arith.constant 0 : i32
    return %arg0, %c0_i32, %c0_i32_0 : i32, i32, i32
  }
  func.func @transform_21(%arg0: i32) -> (i32, i32, i32) {
    %c0_i32 = arith.constant 0 : i32
    %c0_i32_0 = arith.constant 0 : i32
    %c0_i32_1 = arith.constant 0 : i32
    return %arg0, %c0_i32, %c0_i32_0 : i32, i32, i32
  }
}

</mosaic_0001>

<llo_original>
// kernel: tpu_custom_call.1
$region0: #{tpu_custom_call.1}
  #allocation0 [shape = 'u32[]', space=smem, size = 0x4, offset = 0x4, fixed_abs, tag = 'smem constant byte address 0x4 - core index']
  #allocation1 [shape = 'u32[144,128]{1,0:T(1,128)}', space=vmem, size = 0x12000, scoped, tag = 'internal scratch']
  #allocation2 [shape = 'f32[1,1]{1,0:T(1,128)S(1)}', space=vmem, size = 0x200, scoped, tag = 'scoped memory for tpu_custom_call.1']
  #allocation3 [shape = 'f32[1,1]{1,0:T(1,128)S(1)}', space=vmem, size = 0x200, scoped, tag = 'scoped memory for tpu_custom_call.1']
  %s0 = inlined_call_operand.vmem [shape: f32[2,8,32], index: 0, kind: input, shape index: {}]
  %s1 = inlined_call_operand.vmem [shape: bf16[32,64], index: 1, kind: input, shape index: {}]
  %s2 = inlined_call_operand.vmem [shape: bf16[64,32], index: 2, kind: input, shape index: {}]
  %s3 = inlined_call_operand.vmem [shape: bf16[32,32], index: 3, kind: input, shape index: {}]
  %s4 = inlined_call_operand.vmem [shape: f32[1,32], index: 4, kind: input, shape index: {}]
  %s5 = inlined_call_operand.<no memory space> [shape: f32[1,1], index: 5, kind: input, shape index: {}]
  %s6 = inlined_call_operand.vmem [shape: bf16[32,32], index: 6, kind: input, shape index: {}]
  %s7 = inlined_call_operand.vmem [shape: bf16[32,32], index: 7, kind: input, shape index: {}]
  %s8 = inlined_call_operand.vmem [shape: bf16[64,64], index: 8, kind: input, shape index: {}]
  %s9 = inlined_call_operand.vmem [shape: bf16[64,32], index: 9, kind: input, shape index: {}]
  %s10 = inlined_call_operand.vmem [shape: bf16[32,32], index: 10, kind: input, shape index: {}]
  %s11 = inlined_call_operand.vmem [shape: f32[1,32], index: 11, kind: input, shape index: {}]
  %s12 = inlined_call_operand.<no memory space> [shape: f32[1,1], index: 12, kind: input, shape index: {}]
  %s13 = inlined_call_operand.vmem [shape: bf16[64,32], index: 13, kind: input, shape index: {}]
  %s14 = inlined_call_operand.vmem [shape: bf16[64,32], index: 14, kind: input, shape index: {}]
  %s15 = inlined_call_operand.vmem [shape: bf16[96,32], index: 15, kind: input, shape index: {}]
  %s16 = inlined_call_operand.vmem [shape: f32[1,32], index: 16, kind: input, shape index: {}]
  %s17 = inlined_call_operand.vmem [shape: bf16[32,2], index: 17, kind: input, shape index: {}]
  %s18 = inlined_call_operand.vmem [shape: f32[1,2], index: 18, kind: input, shape index: {}]
  %s19 = inlined_call_operand.hbm [shape: f32[2,2,8,8], index: 19, kind: output, shape index: {0}]
  %s20 = inlined_call_operand.hbm [shape: f32[2,8,32], index: 20, kind: output, shape index: {1}]
  %s21 = inlined_call_operand.vmem [shape: f32[2,8,2], index: 21, kind: output, shape index: {2}]
  %22 = xla_tuple %s19, %s20, %s21
  %s23 = sld [smem:[#allocation0]]
  $region125: #{tpu_custom_call.1} parent=0
    _
  %s25 = ssub.s32 1, %s23
  %s26 = scalar_select 0, %s25, %s23
  %v27 = vstv %s5
  %28 = vst [vmem:[#allocation2] sm:$0x1] %v27
  %v29 = vstv %s12
  %30 = vst [vmem:[#allocation3] sm:$0x1] %v29
  $region1: #{tpu_custom_call.1} parent=0
    #allocation4 [shape = 'u8[16384]{0}', space=vmem, size = 0x4000, scoped, tag = 'output window, operand 0']
    #allocation5 [shape = 's32[2]{0}', space=sflag, size = 0x8, scoped, tag = 'scoped memory for tpu_custom_call.1']
    #allocation6 [shape = 'u8[8192]{0}', space=vmem, size = 0x2000, scoped, tag = 'output window, operand 1']
    #allocation7 [shape = 's32[2]{0}', space=sflag, size = 0x8, scoped, tag = 'scoped memory for tpu_custom_call.1']
    %31 = vsyncpa [#allocation5], 0
    %s32 = scalar_lea.sflag [#allocation5], 1
    %33 = vsyncpa %s32, 0
    %34 = vsyncpa [#allocation7], 0
    %s35 = scalar_lea.sflag [#allocation7], 1
    %36 = vsyncpa %s35, 0
    loop: start=0, step=1, limit=4
    $region2: #{tpu_custom_call.1} parent=1 // loop_pre_header
      _
    $region3: #{tpu_custom_call.1} parent=1 // loop_header
      %s38 = sphi 0, %s42
      %p39 = scmp.ge.s32.totalorder %s38, 4
      %s48 = sphi 0, %s50
      %s51 = sphi 0, %s48
      %s52 = sphi 0, %s51
      %s68 = sphi 0, %s52
      %s72 = sphi 0, %s72
      %s74 = sphi 0, %s72
      %s75 = sphi 0, %s74
      %s89 = sphi 0, %s75
      %s93 = sphi 0, %s93
      %s95 = sphi 0, %s93
      %s96 = sphi 0, %s95
      %s110 = sphi 0, %s96
      %s114 = sphi 0, %s114
      %s116 = sphi 0, %s114
      %s117 = sphi 0, %s116
      %s131 = sphi 0, %s117
      %s135 = sphi 0, %s135
      %s137 = sphi 0, %s135
      %s138 = sphi 0, %s137
      %s152 = sphi 0, %s138
      %s156 = sphi 0, %s156
      %s158 = sphi 0, %s156
      %s159 = sphi 0, %s158
      %s173 = sphi 0, %s159
      %s177 = sphi 0, %s177
      %s179 = sphi 0, %s177
      %s180 = sphi 0, %s179
      %s194 = sphi 0, %s180
      %s198 = sphi 0, %s198
      %s200 = sphi 0, %s198
      %s201 = sphi 0, %s200
      %s215 = sphi 0, %s201
      %s219 = sphi 0, %s219
      %s221 = sphi 0, %s219
      %s222 = sphi 0, %s221
      %s236 = sphi 0, %s222
      %s240 = sphi 0, %s240
      %s242 = sphi 0, %s240
      %s243 = sphi 0, %s242
      %s257 = sphi 0, %s243
      %s261 = sphi 0, %s261
      %s263 = sphi 0, %s261
      %s264 = sphi 0, %s263
      %s278 = sphi 0, %s264
      %s282 = sphi 0, %s282
      %s284 = sphi 0, %s282
      %s285 = sphi 0, %s284
      %s299 = sphi 0, %s285
      %s303 = sphi 0, %s303
      %s305 = sphi 0, %s303
      %s306 = sphi 0, %s305
      %s320 = sphi 0, %s306
      %s324 = sphi 0, %s324
      %s326 = sphi 0, %s324
      %s327 = sphi 0, %s326
      %s341 = sphi 0, %s327
      %s345 = sphi 0, %s345
      %s347 = sphi 0, %s345
      %s348 = sphi 0, %s347
      %s362 = sphi 0, %s348
      %s366 = sphi 0, %s366
      %s368 = sphi 0, %s366
      %s369 = sphi 0, %s368
      %s383 = sphi 0, %s369
      %s387 = sphi 0, %s387
      %s389 = sphi 0, %s387
      %s390 = sphi 0, %s389
      %s404 = sphi 0, %s390
      %s408 = sphi 0, %s408
      %s410 = sphi 0, %s408
      %s411 = sphi 0, %s410
      %s425 = sphi 0, %s411
      %s429 = sphi 0, %s429
      %s431 = sphi 0, %s429
      %s432 = sphi 0, %s431
      %s446 = sphi 0, %s432
      %s452 = sphi 0, %s454
      %s455 = sphi 0, %s452
      %s456 = sphi 0, %s455
      %s472 = sphi 0, %s456
      %s478 = sphi 0, %s480
      %s481 = sphi 0, %s478
      %s482 = sphi 0, %s481
      %s498 = sphi 0, %s482
      %s504 = sphi 0, %s506
      %s507 = sphi 0, %s504
      %s508 = sphi 0, %s507
      %s524 = sphi 0, %s508
    $region4: #{tpu_custom_call.1} parent=1 // loop_header_branch
      %41 = sbr.rel (%p39) target = $region8
    $region5: #{tpu_custom_call.1} parent=1 // loop_body
      %s43 = ssub.s32 %s38, 1
      %s44 = ssub.s32 %s38, 2
      %s45 = sadd.s32 %s38, 1
      %s46 = ssub.s32 %s38, %s45
      %p47 = scmp.eq.s32.totalorder %s46, 0
      %s49 = sadd.s32 %s48, 1
      %s50 = scalar_select %p47, %s48, %s49
      %p53 = pneg %p47
      %p54 = scmp.eq.s32.totalorder %s38, 1
      %p55 = por %p53, %p54
      %p56 = scmp.ne.s32.totalorder %s48, %s51
      %p57 = scmp.eq.s32.totalorder %s38, 0
      %p58 = por %p56, %p57
      %p59 = scmp.ne.s32.totalorder %s48, %s51
      %p60 = scmp.eq.s32.totalorder %s43, 1
      %p61 = por %p59, %p60
      %p62 = scmp.ne.s32.totalorder %s51, %s52
      %p63 = scmp.eq.s32.totalorder %s43, 0
      %p64 = por %p62, %p63
      %p65 = scmp.ne.s32.totalorder %s51, %s52
      %p66 = scmp.eq.s32.totalorder %s44, 1
      %p67 = por %p65, %p66
      %p69 = scmp.ne.s32.totalorder %s52, %s68
      %p70 = scmp.eq.s32.totalorder %s44, 0
      %p71 = por %p69, %p70
      %s73 = sadd.s32 %s72, 1
      %p76 = scmp.eq.s32.totalorder %s38, 1
      %p77 = scmp.ne.s32.totalorder %s72, %s74
      %p78 = scmp.eq.s32.totalorder %s38, 0
      %p79 = por %p77, %p78
      %p80 = scmp.ne.s32.totalorder %s72, %s74
      %p81 = scmp.eq.s32.totalorder %s43, 1
      %p82 = por %p80, %p81
      %p83 = scmp.ne.s32.totalorder %s74, %s75
      %p84 = scmp.eq.s32.totalorder %s43, 0
      %p85 = por %p83, %p84
      %p86 = scmp.ne.s32.totalorder %s74, %s75
      %p87 = scmp.eq.s32.totalorder %s44, 1
      %p88 = por %p86, %p87
      %p90 = scmp.ne.s32.totalorder %s75, %s89
      %p91 = scmp.eq.s32.totalorder %s44, 0
      %p92 = por %p90, %p91
      %s94 = sadd.s32 %s93, 1
      %p97 = scmp.eq.s32.totalorder %s38, 1
      %p98 = scmp.ne.s32.totalorder %s93, %s95
      %p99 = scmp.eq.s32.totalorder %s38, 0
      %p100 = por %p98, %p99
      %p101 = scmp.ne.s32.totalorder %s93, %s95
      %p102 = scmp.eq.s32.totalorder %s43, 1
      %p103 = por %p101, %p102
      %p104 = scmp.ne.s32.totalorder %s95, %s96
      %p105 = scmp.eq.s32.totalorder %s43, 0
      %p106 = por %p104, %p105
      %p107 = scmp.ne.s32.totalorder %s95, %s96
      %p108 = scmp.eq.s32.totalorder %s44, 1
      %p109 = por %p107, %p108
      %p111 = scmp.ne.s32.totalorder %s96, %s110
      %p112 = scmp.eq.s32.totalorder %s44, 0
      %p113 = por %p111, %p112
      %s115 = sadd.s32 %s114, 1
      %p118 = scmp.eq.s32.totalorder %s38, 1
      %p119 = scmp.ne.s32.totalorder %s114, %s116
      %p120 = scmp.eq.s32.totalorder %s38, 0
      %p121 = por %p119, %p120
      %p122 = scmp.ne.s32.totalorder %s114, %s116
      %p123 = scmp.eq.s32.totalorder %s43, 1
      %p124 = por %p122, %p123
      %p125 = scmp.ne.s32.totalorder %s116, %s117
      %p126 = scmp.eq.s32.totalorder %s43, 0
      %p127 = por %p125, %p126
      %p128 = scmp.ne.s32.totalorder %s116, %s117
      %p129 = scmp.eq.s32.totalorder %s44, 1
      %p130 = por %p128, %p129
      %p132 = scmp.ne.s32.totalorder %s117, %s131
      %p133 = scmp.eq.s32.totalorder %s44, 0
      %p134 = por %p132, %p133
      %s136 = sadd.s32 %s135, 1
      %p139 = scmp.eq.s32.totalorder %s38, 1
      %p140 = scmp.ne.s32.totalorder %s135, %s137
      %p141 = scmp.eq.s32.totalorder %s38, 0
      %p142 = por %p140, %p141
      %p143 = scmp.ne.s32.totalorder %s135, %s137
      %p144 = scmp.eq.s32.totalorder %s43, 1
      %p145 = por %p143, %p144
      %p146 = scmp.ne.s32.totalorder %s137, %s138
      %p147 = scmp.eq.s32.totalorder %s43, 0
      %p148 = por %p146, %p147
      %p149 = scmp.ne.s32.totalorder %s137, %s138
      %p150 = scmp.eq.s32.totalorder %s44, 1
      %p151 = por %p149, %p150
      %p153 = scmp.ne.s32.totalorder %s138, %s152
      %p154 = scmp.eq.s32.totalorder %s44, 0
      %p155 = por %p153, %p154
      %s157 = sadd.s32 %s156, 1
      %p160 = scmp.eq.s32.totalorder %s38, 1
      %p161 = scmp.ne.s32.totalorder %s156, %s158
      %p162 = scmp.eq.s32.totalorder %s38, 0
      %p163 = por %p161, %p162
      %p164 = scmp.ne.s32.totalorder %s156, %s158
      %p165 = scmp.eq.s32.totalorder %s43, 1
      %p166 = por %p164, %p165
      %p167 = scmp.ne.s32.totalorder %s158, %s159
      %p168 = scmp.eq.s32.totalorder %s43, 0
      %p169 = por %p167, %p168
      %p170 = scmp.ne.s32.totalorder %s158, %s159
      %p171 = scmp.eq.s32.totalorder %s44, 1
      %p172 = por %p170, %p171
      %p174 = scmp.ne.s32.totalorder %s159, %s173
      %p175 = scmp.eq.s32.totalorder %s44, 0
      %p176 = por %p174, %p175
      %s178 = sadd.s32 %s177, 1
      %p181 = scmp.eq.s32.totalorder %s38, 1
      %p182 = scmp.ne.s32.totalorder %s177, %s179
      %p183 = scmp.eq.s32.totalorder %s38, 0
      %p184 = por %p182, %p183
      %p185 = scmp.ne.s32.totalorder %s177, %s179
      %p186 = scmp.eq.s32.totalorder %s43, 1
      %p187 = por %p185, %p186
      %p188 = scmp.ne.s32.totalorder %s179, %s180
      %p189 = scmp.eq.s32.totalorder %s43, 0
      %p190 = por %p188, %p189
      %p191 = scmp.ne.s32.totalorder %s179, %s180
      %p192 = scmp.eq.s32.totalorder %s44, 1
      %p193 = por %p191, %p192
      %p195 = scmp.ne.s32.totalorder %s180, %s194
      %p196 = scmp.eq.s32.totalorder %s44, 0
      %p197 = por %p195, %p196
      %s199 = sadd.s32 %s198, 1
      %p202 = scmp.eq.s32.totalorder %s38, 1
      %p203 = scmp.ne.s32.totalorder %s198, %s200
      %p204 = scmp.eq.s32.totalorder %s38, 0
      %p205 = por %p203, %p204
      %p206 = scmp.ne.s32.totalorder %s198, %s200
      %p207 = scmp.eq.s32.totalorder %s43, 1
      %p208 = por %p206, %p207
      %p209 = scmp.ne.s32.totalorder %s200, %s201
      %p210 = scmp.eq.s32.totalorder %s43, 0
      %p211 = por %p209, %p210
      %p212 = scmp.ne.s32.totalorder %s200, %s201
      %p213 = scmp.eq.s32.totalorder %s44, 1
      %p214 = por %p212, %p213
      %p216 = scmp.ne.s32.totalorder %s201, %s215
      %p217 = scmp.eq.s32.totalorder %s44, 0
      %p218 = por %p216, %p217
      %s220 = sadd.s32 %s219, 1
      %p223 = scmp.eq.s32.totalorder %s38, 1
      %p224 = scmp.ne.s32.totalorder %s219, %s221
      %p225 = scmp.eq.s32.totalorder %s38, 0
      %p226 = por %p224, %p225
      %p227 = scmp.ne.s32.totalorder %s219, %s221
      %p228 = scmp.eq.s32.totalorder %s43, 1
      %p229 = por %p227, %p228
      %p230 = scmp.ne.s32.totalorder %s221, %s222
      %p231 = scmp.eq.s32.totalorder %s43, 0
      %p232 = por %p230, %p231
      %p233 = scmp.ne.s32.totalorder %s221, %s222
      %p234 = scmp.eq.s32.totalorder %s44, 1
      %p235 = por %p233, %p234
      %p237 = scmp.ne.s32.totalorder %s222, %s236
      %p238 = scmp.eq.s32.totalorder %s44, 0
      %p239 = por %p237, %p238
      %s241 = sadd.s32 %s240, 1
      %p244 = scmp.eq.s32.totalorder %s38, 1
      %p245 = scmp.ne.s32.totalorder %s240, %s242
      %p246 = scmp.eq.s32.totalorder %s38, 0
      %p247 = por %p245, %p246
      %p248 = scmp.ne.s32.totalorder %s240, %s242
      %p249 = scmp.eq.s32.totalorder %s43, 1
      %p250 = por %p248, %p249
      %p251 = scmp.ne.s32.totalorder %s242, %s243
      %p252 = scmp.eq.s32.totalorder %s43, 0
      %p253 = por %p251, %p252
      %p254 = scmp.ne.s32.totalorder %s242, %s243
      %p255 = scmp.eq.s32.totalorder %s44, 1
      %p256 = por %p254, %p255
      %p258 = scmp.ne.s32.totalorder %s243, %s257
      %p259 = scmp.eq.s32.totalorder %s44, 0
      %p260 = por %p258, %p259
      %s262 = sadd.s32 %s261, 1
      %p265 = scmp.eq.s32.totalorder %s38, 1
      %p266 = scmp.ne.s32.totalorder %s261, %s263
      %p267 = scmp.eq.s32.totalorder %s38, 0
      %p268 = por %p266, %p267
      %p269 = scmp.ne.s32.totalorder %s261, %s263
      %p270 = scmp.eq.s32.totalorder %s43, 1
      %p271 = por %p269, %p270
      %p272 = scmp.ne.s32.totalorder %s263, %s264
      %p273 = scmp.eq.s32.totalorder %s43, 0
      %p274 = por %p272, %p273
      %p275 = scmp.ne.s32.totalorder %s263, %s264
      %p276 = scmp.eq.s32.totalorder %s44, 1
      %p277 = por %p275, %p276
      %p279 = scmp.ne.s32.totalorder %s264, %s278
      %p280 = scmp.eq.s32.totalorder %s44, 0
      %p281 = por %p279, %p280
      %s283 = sadd.s32 %s282, 1
      %p286 = scmp.eq.s32.totalorder %s38, 1
      %p287 = scmp.ne.s32.totalorder %s282, %s284
      %p288 = scmp.eq.s32.totalorder %s38, 0
      %p289 = por %p287, %p288
      %p290 = scmp.ne.s32.totalorder %s282, %s284
      %p291 = scmp.eq.s32.totalorder %s43, 1
      %p292 = por %p290, %p291
      %p293 = scmp.ne.s32.totalorder %s284, %s285
      %p294 = scmp.eq.s32.totalorder %s43, 0
      %p295 = por %p293, %p294
      %p296 = scmp.ne.s32.totalorder %s284, %s285
      %p297 = scmp.eq.s32.totalorder %s44, 1
      %p298 = por %p296, %p297
      %p300 = scmp.ne.s32.totalorder %s285, %s299
      %p301 = scmp.eq.s32.totalorder %s44, 0
      %p302 = por %p300, %p301
      %s304 = sadd.s32 %s303, 1
      %p307 = scmp.eq.s32.totalorder %s38, 1
      %p308 = scmp.ne.s32.totalorder %s303, %s305
      %p309 = scmp.eq.s32.totalorder %s38, 0
      %p310 = por %p308, %p309
      %p311 = scmp.ne.s32.totalorder %s303, %s305
      %p312 = scmp.eq.s32.totalorder %s43, 1
      %p313 = por %p311, %p312
      %p314 = scmp.ne.s32.totalorder %s305, %s306
      %p315 = scmp.eq.s32.totalorder %s43, 0
      %p316 = por %p314, %p315
      %p317 = scmp.ne.s32.totalorder %s305, %s306
      %p318 = scmp.eq.s32.totalorder %s44, 1
      %p319 = por %p317, %p318
      %p321 = scmp.ne.s32.totalorder %s306, %s320
      %p322 = scmp.eq.s32.totalorder %s44, 0
      %p323 = por %p321, %p322
      %s325 = sadd.s32 %s324, 1
      %p328 = scmp.eq.s32.totalorder %s38, 1
      %p329 = scmp.ne.s32.totalorder %s324, %s326
      %p330 = scmp.eq.s32.totalorder %s38, 0
      %p331 = por %p329, %p330
      %p332 = scmp.ne.s32.totalorder %s324, %s326
      %p333 = scmp.eq.s32.totalorder %s43, 1
      %p334 = por %p332, %p333
      %p335 = scmp.ne.s32.totalorder %s326, %s327
      %p336 = scmp.eq.s32.totalorder %s43, 0
      %p337 = por %p335, %p336
      %p338 = scmp.ne.s32.totalorder %s326, %s327
      %p339 = scmp.eq.s32.totalorder %s44, 1
      %p340 = por %p338, %p339
      %p342 = scmp.ne.s32.totalorder %s327, %s341
      %p343 = scmp.eq.s32.totalorder %s44, 0
      %p344 = por %p342, %p343
      %s346 = sadd.s32 %s345, 1
      %p349 = scmp.eq.s32.totalorder %s38, 1
      %p350 = scmp.ne.s32.totalorder %s345, %s347
      %p351 = scmp.eq.s32.totalorder %s38, 0
      %p352 = por %p350, %p351
      %p353 = scmp.ne.s32.totalorder %s345, %s347
      %p354 = scmp.eq.s32.totalorder %s43, 1
      %p355 = por %p353, %p354
      %p356 = scmp.ne.s32.totalorder %s347, %s348
      %p357 = scmp.eq.s32.totalorder %s43, 0
      %p358 = por %p356, %p357
      %p359 = scmp.ne.s32.totalorder %s347, %s348
      %p360 = scmp.eq.s32.totalorder %s44, 1
      %p361 = por %p359, %p360
      %p363 = scmp.ne.s32.totalorder %s348, %s362
      %p364 = scmp.eq.s32.totalorder %s44, 0
      %p365 = por %p363, %p364
      %s367 = sadd.s32 %s366, 1
      %p370 = scmp.eq.s32.totalorder %s38, 1
      %p371 = scmp.ne.s32.totalorder %s366, %s368
      %p372 = scmp.eq.s32.totalorder %s38, 0
      %p373 = por %p371, %p372
      %p374 = scmp.ne.s32.totalorder %s366, %s368
      %p375 = scmp.eq.s32.totalorder %s43, 1
      %p376 = por %p374, %p375
      %p377 = scmp.ne.s32.totalorder %s368, %s369
      %p378 = scmp.eq.s32.totalorder %s43, 0
      %p379 = por %p377, %p378
      %p380 = scmp.ne.s32.totalorder %s368, %s369
      %p381 = scmp.eq.s32.totalorder %s44, 1
      %p382 = por %p380, %p381
      %p384 = scmp.ne.s32.totalorder %s369, %s383
      %p385 = scmp.eq.s32.totalorder %s44, 0
      %p386 = por %p384, %p385
      %s388 = sadd.s32 %s387, 1
      %p391 = scmp.eq.s32.totalorder %s38, 1
      %p392 = scmp.ne.s32.totalorder %s387, %s389
      %p393 = scmp.eq.s32.totalorder %s38, 0
      %p394 = por %p392, %p393
      %p395 = scmp.ne.s32.totalorder %s387, %s389
      %p396 = scmp.eq.s32.totalorder %s43, 1
      %p397 = por %p395, %p396
      %p398 = scmp.ne.s32.totalorder %s389, %s390
      %p399 = scmp.eq.s32.totalorder %s43, 0
      %p400 = por %p398, %p399
      %p401 = scmp.ne.s32.totalorder %s389, %s390
      %p402 = scmp.eq.s32.totalorder %s44, 1
      %p403 = por %p401, %p402
      %p405 = scmp.ne.s32.totalorder %s390, %s404
      %p406 = scmp.eq.s32.totalorder %s44, 0
      %p407 = por %p405, %p406
      %s409 = sadd.s32 %s408, 1
      %p412 = scmp.eq.s32.totalorder %s38, 1
      %p413 = scmp.ne.s32.totalorder %s408, %s410
      %p414 = scmp.eq.s32.totalorder %s38, 0
      %p415 = por %p413, %p414
      %p416 = scmp.ne.s32.totalorder %s408, %s410
      %p417 = scmp.eq.s32.totalorder %s43, 1
      %p418 = por %p416, %p417
      %p419 = scmp.ne.s32.totalorder %s410, %s411
      %p420 = scmp.eq.s32.totalorder %s43, 0
      %p421 = por %p419, %p420
      %p422 = scmp.ne.s32.totalorder %s410, %s411
      %p423 = scmp.eq.s32.totalorder %s44, 1
      %p424 = por %p422, %p423
      %p426 = scmp.ne.s32.totalorder %s411, %s425
      %p427 = scmp.eq.s32.totalorder %s44, 0
      %p428 = por %p426, %p427
      %s430 = sadd.s32 %s429, 1
      %p433 = scmp.eq.s32.totalorder %s38, 1
      %p434 = scmp.ne.s32.totalorder %s429, %s431
      %p435 = scmp.eq.s32.totalorder %s38, 0
      %p436 = por %p434, %p435
      %p437 = scmp.ne.s32.totalorder %s429, %s431
      %p438 = scmp.eq.s32.totalorder %s43, 1
      %p439 = por %p437, %p438
      %p440 = scmp.ne.s32.totalorder %s431, %s432
      %p441 = scmp.eq.s32.totalorder %s43, 0
      %p442 = por %p440, %p441
      %p443 = scmp.ne.s32.totalorder %s431, %s432
      %p444 = scmp.eq.s32.totalorder %s44, 1
      %p445 = por %p443, %p444
      %p447 = scmp.ne.s32.totalorder %s432, %s446
      %p448 = scmp.eq.s32.totalorder %s44, 0
      %p449 = por %p447, %p448
      %s450 = ssub.s32 %s38, %s45
      %p451 = scmp.eq.s32.totalorder %s450, 0
      %s453 = sadd.s32 %s452, 1
      %s454 = scalar_select %p451, %s452, %s453
      %p457 = pneg %p451
      %p458 = scmp.eq.s32.totalorder %s38, 1
      %p459 = por %p457, %p458
      %p460 = scmp.ne.s32.totalorder %s452, %s455
      %p461 = scmp.eq.s32.totalorder %s38, 0
      %p462 = por %p460, %p461
      %p463 = scmp.ne.s32.totalorder %s452, %s455
      %p464 = scmp.eq.s32.totalorder %s43, 1
      %p465 = por %p463, %p464
      %p466 = scmp.ne.s32.totalorder %s455, %s456
      %p467 = scmp.eq.s32.totalorder %s43, 0
      %p468 = por %p466, %p467
      %p469 = scmp.ne.s32.totalorder %s455, %s456
      %p470 = scmp.eq.s32.totalorder %s44, 1
      %p471 = por %p469, %p470
      %p473 = scmp.ne.s32.totalorder %s456, %s472
      %p474 = scmp.eq.s32.totalorder %s44, 0
      %p475 = por %p473, %p474
      %s476 = ssub.s32 %s38, %s45
      %p477 = scmp.eq.s32.totalorder %s476, 0
      %s479 = sadd.s32 %s478, 1
      %s480 = scalar_select %p477, %s478, %s479
      %p483 = pneg %p477
      %p484 = scmp.eq.s32.totalorder %s38, 1
      %p485 = por %p483, %p484
      %p486 = scmp.ne.s32.totalorder %s478, %s481
      %p487 = scmp.eq.s32.totalorder %s38, 0
      %p488 = por %p486, %p487
      %p489 = scmp.ne.s32.totalorder %s478, %s481
      %p490 = scmp.eq.s32.totalorder %s43, 1
      %p491 = por %p489, %p490
      %p492 = scmp.ne.s32.totalorder %s481, %s482
      %p493 = scmp.eq.s32.totalorder %s43, 0
      %p494 = por %p492, %p493
      %p495 = scmp.ne.s32.totalorder %s481, %s482
      %p496 = scmp.eq.s32.totalorder %s44, 1
      %p497 = por %p495, %p496
      %p499 = scmp.ne.s32.totalorder %s482, %s498
      %p500 = scmp.eq.s32.totalorder %s44, 0
      %p501 = por %p499, %p500
      %s502 = ssub.s32 %s38, %s45
      %p503 = scmp.eq.s32.totalorder %s502, 0
      %s505 = sadd.s32 %s504, 1
      %s506 = scalar_select %p503, %s504, %s505
      %p509 = pneg %p503
      %p510 = scmp.eq.s32.totalorder %s38, 1
      %p511 = por %p509, %p510
      %p512 = scmp.ne.s32.totalorder %s504, %s507
      %p513 = scmp.eq.s32.totalorder %s38, 0
      %p514 = por %p512, %p513
      %p515 = scmp.ne.s32.totalorder %s504, %s507
      %p516 = scmp.eq.s32.totalorder %s43, 1
      %p517 = por %p515, %p516
      %p518 = scmp.ne.s32.totalorder %s507, %s508
      %p519 = scmp.eq.s32.totalorder %s43, 0
      %p520 = por %p518, %p519
      %p521 = scmp.ne.s32.totalorder %s507, %s508
      %p522 = scmp.eq.s32.totalorder %s44, 1
      %p523 = por %p521, %p522
      %p525 = scmp.ne.s32.totalorder %s508, %s524
      %p526 = scmp.eq.s32.totalorder %s44, 0
      %p527 = por %p525, %p526
      %p528 = scmp.le.s32.totalorder 1, %s38
      %p529 = scmp.lt.s32.totalorder %s38, 3
      %p530 = pnand %p528, %p529
      %p531 = pneg %p530
      // Predicated region
      $region9: #{tpu_custom_call.1} parent=5 // pred_check
        _
      $region10: #{tpu_custom_call.1} parent=5 // pred_check_branch
        %533 = sbr.rel (%p530) target = $region12
      $region11: #{tpu_custom_call.1} parent=5 // pred_region
        %s534 = ssub.s32 %s38, 1
        // Predicated region
        $region13: #{tpu_custom_call.1} parent=11 // pred_check
          %p535 = pneg %p85
        $region14: #{tpu_custom_call.1} parent=11 // pred_check_branch
          %537 = sbr.rel (%p535) target = $region16
        $region15: #{tpu_custom_call.1} parent=11 // pred_region
          _
        $region16: #{tpu_custom_call.1} parent=11 // pred_fallthru
          _
        // Predicated region
        $region17: #{tpu_custom_call.1} parent=11 // pred_check
          %p538 = pneg %p106
        $region18: #{tpu_custom_call.1} parent=11 // pred_check_branch
          %540 = sbr.rel (%p538) target = $region20
        $region19: #{tpu_custom_call.1} parent=11 // pred_region
          _
        $region20: #{tpu_custom_call.1} parent=11 // pred_fallthru
          _
        // Predicated region
        $region21: #{tpu_custom_call.1} parent=11 // pred_check
          %p541 = pneg %p127
        $region22: #{tpu_custom_call.1} parent=11 // pred_check_branch
          %543 = sbr.rel (%p541) target = $region24
        $region23: #{tpu_custom_call.1} parent=11 // pred_region
          _
        $region24: #{tpu_custom_call.1} parent=11 // pred_fallthru
          _
        // Predicated region
        $region25: #{tpu_custom_call.1} parent=11 // pred_check
          %p544 = pneg %p148
        $region26: #{tpu_custom_call.1} parent=11 // pred_check_branch
          %546 = sbr.rel (%p544) target = $region28
        $region27: #{tpu_custom_call.1} parent=11 // pred_region
          _
        $region28: #{tpu_custom_call.1} parent=11 // pred_fallthru
          _
        // Predicated region
        $region29: #{tpu_custom_call.1} parent=11 // pred_check
          %p547 = pneg %p169
        $region30: #{tpu_custom_call.1} parent=11 // pred_check_branch
          %549 = sbr.rel (%p547) target = $region32
        $region31: #{tpu_custom_call.1} parent=11 // pred_region
          _
        $region32: #{tpu_custom_call.1} parent=11 // pred_fallthru
          _
        // Predicated region
        $region33: #{tpu_custom_call.1} parent=11 // pred_check
          %p550 = pneg %p190
        $region34: #{tpu_custom_call.1} parent=11 // pred_check_branch
          %552 = sbr.rel (%p550) target = $region36
        $region35: #{tpu_custom_call.1} parent=11 // pred_region
          _
        $region36: #{tpu_custom_call.1} parent=11 // pred_fallthru
          _
        // Predicated region
        $region37: #{tpu_custom_call.1} parent=11 // pred_check
          %p553 = pneg %p211
        $region38: #{tpu_custom_call.1} parent=11 // pred_check_branch
          %555 = sbr.rel (%p553) target = $region40
        $region39: #{tpu_custom_call.1} parent=11 // pred_region
          _
        $region40: #{tpu_custom_call.1} parent=11 // pred_fallthru
          _
        // Predicated region
        $region41: #{tpu_custom_call.1} parent=11 // pred_check
          %p556 = pneg %p232
        $region42: #{tpu_custom_call.1} parent=11 // pred_check_branch
          %558 = sbr.rel (%p556) target = $region44
        $region43: #{tpu_custom_call.1} parent=11 // pred_region
          _
        $region44: #{tpu_custom_call.1} parent=11 // pred_fallthru
          _
        // Predicated region
        $region45: #{tpu_custom_call.1} parent=11 // pred_check
          %p559 = pneg %p253
        $region46: #{tpu_custom_call.1} parent=11 // pred_check_branch
          %561 = sbr.rel (%p559) target = $region48
        $region47: #{tpu_custom_call.1} parent=11 // pred_region
          _
        $region48: #{tpu_custom_call.1} parent=11 // pred_fallthru
          _
        // Predicated region
        $region49: #{tpu_custom_call.1} parent=11 // pred_check
          %p562 = pneg %p274
        $region50: #{tpu_custom_call.1} parent=11 // pred_check_branch
          %564 = sbr.rel (%p562) target = $region52
        $region51: #{tpu_custom_call.1} parent=11 // pred_region
          _
        $region52: #{tpu_custom_call.1} parent=11 // pred_fallthru
          _
        // Predicated region
        $region53: #{tpu_custom_call.1} parent=11 // pred_check
          %p565 = pneg %p295
        $region54: #{tpu_custom_call.1} parent=11 // pred_check_branch
          %567 = sbr.rel (%p565) target = $region56
        $region55: #{tpu_custom_call.1} parent=11 // pred_region
          _
        $region56: #{tpu_custom_call.1} parent=11 // pred_fallthru
          _
        // Predicated region
        $region57: #{tpu_custom_call.1} parent=11 // pred_check
          %p568 = pneg %p316
        $region58: #{tpu_custom_call.1} parent=11 // pred_check_branch
          %570 = sbr.rel (%p568) target = $region60
        $region59: #{tpu_custom_call.1} parent=11 // pred_region
          _
        $region60: #{tpu_custom_call.1} parent=11 // pred_fallthru
          _
        // Predicated region
        $region61: #{tpu_custom_call.1} parent=11 // pred_check
          %p571 = pneg %p337
        $region62: #{tpu_custom_call.1} parent=11 // pred_check_branch
          %573 = sbr.rel (%p571) target = $region64
        $region63: #{tpu_custom_call.1} parent=11 // pred_region
          _
        $region64: #{tpu_custom_call.1} parent=11 // pred_fallthru
          _
        // Predicated region
        $region65: #{tpu_custom_call.1} parent=11 // pred_check
          %p574 = pneg %p358
        $region66: #{tpu_custom_call.1} parent=11 // pred_check_branch
          %576 = sbr.rel (%p574) target = $region68
        $region67: #{tpu_custom_call.1} parent=11 // pred_region
          _
        $region68: #{tpu_custom_call.1} parent=11 // pred_fallthru
          _
        // Predicated region
        $region69: #{tpu_custom_call.1} parent=11 // pred_check
          %p577 = pneg %p379
        $region70: #{tpu_custom_call.1} parent=11 // pred_check_branch
          %579 = sbr.rel (%p577) target = $region72
        $region71: #{tpu_custom_call.1} parent=11 // pred_region
          _
        $region72: #{tpu_custom_call.1} parent=11 // pred_fallthru
          _
        // Predicated region
        $region73: #{tpu_custom_call.1} parent=11 // pred_check
          %p580 = pneg %p400
        $region74: #{tpu_custom_call.1} parent=11 // pred_check_branch
          %582 = sbr.rel (%p580) target = $region76
        $region75: #{tpu_custom_call.1} parent=11 // pred_region
          _
        $region76: #{tpu_custom_call.1} parent=11 // pred_fallthru
          _
        // Predicated region
        $region77: #{tpu_custom_call.1} parent=11 // pred_check
          %p583 = pneg %p421
        $region78: #{tpu_custom_call.1} parent=11 // pred_check_branch
          %585 = sbr.rel (%p583) target = $region80
        $region79: #{tpu_custom_call.1} parent=11 // pred_region
          _
        $region80: #{tpu_custom_call.1} parent=11 // pred_fallthru
          _
        // Predicated region
        $region81: #{tpu_custom_call.1} parent=11 // pred_check
          %p586 = pneg %p442
        $region82: #{tpu_custom_call.1} parent=11 // pred_check_branch
          %588 = sbr.rel (%p586) target = $region84
        $region83: #{tpu_custom_call.1} parent=11 // pred_region
          _
        $region84: #{tpu_custom_call.1} parent=11 // pred_fallthru
          _
      $region12: #{tpu_custom_call.1} parent=5 // pred_fallthru
        _
      %p589 = scmp.lt.s32.totalorder %s38, 2
      // Predicated region
      $region85: #{tpu_custom_call.1} parent=5 // pred_check
        %p590 = pneg %p589
      $region86: #{tpu_custom_call.1} parent=5 // pred_check_branch
        %592 = sbr.rel (%p590) target = $region88
      $region87: #{tpu_custom_call.1} parent=5 // pred_region
        // Predicated region
        $region89: #{tpu_custom_call.1} parent=87 // pred_check
          %p593 = pneg %p58
        $region90: #{tpu_custom_call.1} parent=87 // pred_check_branch
          %595 = sbr.rel (%p593) target = $region92
        $region91: #{tpu_custom_call.1} parent=87 // pred_region
          %p596 = scmp.lt.s32.totalorder %s38, 1
          %s597 = scalar_select %p596, %s38, 1
          %s598 = smul.addr %s597, 8
          %s599 = scalar_lea.vmem %s0, %s598
        $region92: #{tpu_custom_call.1} parent=87 // pred_fallthru
          _
      $region88: #{tpu_custom_call.1} parent=5 // pred_fallthru
        _
      %p600 = scmp.le.s32.totalorder 1, %s38
      %p601 = scmp.lt.s32.totalorder %s38, 3
      %p602 = pnand %p600, %p601
      %p603 = pneg %p602
      // Predicated region
      $region93: #{tpu_custom_call.1} parent=5 // pred_check
        _
      $region94: #{tpu_custom_call.1} parent=5 // pred_check_branch
        %605 = sbr.rel (%p602) target = $region96
      $region95: #{tpu_custom_call.1} parent=5 // pred_region
        %s606 = ssub.s32 %s38, 1
        %p607 = scmp.lt.s32.totalorder %s43, 1
        %s608 = scalar_select %p607, %s43, 1
        %s609 = smul.addr %s608, 8
        %s610 = scalar_lea.vmem %s0, %s609
        %p611 = pneg %p64
        %p612 = pneg %p61
        %p613 = pneg %p85
        %p614 = pneg %p82
        %p615 = pneg %p106
        %p616 = pneg %p103
        %p617 = pneg %p127
        %p618 = pneg %p124
        %p619 = pneg %p148
        %p620 = pneg %p145
        %p621 = pneg %p169
        %p622 = pneg %p166
        %p623 = pneg %p190
        %p624 = pneg %p187
        %p625 = pneg %p211
        %p626 = pneg %p208
        %p627 = pneg %p232
        %p628 = pneg %p229
        %p629 = pneg %p253
        %p630 = pneg %p250
        %p631 = pneg %p274
        %p632 = pneg %p271
        %p633 = pneg %p295
        %p634 = pneg %p292
        %p635 = pneg %p316
        %p636 = pneg %p313
        %p637 = pneg %p337
        %p638 = pneg %p334
        %p639 = pneg %p358
        %p640 = pneg %p355
        %p641 = pneg %p379
        %p642 = pneg %p376
        %p643 = pneg %p400
        %p644 = pneg %p397
        %p645 = pneg %p421
        %p646 = pneg %p418
        %p647 = pneg %p442
        %p648 = pneg %p439
        %p649 = pneg %p468
        %p650 = pneg %p465
        %s651 = sand.u32 %s455, 1
        %s652 = scalar_lea.sflag [#allocation5], %s651
        %s653 = sand.u32 %s455, 1
        %s654 = smul.addr %s653, 16
        %s655 = scalar_lea.vmem [#allocation4], %s654
        %p656 = pneg %p494
        %p657 = pneg %p491
        %s658 = sand.u32 %s481, 1
        %s659 = scalar_lea.sflag [#allocation7], %s658
        %s660 = sand.u32 %s481, 1
        %s661 = smul.addr %s660, 8
        %s662 = scalar_lea.vmem [#allocation6], %s661
        %p663 = pneg %p520
        %p664 = pneg %p517
        %p665 = scmp.lt.s32.totalorder %s43, 1
        %s666 = scalar_select %p665, %s43, 1
        %s667 = smul.addr %s666, 8
        %s668 = scalar_lea.vmem %s21, %s667
        %p669 = scmp.lt.s32.totalorder %s43, 1
        %s670 = scalar_select %p669, %s43, 1
        %s671 = smul.addr %s670, 8
        %s672 = scalar_lea.vmem %s0, %s671
        %p673 = scmp.lt.s32.totalorder %s43, 1
        %s674 = scalar_select %p673, %s43, 1
        %s675 = smul.addr %s674, 8
        %s676 = scalar_lea.vmem %s21, %s675
        %v678 = vld [vmem:[%s672] sm:$0xff]
        %v679 = vlaneseq
        %v680 = vshrl.u32 %v679, 7
        %v681 = vlaneseq
        %v682 = vand.u32 %v681, 127
        %vm683 = vcmp.eq.s32.totalorder %v680, %v682
        %v684 = vsel %vm683, 1e+08, 0.0
        %v685 = vpack.c.bf16 %v678, %v678
        %v687 = vcombine.high %v678, %v678
        %v689 = vunpack.c.l.s4 1966171168
        %v690 = vunpack.c.0.s8 %v689
        %v691 = vlaneseq
        %v692 = vshrl.u32 %v691, 7
        %v693 = vsub.s32 %v690, %v692
        %v694 = vrot.slane %v678, %v693
        %v696 = vunpack.c.l.s4 1966171168
        %v697 = vunpack.c.0.s8 %v696
        %v698 = vlaneseq
        %v699 = vshrl.u32 %v698, 7
        %v700 = vsub.s32 %v697, %v699
        %v701 = vrot.slane %v687, %v700
        %v702 = vcombine.high %v694, %v694
        %v703 = vcombine.high %v701, %v701
        %v705 = vunpack.c.l.s4 1966171168
        %v706 = vunpack.c.0.s8 %v705
        %v707 = vlaneseq
        %v708 = vshrl.u32 %v707, 7
        %v709 = vsub.s32 %v706, %v708
        %v710 = vrot.slane %v694, %v709
        %v712 = vunpack.c.l.s4 1966171168
        %v713 = vunpack.c.0.s8 %v712
        %v714 = vlaneseq
        %v715 = vshrl.u32 %v714, 7
        %v716 = vsub.s32 %v713, %v715
        %v717 = vrot.slane %v701, %v716
        %v719 = vunpack.c.l.s4 1966171168
        %v720 = vunpack.c.0.s8 %v719
        %v721 = vlaneseq
        %v722 = vshrl.u32 %v721, 7
        %v723 = vsub.s32 %v720, %v722
        %v724 = vrot.slane %v702, %v723
        %v726 = vunpack.c.l.s4 1966171168
        %v727 = vunpack.c.0.s8 %v726
        %v728 = vlaneseq
        %v729 = vshrl.u32 %v728, 7
        %v730 = vsub.s32 %v727, %v729
        %v731 = vrot.slane %v703, %v730
        %v732 = vcombine.high %v710, %v710
        %v733 = vcombine.high %v717, %v717
        %v734 = vcombine.high %v724, %v724
        %v735 = vcombine.high %v731, %v731
        %v736 = vlaneseq
        %v737 = vshrl.u32 %v736, 7
        %v738 = vsub.s32 0, %v737
        %v739 = vrot.slane %v710, %v738
        %v740 = vlaneseq
        %v741 = vshrl.u32 %v740, 7
        %v742 = vsub.s32 0, %v741
        %v743 = vrot.slane %v724, %v742
        %v744 = vlaneseq
        %v745 = vshrl.u32 %v744, 7
        %v746 = vsub.s32 0, %v745
        %v747 = vrot.slane %v732, %v746
        %v748 = vlaneseq
        %v749 = vshrl.u32 %v748, 7
        %v750 = vsub.s32 0, %v749
        %v751 = vrot.slane %v734, %v750
        %v752 = vlaneseq
        %v753 = vshrl.u32 %v752, 7
        %v754 = vsub.s32 0, %v753
        %v755 = vrot.slane %v717, %v754
        %v756 = vlaneseq
        %v757 = vshrl.u32 %v756, 7
        %v758 = vsub.s32 0, %v757
        %v759 = vrot.slane %v731, %v758
        %v760 = vlaneseq
        %v761 = vshrl.u32 %v760, 7
        %v762 = vsub.s32 0, %v761
        %v763 = vrot.slane %v733, %v762
        %v764 = vlaneseq
        %v765 = vshrl.u32 %v764, 7
        %v766 = vsub.s32 0, %v765
        %v767 = vrot.slane %v735, %v766
        %v776 = vsub.f32 %v739, %v678
        %v777 = vsub.f32 %v743, %v678
        %v778 = vsub.f32 %v747, %v678
        %v779 = vsub.f32 %v751, %v678
        %v780 = vsub.f32 %v755, %v678
        %v781 = vsub.f32 %v759, %v678
        %v782 = vsub.f32 %v763, %v678
        %v783 = vsub.f32 %v767, %v678
        %v784 = vand.u32 2147483647, %v776
        %v785 = vand.u32 2147483647, %v777
        %v786 = vand.u32 2147483647, %v778
        %v787 = vand.u32 2147483647, %v779
        %v788 = vand.u32 2147483647, %v780
        %v789 = vand.u32 2147483647, %v781
        %v790 = vand.u32 2147483647, %v782
        %v791 = vand.u32 2147483647, %v783
        %v792 = vsub.f32 0.0, %v784
        %v793 = vsub.f32 0.0, %v785
        %v794 = vsub.f32 0.0, %v786
        %v795 = vsub.f32 0.0, %v787
        %v796 = vsub.f32 0.0, %v788
        %v797 = vsub.f32 0.0, %v789
        %v798 = vsub.f32 0.0, %v790
        %v799 = vsub.f32 0.0, %v791
        %v800 = vmul.f32 %v792, 1.442695
        %v801 = vpow.pop %v800
        %v802 = vmul.f32 %v793, 1.442695
        %v803 = vpow.pop %v802
        %v804 = vmul.f32 %v794, 1.442695
        %v805 = vpow.pop %v804
        %v806 = vmul.f32 %v795, 1.442695
        %v807 = vpow.pop %v806
        %v808 = vmul.f32 %v796, 1.442695
        %v809 = vpow.pop %v808
        %v810 = vmul.f32 %v797, 1.442695
        %v811 = vpow.pop %v810
        %v812 = vmul.f32 %v798, 1.442695
        %v813 = vpow.pop %v812
        %v814 = vmul.f32 %v799, 1.442695
        %v815 = vpow.pop %v814
        %v816 = vpack.c.bf16 %v803, %v801
        %v817 = vpack.c.bf16 %v807, %v805
        %v818 = vpack.c.bf16 %v811, %v809
        %v819 = vpack.c.bf16 %v815, %v813
        %v820 = vld [vmem:[%s1] sm:$0xf]
        %v821 = vld [vmem:[%s1 + $0x4] sm:$0xf]
        %v822 = vld [vmem:[%s1 + $0x8] sm:$0xf]
        %v823 = vld [vmem:[%s1 + $0xc] sm:$0xf]
        %v828 = vunpack.c.l.b16 %v820
        %v829 = vunpack.c.l.b16 %v821
        %v830 = vunpack.c.l.b16 %v822
        %v831 = vunpack.c.l.b16 %v823
        %v832 = vpack.c.b16 %v829, %v828
        %v833 = vpack.c.b16 %v831, %v830
        %vm836 = vcmask 261120
        %v838 = vsel %vm836, %v816, 0
        %v841 = vsel %vm836, %v817, 0
        %v844 = vsel %vm836, %v818, 0
        %v847 = vsel %vm836, %v819, 0
        %849 = vmatprep.subr.bf16.mxu0 0
        %850 = vmatpush1.bf16.msra.mxu0 %v832
        %851 = vmatprep.subr.bf16.mxu0 0
        %852 = vmatpush1.bf16.msra.mxu0 %v833
        %853 = vmatprep.subr.bf16.mxu0 0
        %854 = vmatpush1.bf16.msra.mxu0 0
        %855 = vmatprep.subr.bf16.mxu0 0
        %856 = vmatpush1.bf16.msra.mxu0 0
        %857 = vmatprep.subr.bf16.mxu0 0
        %858 = vmatpush1.bf16.msra.mxu0 0
        %859 = vmatprep.subr.bf16.mxu0 0
        %860 = vmatpush1.bf16.msra.mxu0 0
        %861 = vmatprep.subr.bf16.mxu0 0
        %862 = vmatpush1.bf16.msra.mxu0 0
        %863 = vmatprep.subr.bf16.mxu0 0
        %864 = vmatpush1.bf16.msra.mxu0 0
        %865 = vmatprep.subr.bf16.mxu0 0
        %866 = vmatpush1.bf16.msra.mxu0 0
        %867 = vmatprep.subr.bf16.mxu0 0
        %868 = vmatpush1.bf16.msra.mxu0 0
        %869 = vmatprep.subr.bf16.mxu0 0
        %870 = vmatpush1.bf16.msra.mxu0 0
        %871 = vmatprep.subr.bf16.mxu0 0
        %872 = vmatpush1.bf16.msra.mxu0 0
        %873 = vmatprep.subr.bf16.mxu0 0
        %874 = vmatpush1.bf16.msra.mxu0 0
        %875 = vmatprep.subr.bf16.mxu0 0
        %876 = vmatpush1.bf16.msra.mxu0 0
        %877 = vmatprep.subr.bf16.mxu0 0
        %878 = vmatpush1.bf16.msra.mxu0 0
        %879 = vmatprep.subr.bf16.mxu0 0
        %880 = vmatpush1.bf16.msra.mxu0 0
        %881 = vmatprep.mubr.bf16.mxu0 0
        %882 = vmatmul.mubr.bf16.gmra.mrb[0].mxu0 %v838
        %v883 = vpop.f32.mrb[0].mxu0
        %v884 = vadd.f32 0.0, %v883
        %v885 = vpop.f32.mrb[0].mxu0
        %v886 = vpop.f32.mrb[0].mxu0
        %v887 = vadd.f32 0.0, %v886
        %v888 = vpop.f32.mrb[0].mxu0
        %889 = vmatprep.mubr.bf16.mxu0 0
        %890 = vmatmul.mubr.bf16.gmra.mrb[0].mxu0 %v841
        %v891 = vpop.f32.mrb[0].mxu0
        %v892 = vadd.f32 0.0, %v891
        %v893 = vpop.f32.mrb[0].mxu0
        %v894 = vpop.f32.mrb[0].mxu0
        %v895 = vadd.f32 0.0, %v894
        %v896 = vpop.f32.mrb[0].mxu0
        %897 = vmatprep.mubr.bf16.mxu0 0
        %898 = vmatmul.mubr.bf16.gmra.mrb[0].mxu0 %v844
        %v899 = vpop.f32.mrb[0].mxu0
        %v900 = vadd.f32 0.0, %v899
        %v901 = vpop.f32.mrb[0].mxu0
        %v902 = vpop.f32.mrb[0].mxu0
        %v903 = vadd.f32 0.0, %v902
        %v904 = vpop.f32.mrb[0].mxu0
        %905 = vmatprep.mubr.bf16.mxu0 0
        %906 = vmatmul.mubr.bf16.gmra.mrb[0].mxu0 %v847
        %v907 = vpop.f32.mrb[0].mxu0
        %v908 = vadd.f32 0.0, %v907
        %v909 = vpop.f32.mrb[0].mxu0
        %v910 = vpop.f32.mrb[0].mxu0
        %v911 = vadd.f32 0.0, %v910
        %v912 = vpop.f32.mrb[0].mxu0
        %913 = vdwg.mxu0
        %vm914 = vcmp.ge.f32.partialorder %v884, 0.0
        %vm915 = vcmp.ge.f32.partialorder %v887, 0.0
        %vm916 = vcmp.ge.f32.partialorder %v892, 0.0
        %vm917 = vcmp.ge.f32.partialorder %v895, 0.0
        %vm918 = vcmp.ge.f32.partialorder %v900, 0.0
        %vm919 = vcmp.ge.f32.partialorder %v903, 0.0
        %vm920 = vcmp.ge.f32.partialorder %v908, 0.0
        %vm921 = vcmp.ge.f32.partialorder %v911, 0.0
        %v922 = vmul.f32 %v884, 0.01
        %v923 = vmul.f32 %v887, 0.01
        %v924 = vmul.f32 %v892, 0.01
        %v925 = vmul.f32 %v895, 0.01
        %v926 = vmul.f32 %v900, 0.01
        %v927 = vmul.f32 %v903, 0.01
        %v928 = vmul.f32 %v908, 0.01
        %v929 = vmul.f32 %v911, 0.01
        %v930 = vsel %vm914, %v884, %v922
        %v931 = vsel %vm915, %v887, %v923
        %v932 = vsel %vm916, %v892, %v924
        %v933 = vsel %vm917, %v895, %v925
        %v934 = vsel %vm918, %v900, %v926
        %v935 = vsel %vm919, %v903, %v927
        %v936 = vsel %vm920, %v908, %v928
        %v937 = vsel %vm921, %v911, %v929
        %v938 = vpack.c.bf16 %v931, %v930
        %v939 = vpack.c.bf16 %v933, %v932
        %v940 = vpack.c.bf16 %v935, %v934
        %v941 = vpack.c.bf16 %v937, %v936
        %v942 = vld [vmem:[%s2] sm:$0xf]
        %v943 = vld [vmem:[%s2 + $0x4] sm:$0xf]
        %v944 = vld [vmem:[%s2 + $0x8] sm:$0xf]
        %v945 = vld [vmem:[%s2 + $0xc] sm:$0xf]
        %v946 = vld [vmem:[%s2 + $0x10] sm:$0xf]
        %v947 = vld [vmem:[%s2 + $0x14] sm:$0xf]
        %v948 = vld [vmem:[%s2 + $0x18] sm:$0xf]
        %v949 = vld [vmem:[%s2 + $0x1c] sm:$0xf]
        %v958 = vunpack.c.l.b16 %v942
        %v959 = vunpack.c.l.b16 %v943
        %v960 = vunpack.c.l.b16 %v944
        %v961 = vunpack.c.l.b16 %v945
        %v962 = vunpack.c.l.b16 %v946
        %v963 = vunpack.c.l.b16 %v947
        %v964 = vunpack.c.l.b16 %v948
        %v965 = vunpack.c.l.b16 %v949
        %v966 = vpack.c.b16 %v959, %v958
        %v967 = vpack.c.b16 %v961, %v960
        %v968 = vpack.c.b16 %v963, %v962
        %v969 = vpack.c.b16 %v965, %v964
        %vm974 = vcmask 523264
        %v976 = vsel %vm974, %v938, 0
        %v979 = vsel %vm974, %v939, 0
        %v982 = vsel %vm974, %v940, 0
        %v985 = vsel %vm974, %v941, 0
        %987 = vmatprep.subr.bf16.mxu0 0
        %988 = vmatpush1.bf16.msra.mxu0 %v966
        %989 = vmatprep.subr.bf16.mxu0 0
        %990 = vmatpush1.bf16.msra.mxu0 %v967
        %991 = vmatprep.subr.bf16.mxu0 0
        %992 = vmatpush1.bf16.msra.mxu0 %v968
        %993 = vmatprep.subr.bf16.mxu0 0
        %994 = vmatpush1.bf16.msra.mxu0 %v969
        %995 = vmatprep.subr.bf16.mxu0 0
        %996 = vmatpush1.bf16.msra.mxu0 0
        %997 = vmatprep.subr.bf16.mxu0 0
        %998 = vmatpush1.bf16.msra.mxu0 0
        %999 = vmatprep.subr.bf16.mxu0 0
        %1000 = vmatpush1.bf16.msra.mxu0 0
        %1001 = vmatprep.subr.bf16.mxu0 0
        %1002 = vmatpush1.bf16.msra.mxu0 0
        %1003 = vmatprep.subr.bf16.mxu0 0
        %1004 = vmatpush1.bf16.msra.mxu0 0
        %1005 = vmatprep.subr.bf16.mxu0 0
        %1006 = vmatpush1.bf16.msra.mxu0 0
        %1007 = vmatprep.subr.bf16.mxu0 0
        %1008 = vmatpush1.bf16.msra.mxu0 0
        %1009 = vmatprep.subr.bf16.mxu0 0
        %1010 = vmatpush1.bf16.msra.mxu0 0
        %1011 = vmatprep.subr.bf16.mxu0 0
        %1012 = vmatpush1.bf16.msra.mxu0 0
        %1013 = vmatprep.subr.bf16.mxu0 0
        %1014 = vmatpush1.bf16.msra.mxu0 0
        %1015 = vmatprep.subr.bf16.mxu0 0
        %1016 = vmatpush1.bf16.msra.mxu0 0
        %1017 = vmatprep.subr.bf16.mxu0 0
        %1018 = vmatpush1.bf16.msra.mxu0 0
        %1019 = vmatprep.mubr.bf16.mxu0 0
        %1020 = vmatmul.mubr.bf16.gmra.mrb[0].mxu0 %v976
        %v1021 = vpop.f32.mrb[0].mxu0
        %v1022 = vadd.f32 0.0, %v1021
        %v1023 = vpop.f32.mrb[0].mxu0
        %v1024 = vpop.f32.mrb[0].mxu0
        %v1025 = vadd.f32 0.0, %v1024
        %v1026 = vpop.f32.mrb[0].mxu0
        %1027 = vmatprep.mubr.bf16.mxu0 0
        %1028 = vmatmul.mubr.bf16.gmra.mrb[0].mxu0 %v979
        %v1029 = vpop.f32.mrb[0].mxu0
        %v1030 = vadd.f32 0.0, %v1029
        %v1031 = vpop.f32.mrb[0].mxu0
        %v1032 = vpop.f32.mrb[0].mxu0
        %v1033 = vadd.f32 0.0, %v1032
        %v1034 = vpop.f32.mrb[0].mxu0
        %1035 = vmatprep.mubr.bf16.mxu0 0
        %1036 = vmatmul.mubr.bf16.gmra.mrb[0].mxu0 %v982
        %v1037 = vpop.f32.mrb[0].mxu0
        %v1038 = vadd.f32 0.0, %v1037
        %v1039 = vpop.f32.mrb[0].mxu0
        %v1040 = vpop.f32.mrb[0].mxu0
        %v1041 = vadd.f32 0.0, %v1040
        %v1042 = vpop.f32.mrb[0].mxu0
        %1043 = vmatprep.mubr.bf16.mxu0 0
        %1044 = vmatmul.mubr.bf16.gmra.mrb[0].mxu0 %v985
        %v1045 = vpop.f32.mrb[0].mxu0
        %v1046 = vadd.f32 0.0, %v1045
        %v1047 = vpop.f32.mrb[0].mxu0
        %v1048 = vpop.f32.mrb[0].mxu0
        %v1049 = vadd.f32 0.0, %v1048
        %v1050 = vpop.f32.mrb[0].mxu0
        %1051 = vdwg.mxu0
        %vm1052 = vcmp.ge.f32.partialorder %v1022, 0.0
        %vm1053 = vcmp.ge.f32.partialorder %v1025, 0.0
        %vm1054 = vcmp.ge.f32.partialorder %v1030, 0.0
        %vm1055 = vcmp.ge.f32.partialorder %v1033, 0.0
        %vm1056 = vcmp.ge.f32.partialorder %v1038, 0.0
        %vm1057 = vcmp.ge.f32.partialorder %v1041, 0.0
        %vm1058 = vcmp.ge.f32.partialorder %v1046, 0.0
        %vm1059 = vcmp.ge.f32.partialorder %v1049, 0.0
        %v1060 = vmul.f32 %v1022, 0.01
        %v1061 = vmul.f32 %v1025, 0.01
        %v1062 = vmul.f32 %v1030, 0.01
        %v1063 = vmul.f32 %v1033, 0.01
        %v1064 = vmul.f32 %v1038, 0.01
        %v1065 = vmul.f32 %v1041, 0.01
        %v1066 = vmul.f32 %v1046, 0.01
        %v1067 = vmul.f32 %v1049, 0.01
        %v1068 = vsel %vm1052, %v1022, %v1060
        %v1069 = vsel %vm1053, %v1025, %v1061
        %v1070 = vsel %vm1054, %v1030, %v1062
        %v1071 = vsel %vm1055, %v1033, %v1063
        %v1072 = vsel %vm1056, %v1038, %v1064
        %v1073 = vsel %vm1057, %v1041, %v1065
        %v1074 = vsel %vm1058, %v1046, %v1066
        %v1075 = vsel %vm1059, %v1049, %v1067
        %v1076 = vpack.c.bf16 %v1069, %v1068
        %v1077 = vpack.c.bf16 %v1071, %v1070
        %v1078 = vpack.c.bf16 %v1073, %v1072
        %v1079 = vpack.c.bf16 %v1075, %v1074
        %v1080 = vld [vmem:[%s3] sm:$0xf]
        %v1081 = vld [vmem:[%s3 + $0x4] sm:$0xf]
        %v1082 = vld [vmem:[%s3 + $0x8] sm:$0xf]
        %v1083 = vld [vmem:[%s3 + $0xc] sm:$0xf]
        %v1088 = vunpack.c.l.b16 %v1080
        %v1089 = vunpack.c.l.b16 %v1081
        %v1090 = vunpack.c.l.b16 %v1082
        %v1091 = vunpack.c.l.b16 %v1083
        %v1092 = vpack.c.b16 %v1089, %v1088
        %v1093 = vpack.c.b16 %v1091, %v1090
        %v1097 = vsel %vm836, %v1076, 0
        %v1100 = vsel %vm836, %v1077, 0
        %v1103 = vsel %vm836, %v1078, 0
        %v1106 = vsel %vm836, %v1079, 0
        %1108 = vmatprep.subr.bf16.mxu0 0
        %1109 = vmatpush1.bf16.msra.mxu0 %v1092
        %1110 = vmatprep.subr.bf16.mxu0 0
        %1111 = vmatpush1.bf16.msra.mxu0 %v1093
        %1112 = vmatprep.subr.bf16.mxu0 0
        %1113 = vmatpush1.bf16.msra.mxu0 0
        %1114 = vmatprep.subr.bf16.mxu0 0
        %1115 = vmatpush1.bf16.msra.mxu0 0
        %1116 = vmatprep.subr.bf16.mxu0 0
        %1117 = vmatpush1.bf16.msra.mxu0 0
        %1118 = vmatprep.subr.bf16.mxu0 0
        %1119 = vmatpush1.bf16.msra.mxu0 0
        %1120 = vmatprep.subr.bf16.mxu0 0
        %1121 = vmatpush1.bf16.msra.mxu0 0
        %1122 = vmatprep.subr.bf16.mxu0 0
        %1123 = vmatpush1.bf16.msra.mxu0 0
        %1124 = vmatprep.subr.bf16.mxu0 0
        %1125 = vmatpush1.bf16.msra.mxu0 0
        %1126 = vmatprep.subr.bf16.mxu0 0
        %1127 = vmatpush1.bf16.msra.mxu0 0
        %1128 = vmatprep.subr.bf16.mxu0 0
        %1129 = vmatpush1.bf16.msra.mxu0 0
        %1130 = vmatprep.subr.bf16.mxu0 0
        %1131 = vmatpush1.bf16.msra.mxu0 0
        %1132 = vmatprep.subr.bf16.mxu0 0
        %1133 = vmatpush1.bf16.msra.mxu0 0
        %1134 = vmatprep.subr.bf16.mxu0 0
        %1135 = vmatpush1.bf16.msra.mxu0 0
        %1136 = vmatprep.subr.bf16.mxu0 0
        %1137 = vmatpush1.bf16.msra.mxu0 0
        %1138 = vmatprep.subr.bf16.mxu0 0
        %1139 = vmatpush1.bf16.msra.mxu0 0
        %1140 = vmatprep.mubr.bf16.mxu0 0
        %1141 = vmatmul.mubr.bf16.gmra.mrb[0].mxu0 %v1097
        %v1142 = vpop.f32.mrb[0].mxu0
        %v1143 = vadd.f32 0.0, %v1142
        %v1144 = vpop.f32.mrb[0].mxu0
        %v1145 = vpop.f32.mrb[0].mxu0
        %v1146 = vadd.f32 0.0, %v1145
        %v1147 = vpop.f32.mrb[0].mxu0
        %1148 = vmatprep.mubr.bf16.mxu0 0
        %1149 = vmatmul.mubr.bf16.gmra.mrb[0].mxu0 %v1100
        %v1150 = vpop.f32.mrb[0].mxu0
        %v1151 = vadd.f32 0.0, %v1150
        %v1152 = vpop.f32.mrb[0].mxu0
        %v1153 = vpop.f32.mrb[0].mxu0
        %v1154 = vadd.f32 0.0, %v1153
        %v1155 = vpop.f32.mrb[0].mxu0
        %1156 = vmatprep.mubr.bf16.mxu0 0
        %1157 = vmatmul.mubr.bf16.gmra.mrb[0].mxu0 %v1103
        %v1158 = vpop.f32.mrb[0].mxu0
        %v1159 = vadd.f32 0.0, %v1158
        %v1160 = vpop.f32.mrb[0].mxu0
        %v1161 = vpop.f32.mrb[0].mxu0
        %v1162 = vadd.f32 0.0, %v1161
        %v1163 = vpop.f32.mrb[0].mxu0
        %1164 = vmatprep.mubr.bf16.mxu0 0
        %1165 = vmatmul.mubr.bf16.gmra.mrb[0].mxu0 %v1106
        %v1166 = vpop.f32.mrb[0].mxu0
        %v1167 = vadd.f32 0.0, %v1166
        %v1168 = vpop.f32.mrb[0].mxu0
        %v1169 = vpop.f32.mrb[0].mxu0
        %v1170 = vadd.f32 0.0, %v1169
        %v1171 = vpop.f32.mrb[0].mxu0
        %1172 = vdwg.mxu0
        %vm1173 = vcmp.ge.f32.partialorder %v1143, 0.0
        %vm1174 = vcmp.ge.f32.partialorder %v1146, 0.0
        %vm1175 = vcmp.ge.f32.partialorder %v1151, 0.0
        %vm1176 = vcmp.ge.f32.partialorder %v1154, 0.0
        %vm1177 = vcmp.ge.f32.partialorder %v1159, 0.0
        %vm1178 = vcmp.ge.f32.partialorder %v1162, 0.0
        %vm1179 = vcmp.ge.f32.partialorder %v1167, 0.0
        %vm1180 = vcmp.ge.f32.partialorder %v1170, 0.0
        %v1181 = vmul.f32 %v1143, 0.01
        %v1182 = vmul.f32 %v1146, 0.01
        %v1183 = vmul.f32 %v1151, 0.01
        %v1184 = vmul.f32 %v1154, 0.01
        %v1185 = vmul.f32 %v1159, 0.01
        %v1186 = vmul.f32 %v1162, 0.01
        %v1187 = vmul.f32 %v1167, 0.01
        %v1188 = vmul.f32 %v1170, 0.01
        %v1189 = vsel %vm1173, %v1143, %v1181
        %v1190 = vsel %vm1174, %v1146, %v1182
        %v1191 = vsel %vm1175, %v1151, %v1183
        %v1192 = vsel %vm1176, %v1154, %v1184
        %v1193 = vsel %vm1177, %v1159, %v1185
        %v1194 = vsel %vm1178, %v1162, %v1186
        %v1195 = vsel %vm1179, %v1167, %v1187
        %v1196 = vsel %vm1180, %v1170, %v1188
        %v1197 = vld [vmem:[%s4] sm:$0x1]
        %v1199 = vlaneseq
        %v1200 = vshrl.u32 %v1199, 7
        %v1201 = vsub.s32 0, %v1200
        %v1202 = vrot.slane %v1197, %v1201
        %v1204 = vmul.f32 %v1189, %v1202
        %v1205 = vmul.f32 %v1190, %v1202
        %v1206 = vmul.f32 %v1191, %v1202
        %v1207 = vmul.f32 %v1192, %v1202
        %v1208 = vmul.f32 %v1193, %v1202
        %v1209 = vmul.f32 %v1194, %v1202
        %v1210 = vmul.f32 %v1195, %v1202
        %v1211 = vmul.f32 %v1196, %v1202
        %v1212 = vsel %vm836, %v1204, 0.0
        %1213 = vadd.xlane.f32.xlu0 %v1212
        %v1214 = vpop.xlane.xlu0 %1213
        %v1215 = vsel %vm836, %v1205, 0.0
        %1216 = vadd.xlane.f32.xlu0 %v1215
        %v1217 = vpop.xlane.xlu0 %1216
        %v1218 = vsel %vm836, %v1206, 0.0
        %1219 = vadd.xlane.f32.xlu0 %v1218
        %v1220 = vpop.xlane.xlu0 %1219
        %v1221 = vsel %vm836, %v1207, 0.0
        %1222 = vadd.xlane.f32.xlu0 %v1221
        %v1223 = vpop.xlane.xlu0 %1222
        %v1224 = vsel %vm836, %v1208, 0.0
        %1225 = vadd.xlane.f32.xlu0 %v1224
        %v1226 = vpop.xlane.xlu0 %1225
        %v1227 = vsel %vm836, %v1209, 0.0
        %1228 = vadd.xlane.f32.xlu0 %v1227
        %v1229 = vpop.xlane.xlu0 %1228
        %v1230 = vsel %vm836, %v1210, 0.0
        %1231 = vadd.xlane.f32.xlu0 %v1230
        %v1232 = vpop.xlane.xlu0 %1231
        %v1233 = vsel %vm836, %v1211, 0.0
        %1234 = vadd.xlane.f32.xlu0 %v1233
        %v1235 = vpop.xlane.xlu0 %1234
        %v1236 = vld [vmem:[#allocation2] sm:$0x1]
        %v1238 = vlaneseq
        %v1239 = vshrl.u32 %v1238, 7
        %v1240 = vsub.s32 0, %v1239
        %v1241 = vrot.slane %v1236, %v1240
        %v1243 = vadd.f32 %v1214, %v1241
        %v1244 = vadd.f32 %v1217, %v1241
        %v1245 = vadd.f32 %v1220, %v1241
        %v1246 = vadd.f32 %v1223, %v1241
        %v1247 = vadd.f32 %v1226, %v1241
        %v1248 = vadd.f32 %v1229, %v1241
        %v1249 = vadd.f32 %v1232, %v1241
        %v1250 = vadd.f32 %v1235, %v1241
        %v1252 = vlaneseq
        %v1253 = vshrl.u32 %v1252, 7
        %v1254 = vsub.s32 0, %v1253
        %v1255 = vrot.slane %v684, %v1254
        %1257 = vbcast.lane.b32.xlu0 %v1255, 256
        %v1258 = vpop.permute.xlu0 %1257
        %v1259 = vlaneseq
        %v1260 = vshrl.u32 %v1259, 7
        %v1261 = vsub.s32 1, %v1260
        %v1262 = vrot.slane %v684, %v1261
        %1264 = vbcast.lane.b32.xlu0 %v1262, 256
        %v1265 = vpop.permute.xlu0 %1264
        %v1266 = vlaneseq
        %v1267 = vshrl.u32 %v1266, 7
        %v1268 = vsub.s32 2, %v1267
        %v1269 = vrot.slane %v684, %v1268
        %1271 = vbcast.lane.b32.xlu0 %v1269, 256
        %v1272 = vpop.permute.xlu0 %1271
        %v1273 = vlaneseq
        %v1274 = vshrl.u32 %v1273, 7
        %v1275 = vsub.s32 3, %v1274
        %v1276 = vrot.slane %v684, %v1275
        %1278 = vbcast.lane.b32.xlu0 %v1276, 256
        %v1279 = vpop.permute.xlu0 %1278
        %v1280 = vlaneseq
        %v1281 = vshrl.u32 %v1280, 7
        %v1282 = vsub.s32 4, %v1281
        %v1283 = vrot.slane %v684, %v1282
        %1285 = vbcast.lane.b32.xlu0 %v1283, 256
        %v1286 = vpop.permute.xlu0 %1285
        %v1287 = vlaneseq
        %v1288 = vshrl.u32 %v1287, 7
        %v1289 = vsub.s32 5, %v1288
        %v1290 = vrot.slane %v684, %v1289
        %1292 = vbcast.lane.b32.xlu0 %v1290, 256
        %v1293 = vpop.permute.xlu0 %1292
        %v1294 = vlaneseq
        %v1295 = vshrl.u32 %v1294, 7
        %v1296 = vsub.s32 6, %v1295
        %v1297 = vrot.slane %v684, %v1296
        %1299 = vbcast.lane.b32.xlu0 %v1297, 256
        %v1300 = vpop.permute.xlu0 %1299
        %v1301 = vlaneseq
        %v1302 = vshrl.u32 %v1301, 7
        %v1303 = vsub.s32 7, %v1302
        %v1304 = vrot.slane %v684, %v1303
        %1306 = vbcast.lane.b32.xlu0 %v1304, 256
        %v1307 = vpop.permute.xlu0 %1306
        %v1316 = vsub.f32 %v1243, %v1258
        %v1317 = vsub.f32 %v1244, %v1265
        %v1318 = vsub.f32 %v1245, %v1272
        %v1319 = vsub.f32 %v1246, %v1279
        %v1320 = vsub.f32 %v1247, %v1286
        %v1321 = vsub.f32 %v1248, %v1293
        %v1322 = vsub.f32 %v1249, %v1300
        %v1323 = vsub.f32 %v1250, %v1307
        %1332 = vset.pattern.permute.xlu0 0
        %1333 = vperm.xlu0 %1332, %v1316
        %v1334 = vpop.permute.xlu0 %1333
        %1335 = vset.pattern.permute.xlu0 0
        %1336 = vperm.xlu0 %1335, %v1317
        %v1337 = vpop.permute.xlu0 %1336
        %1338 = vset.pattern.permute.xlu0 0
        %1339 = vperm.xlu0 %1338, %v1318
        %v1340 = vpop.permute.xlu0 %1339
        %1341 = vset.pattern.permute.xlu0 0
        %1342 = vperm.xlu0 %1341, %v1319
        %v1343 = vpop.permute.xlu0 %1342
        %1344 = vset.pattern.permute.xlu0 0
        %1345 = vperm.xlu0 %1344, %v1320
        %v1346 = vpop.permute.xlu0 %1345
        %1347 = vset.pattern.permute.xlu0 0
        %1348 = vperm.xlu0 %1347, %v1321
        %v1349 = vpop.permute.xlu0 %1348
        %1350 = vset.pattern.permute.xlu0 0
        %1351 = vperm.xlu0 %1350, %v1322
        %v1352 = vpop.permute.xlu0 %1351
        %1353 = vset.pattern.permute.xlu0 0
        %1354 = vperm.xlu0 %1353, %v1323
        %v1355 = vpop.permute.xlu0 %1354
        %v1356 = vlaneseq
        %v1357 = vshrl.u32 %v1356, 7
        %v1358 = vsub.s32 %v682, %v1357
        %v1359 = vrot.slane %v1334, %v1358
        %v1360 = vlaneseq
        %v1361 = vshrl.u32 %v1360, 7
        %v1362 = vsub.s32 %v682, %v1361
        %v1363 = vrot.slane %v1337, %v1362
        %v1364 = vlaneseq
        %v1365 = vshrl.u32 %v1364, 7
        %v1366 = vsub.s32 %v682, %v1365
        %v1367 = vrot.slane %v1340, %v1366
        %v1368 = vlaneseq
        %v1369 = vshrl.u32 %v1368, 7
        %v1370 = vsub.s32 %v682, %v1369
        %v1371 = vrot.slane %v1343, %v1370
        %v1372 = vlaneseq
        %v1373 = vshrl.u32 %v1372, 7
        %v1374 = vsub.s32 %v682, %v1373
        %v1375 = vrot.slane %v1346, %v1374
        %v1376 = vlaneseq
        %v1377 = vshrl.u32 %v1376, 7
        %v1378 = vsub.s32 %v682, %v1377
        %v1379 = vrot.slane %v1349, %v1378
        %v1380 = vlaneseq
        %v1381 = vshrl.u32 %v1380, 7
        %v1382 = vsub.s32 %v682, %v1381
        %v1383 = vrot.slane %v1352, %v1382
        %v1384 = vlaneseq
        %v1385 = vshrl.u32 %v1384, 7
        %v1386 = vsub.s32 %v682, %v1385
        %v1387 = vrot.slane %v1355, %v1386
        %vm1388 = vcmask 1041409
        %v1389 = vsel %vm1388, %v1363, %v1359
        %vm1390 = vcmask 1042434
        %v1391 = vsel %vm1390, %v1367, %v1389
        %vm1392 = vcmask 1043459
        %v1393 = vsel %vm1392, %v1371, %v1391
        %vm1394 = vcmask 1044484
        %v1395 = vsel %vm1394, %v1375, %v1393
        %vm1396 = vcmask 1045509
        %v1397 = vsel %vm1396, %v1379, %v1395
        %vm1398 = vcmask 1046534
        %v1399 = vsel %vm1398, %v1383, %v1397
        %vm1400 = vcmask 1047559
        %v1401 = vsel %vm1400, %v1387, %v1399
        %vm1403 = vcmask 64512
        %v1404 = vsel %vm1403, %v1401, -inf
        %1405 = vmax.xlane.f32.xlu0 %v1404
        %v1406 = vpop.xlane.xlu0 %1405
        %v1408 = vlaneseq
        %v1409 = vshrl.u32 %v1408, 7
        %v1410 = vsub.s32 0, %v1409
        %v1411 = vrot.slane %v1406, %v1410
        %v1412 = vlaneseq
        %v1413 = vshrl.u32 %v1412, 7
        %v1414 = vsub.s32 1, %v1413
        %v1415 = vrot.slane %v1406, %v1414
        %v1416 = vlaneseq
        %v1417 = vshrl.u32 %v1416, 7
        %v1418 = vsub.s32 2, %v1417
        %v1419 = vrot.slane %v1406, %v1418
        %v1420 = vlaneseq
        %v1421 = vshrl.u32 %v1420, 7
        %v1422 = vsub.s32 3, %v1421
        %v1423 = vrot.slane %v1406, %v1422
        %v1424 = vlaneseq
        %v1425 = vshrl.u32 %v1424, 7
        %v1426 = vsub.s32 4, %v1425
        %v1427 = vrot.slane %v1406, %v1426
        %v1428 = vlaneseq
        %v1429 = vshrl.u32 %v1428, 7
        %v1430 = vsub.s32 5, %v1429
        %v1431 = vrot.slane %v1406, %v1430
        %v1432 = vlaneseq
        %v1433 = vshrl.u32 %v1432, 7
        %v1434 = vsub.s32 6, %v1433
        %v1435 = vrot.slane %v1406, %v1434
        %v1436 = vlaneseq
        %v1437 = vshrl.u32 %v1436, 7
        %v1438 = vsub.s32 7, %v1437
        %v1439 = vrot.slane %v1406, %v1438
        %v1448 = vsub.f32 %v1316, %v1411
        %v1449 = vsub.f32 %v1317, %v1415
        %v1450 = vsub.f32 %v1318, %v1419
        %v1451 = vsub.f32 %v1319, %v1423
        %v1452 = vsub.f32 %v1320, %v1427
        %v1453 = vsub.f32 %v1321, %v1431
        %v1454 = vsub.f32 %v1322, %v1435
        %v1455 = vsub.f32 %v1323, %v1439
        %v1456 = vmul.f32 %v1448, 1.442695
        %v1457 = vpow.pop %v1456
        %v1458 = vmul.f32 %v1449, 1.442695
        %v1459 = vpow.pop %v1458
        %v1460 = vmul.f32 %v1450, 1.442695
        %v1461 = vpow.pop %v1460
        %v1462 = vmul.f32 %v1451, 1.442695
        %v1463 = vpow.pop %v1462
        %v1464 = vmul.f32 %v1452, 1.442695
        %v1465 = vpow.pop %v1464
        %v1466 = vmul.f32 %v1453, 1.442695
        %v1467 = vpow.pop %v1466
        %v1468 = vmul.f32 %v1454, 1.442695
        %v1469 = vpow.pop %v1468
        %v1470 = vmul.f32 %v1455, 1.442695
        %v1471 = vpow.pop %v1470
        %1480 = vset.pattern.permute.xlu0 0
        %1481 = vperm.xlu0 %1480, %v1457
        %v1482 = vpop.permute.xlu0 %1481
        %1483 = vset.pattern.permute.xlu0 0
        %1484 = vperm.xlu0 %1483, %v1459
        %v1485 = vpop.permute.xlu0 %1484
        %1486 = vset.pattern.permute.xlu0 0
        %1487 = vperm.xlu0 %1486, %v1461
        %v1488 = vpop.permute.xlu0 %1487
        %1489 = vset.pattern.permute.xlu0 0
        %1490 = vperm.xlu0 %1489, %v1463
        %v1491 = vpop.permute.xlu0 %1490
        %1492 = vset.pattern.permute.xlu0 0
        %1493 = vperm.xlu0 %1492, %v1465
        %v1494 = vpop.permute.xlu0 %1493
        %1495 = vset.pattern.permute.xlu0 0
        %1496 = vperm.xlu0 %1495, %v1467
        %v1497 = vpop.permute.xlu0 %1496
        %1498 = vset.pattern.permute.xlu0 0
        %1499 = vperm.xlu0 %1498, %v1469
        %v1500 = vpop.permute.xlu0 %1499
        %1501 = vset.pattern.permute.xlu0 0
        %1502 = vperm.xlu0 %1501, %v1471
        %v1503 = vpop.permute.xlu0 %1502
        %v1504 = vlaneseq
        %v1505 = vshrl.u32 %v1504, 7
        %v1506 = vsub.s32 %v682, %v1505
        %v1507 = vrot.slane %v1482, %v1506
        %v1508 = vlaneseq
        %v1509 = vshrl.u32 %v1508, 7
        %v1510 = vsub.s32 %v682, %v1509
        %v1511 = vrot.slane %v1485, %v1510
        %v1512 = vlaneseq
        %v1513 = vshrl.u32 %v1512, 7
        %v1514 = vsub.s32 %v682, %v1513
        %v1515 = vrot.slane %v1488, %v1514
        %v1516 = vlaneseq
        %v1517 = vshrl.u32 %v1516, 7
        %v1518 = vsub.s32 %v682, %v1517
        %v1519 = vrot.slane %v1491, %v1518
        %v1520 = vlaneseq
        %v1521 = vshrl.u32 %v1520, 7
        %v1522 = vsub.s32 %v682, %v1521
        %v1523 = vrot.slane %v1494, %v1522
        %v1524 = vlaneseq
        %v1525 = vshrl.u32 %v1524, 7
        %v1526 = vsub.s32 %v682, %v1525
        %v1527 = vrot.slane %v1497, %v1526
        %v1528 = vlaneseq
        %v1529 = vshrl.u32 %v1528, 7
        %v1530 = vsub.s32 %v682, %v1529
        %v1531 = vrot.slane %v1500, %v1530
        %v1532 = vlaneseq
        %v1533 = vshrl.u32 %v1532, 7
        %v1534 = vsub.s32 %v682, %v1533
        %v1535 = vrot.slane %v1503, %v1534
        %v1536 = vsel %vm1388, %v1511, %v1507
        %v1537 = vsel %vm1390, %v1515, %v1536
        %v1538 = vsel %vm1392, %v1519, %v1537
        %v1539 = vsel %vm1394, %v1523, %v1538
        %v1540 = vsel %vm1396, %v1527, %v1539
        %v1541 = vsel %vm1398, %v1531, %v1540
        %v1542 = vsel %vm1400, %v1535, %v1541
        %v1544 = vsel %vm1403, %v1542, 0.0
        %1545 = vadd.xlane.f32.xlu0 %v1544
        %v1546 = vpop.xlane.xlu0 %1545
        %v1548 = vlaneseq
        %v1549 = vshrl.u32 %v1548, 7
        %v1550 = vsub.s32 0, %v1549
        %v1551 = vrot.slane %v1546, %v1550
        %v1552 = vlaneseq
        %v1553 = vshrl.u32 %v1552, 7
        %v1554 = vsub.s32 1, %v1553
        %v1555 = vrot.slane %v1546, %v1554
        %v1556 = vlaneseq
        %v1557 = vshrl.u32 %v1556, 7
        %v1558 = vsub.s32 2, %v1557
        %v1559 = vrot.slane %v1546, %v1558
        %v1560 = vlaneseq
        %v1561 = vshrl.u32 %v1560, 7
        %v1562 = vsub.s32 3, %v1561
        %v1563 = vrot.slane %v1546, %v1562
        %v1564 = vlaneseq
        %v1565 = vshrl.u32 %v1564, 7
        %v1566 = vsub.s32 4, %v1565
        %v1567 = vrot.slane %v1546, %v1566
        %v1568 = vlaneseq
        %v1569 = vshrl.u32 %v1568, 7
        %v1570 = vsub.s32 5, %v1569
        %v1571 = vrot.slane %v1546, %v1570
        %v1572 = vlaneseq
        %v1573 = vshrl.u32 %v1572, 7
        %v1574 = vsub.s32 6, %v1573
        %v1575 = vrot.slane %v1546, %v1574
        %v1576 = vlaneseq
        %v1577 = vshrl.u32 %v1576, 7
        %v1578 = vsub.s32 7, %v1577
        %v1579 = vrot.slane %v1546, %v1578
        %v1588 = vrcp.pop %v1551
        %v1589 = vmul.f32 %v1457, %v1588
        %v1590 = vrcp.pop %v1555
        %v1591 = vmul.f32 %v1459, %v1590
        %v1592 = vrcp.pop %v1559
        %v1593 = vmul.f32 %v1461, %v1592
        %v1594 = vrcp.pop %v1563
        %v1595 = vmul.f32 %v1463, %v1594
        %v1596 = vrcp.pop %v1567
        %v1597 = vmul.f32 %v1465, %v1596
        %v1598 = vrcp.pop %v1571
        %v1599 = vmul.f32 %v1467, %v1598
        %v1600 = vrcp.pop %v1575
        %v1601 = vmul.f32 %v1469, %v1600
        %v1602 = vrcp.pop %v1579
        %v1603 = vmul.f32 %v1471, %v1602
        %1612 = vset.pattern.permute.xlu0 0
        %1613 = vperm.xlu0 %1612, %v1589
        %v1614 = vpop.permute.xlu0 %1613
        %1615 = vset.pattern.permute.xlu0 0
        %1616 = vperm.xlu0 %1615, %v1591
        %v1617 = vpop.permute.xlu0 %1616
        %1618 = vset.pattern.permute.xlu0 0
        %1619 = vperm.xlu0 %1618, %v1593
        %v1620 = vpop.permute.xlu0 %1619
        %1621 = vset.pattern.permute.xlu0 0
        %1622 = vperm.xlu0 %1621, %v1595
        %v1623 = vpop.permute.xlu0 %1622
        %1624 = vset.pattern.permute.xlu0 0
        %1625 = vperm.xlu0 %1624, %v1597
        %v1626 = vpop.permute.xlu0 %1625
        %1627 = vset.pattern.permute.xlu0 0
        %1628 = vperm.xlu0 %1627, %v1599
        %v1629 = vpop.permute.xlu0 %1628
        %1630 = vset.pattern.permute.xlu0 0
        %1631 = vperm.xlu0 %1630, %v1601
        %v1632 = vpop.permute.xlu0 %1631
        %1633 = vset.pattern.permute.xlu0 0
        %1634 = vperm.xlu0 %1633, %v1603
        %v1635 = vpop.permute.xlu0 %1634
        %v1636 = vlaneseq
        %v1637 = vshrl.u32 %v1636, 7
        %v1638 = vsub.s32 %v682, %v1637
        %v1639 = vrot.slane %v1614, %v1638
        %v1640 = vlaneseq
        %v1641 = vshrl.u32 %v1640, 7
        %v1642 = vsub.s32 %v682, %v1641
        %v1643 = vrot.slane %v1617, %v1642
        %v1644 = vlaneseq
        %v1645 = vshrl.u32 %v1644, 7
        %v1646 = vsub.s32 %v682, %v1645
        %v1647 = vrot.slane %v1620, %v1646
        %v1648 = vlaneseq
        %v1649 = vshrl.u32 %v1648, 7
        %v1650 = vsub.s32 %v682, %v1649
        %v1651 = vrot.slane %v1623, %v1650
        %v1652 = vlaneseq
        %v1653 = vshrl.u32 %v1652, 7
        %v1654 = vsub.s32 %v682, %v1653
        %v1655 = vrot.slane %v1626, %v1654
        %v1656 = vlaneseq
        %v1657 = vshrl.u32 %v1656, 7
        %v1658 = vsub.s32 %v682, %v1657
        %v1659 = vrot.slane %v1629, %v1658
        %v1660 = vlaneseq
        %v1661 = vshrl.u32 %v1660, 7
        %v1662 = vsub.s32 %v682, %v1661
        %v1663 = vrot.slane %v1632, %v1662
        %v1664 = vlaneseq
        %v1665 = vshrl.u32 %v1664, 7
        %v1666 = vsub.s32 %v682, %v1665
        %v1667 = vrot.slane %v1635, %v1666
        %v1668 = vsel %vm1388, %v1643, %v1639
        %v1669 = vsel %vm1390, %v1647, %v1668
        %v1670 = vsel %vm1392, %v1651, %v1669
        %v1671 = vsel %vm1394, %v1655, %v1670
        %v1672 = vsel %vm1396, %v1659, %v1671
        %v1673 = vsel %vm1398, %v1663, %v1672
        %v1674 = vsel %vm1400, %v1667, %v1673
        %1676 = vst.msk [vmem:[%s655] sm:$0xff] %vm1403, %v1674
        %v1677 = vsel %vm683, 0.0, %v1674
        %v1678 = vand.u32 2147483647, %v1677
        %v1679 = vsel %vm1403, %v1678, 0.0
        %1680 = vadd.xlane.f32.xlu0 %v1679
        %v1681 = vpop.xlane.xlu0 %1680
        %v1682 = vmax.f32 %v1681, 1e-12
        %v1683 = vrcp.pop %v1682
        %v1684 = vmul.f32 %v1677, %v1683
        %v1685 = vpack.c.bf16 %v1684, %v1684
        %v1686 = vld [vmem:[%s6] sm:$0xf]
        %v1687 = vld [vmem:[%s6 + $0x4] sm:$0xf]
        %v1688 = vld [vmem:[%s6 + $0x8] sm:$0xf]
        %v1689 = vld [vmem:[%s6 + $0xc] sm:$0xf]
        %v1690 = vld [vmem:[%s7] sm:$0xf]
        %v1691 = vld [vmem:[%s7 + $0x4] sm:$0xf]
        %v1692 = vld [vmem:[%s7 + $0x8] sm:$0xf]
        %v1693 = vld [vmem:[%s7 + $0xc] sm:$0xf]
        %v1695 = vsel %vm1403, %v1685, 0
        %vm1697 = vcmask 1043456
        %v1699 = vsel %vm1697, %v685, 0
        %1701 = vmatprep.subr.bf16.mxu0 0
        %1702 = vmatpush1.bf16.msra.mxu0 %v1699
        %1703 = vmatprep.subr.bf16.mxu0 0
        %1704 = vmatpush1.bf16.msra.mxu0 0
        %1705 = vmatprep.subr.bf16.mxu0 0
        %1706 = vmatpush1.bf16.msra.mxu0 0
        %1707 = vmatprep.subr.bf16.mxu0 0
        %1708 = vmatpush1.bf16.msra.mxu0 0
        %1709 = vmatprep.subr.bf16.mxu0 0
        %1710 = vmatpush1.bf16.msra.mxu0 0
        %1711 = vmatprep.subr.bf16.mxu0 0
        %1712 = vmatpush1.bf16.msra.mxu0 0
        %1713 = vmatprep.subr.bf16.mxu0 0
        %1714 = vmatpush1.bf16.msra.mxu0 0
        %1715 = vmatprep.subr.bf16.mxu0 0
        %1716 = vmatpush1.bf16.msra.mxu0 0
        %1717 = vmatprep.subr.bf16.mxu0 0
        %1718 = vmatpush1.bf16.msra.mxu0 0
        %1719 = vmatprep.subr.bf16.mxu0 0
        %1720 = vmatpush1.bf16.msra.mxu0 0
        %1721 = vmatprep.subr.bf16.mxu0 0
        %1722 = vmatpush1.bf16.msra.mxu0 0
        %1723 = vmatprep.subr.bf16.mxu0 0
        %1724 = vmatpush1.bf16.msra.mxu0 0
        %1725 = vmatprep.subr.bf16.mxu0 0
        %1726 = vmatpush1.bf16.msra.mxu0 0
        %1727 = vmatprep.subr.bf16.mxu0 0
        %1728 = vmatpush1.bf16.msra.mxu0 0
        %1729 = vmatprep.subr.bf16.mxu0 0
        %1730 = vmatpush1.bf16.msra.mxu0 0
        %1731 = vmatprep.subr.bf16.mxu0 0
        %1732 = vmatpush1.bf16.msra.mxu0 0
        %1733 = vmatprep.mubr.bf16.mxu0 0
        %1734 = vmatmul.mubr.bf16.gmra.mrb[0].mxu0 %v1695
        %v1735 = vpop.f32.mrb[0].mxu0
        %v1736 = vadd.f32 0.0, %v1735
        %v1737 = vpop.f32.mrb[0].mxu0
        %v1738 = vpop.f32.mrb[0].mxu0
        %v1739 = vpop.f32.mrb[0].mxu0
        %1740 = vdwg.mxu0
        %v1741 = vpack.c.bf16 %v1736, %v1736
        %v1746 = vunpack.c.l.b16 %v1690
        %v1747 = vunpack.c.l.b16 %v1691
        %v1748 = vunpack.c.l.b16 %v1692
        %v1749 = vunpack.c.l.b16 %v1693
        %v1750 = vpack.c.b16 %v1747, %v1746
        %v1751 = vpack.c.b16 %v1749, %v1748
        %v1755 = vsel %vm836, %v1741, 0
        %1757 = vmatprep.subr.bf16.mxu0 0
        %1758 = vmatpush1.bf16.msra.mxu0 %v1750
        %1759 = vmatprep.subr.bf16.mxu0 0
        %1760 = vmatpush1.bf16.msra.mxu0 %v1751
        %1761 = vmatprep.subr.bf16.mxu0 0
        %1762 = vmatpush1.bf16.msra.mxu0 0
        %1763 = vmatprep.subr.bf16.mxu0 0
        %1764 = vmatpush1.bf16.msra.mxu0 0
        %1765 = vmatprep.subr.bf16.mxu0 0
        %1766 = vmatpush1.bf16.msra.mxu0 0
        %1767 = vmatprep.subr.bf16.mxu0 0
        %1768 = vmatpush1.bf16.msra.mxu0 0
        %1769 = vmatprep.subr.bf16.mxu0 0
        %1770 = vmatpush1.bf16.msra.mxu0 0
        %1771 = vmatprep.subr.bf16.mxu0 0
        %1772 = vmatpush1.bf16.msra.mxu0 0
        %1773 = vmatprep.subr.bf16.mxu0 0
        %1774 = vmatpush1.bf16.msra.mxu0 0
        %1775 = vmatprep.subr.bf16.mxu0 0
        %1776 = vmatpush1.bf16.msra.mxu0 0
        %1777 = vmatprep.subr.bf16.mxu0 0
        %1778 = vmatpush1.bf16.msra.mxu0 0
        %1779 = vmatprep.subr.bf16.mxu0 0
        %1780 = vmatpush1.bf16.msra.mxu0 0
        %1781 = vmatprep.subr.bf16.mxu0 0
        %1782 = vmatpush1.bf16.msra.mxu0 0
        %1783 = vmatprep.subr.bf16.mxu0 0
        %1784 = vmatpush1.bf16.msra.mxu0 0
        %1785 = vmatprep.subr.bf16.mxu0 0
        %1786 = vmatpush1.bf16.msra.mxu0 0
        %1787 = vmatprep.subr.bf16.mxu0 0
        %1788 = vmatpush1.bf16.msra.mxu0 0
        %1789 = vmatprep.mubr.bf16.mxu0 0
        %1790 = vmatmul.mubr.bf16.gmra.mrb[0].mxu0 %v1755
        %v1791 = vpop.f32.mrb[0].mxu0
        %v1792 = vadd.f32 0.0, %v1791
        %v1793 = vpop.f32.mrb[0].mxu0
        %v1794 = vpop.f32.mrb[0].mxu0
        %v1795 = vpop.f32.mrb[0].mxu0
        %1796 = vdwg.mxu0
        %v1801 = vunpack.c.l.b16 %v1686
        %v1802 = vunpack.c.l.b16 %v1687
        %v1803 = vunpack.c.l.b16 %v1688
        %v1804 = vunpack.c.l.b16 %v1689
        %v1805 = vpack.c.b16 %v1802, %v1801
        %v1806 = vpack.c.b16 %v1804, %v1803
        %v1809 = vsel %vm836, %v685, 0
        %1811 = vmatprep.subr.bf16.mxu0 0
        %1812 = vmatpush1.bf16.msra.mxu0 %v1805
        %1813 = vmatprep.subr.bf16.mxu0 0
        %1814 = vmatpush1.bf16.msra.mxu0 %v1806
        %1815 = vmatprep.subr.bf16.mxu0 0
        %1816 = vmatpush1.bf16.msra.mxu0 0
        %1817 = vmatprep.subr.bf16.mxu0 0
        %1818 = vmatpush1.bf16.msra.mxu0 0
        %1819 = vmatprep.subr.bf16.mxu0 0
        %1820 = vmatpush1.bf16.msra.mxu0 0
        %1821 = vmatprep.subr.bf16.mxu0 0
        %1822 = vmatpush1.bf16.msra.mxu0 0
        %1823 = vmatprep.subr.bf16.mxu0 0
        %1824 = vmatpush1.bf16.msra.mxu0 0
        %1825 = vmatprep.subr.bf16.mxu0 0
        %1826 = vmatpush1.bf16.msra.mxu0 0
        %1827 = vmatprep.subr.bf16.mxu0 0
        %1828 = vmatpush1.bf16.msra.mxu0 0
        %1829 = vmatprep.subr.bf16.mxu0 0
        %1830 = vmatpush1.bf16.msra.mxu0 0
        %1831 = vmatprep.subr.bf16.mxu0 0
        %1832 = vmatpush1.bf16.msra.mxu0 0
        %1833 = vmatprep.subr.bf16.mxu0 0
        %1834 = vmatpush1.bf16.msra.mxu0 0
        %1835 = vmatprep.subr.bf16.mxu0 0
        %1836 = vmatpush1.bf16.msra.mxu0 0
        %1837 = vmatprep.subr.bf16.mxu0 0
        %1838 = vmatpush1.bf16.msra.mxu0 0
        %1839 = vmatprep.subr.bf16.mxu0 0
        %1840 = vmatpush1.bf16.msra.mxu0 0
        %1841 = vmatprep.subr.bf16.mxu0 0
        %1842 = vmatpush1.bf16.msra.mxu0 0
        %1843 = vmatprep.mubr.bf16.mxu0 0
        %1844 = vmatmul.mubr.bf16.gmra.mrb[0].mxu0 %v1809
        %v1845 = vpop.f32.mrb[0].mxu0
        %v1846 = vadd.f32 %v1792, %v1845
        %v1847 = vpop.f32.mrb[0].mxu0
        %v1848 = vpop.f32.mrb[0].mxu0
        %v1849 = vpop.f32.mrb[0].mxu0
        %1850 = vdwg.mxu0
        %vm1851 = vcmp.ge.f32.partialorder %v1846, 0.0
        %v1852 = vmul.f32 %v1846, 0.01
        %v1853 = vsel %vm1851, %v1846, %v1852
        %v1854 = vpack.c.bf16 %v1853, %v1853
        %v1856 = vcombine.high %v1853, %v1853
        %v1858 = vunpack.c.l.s4 1966171168
        %v1859 = vunpack.c.0.s8 %v1858
        %v1860 = vlaneseq
        %v1861 = vshrl.u32 %v1860, 7
        %v1862 = vsub.s32 %v1859, %v1861
        %v1863 = vrot.slane %v1853, %v1862
        %v1865 = vunpack.c.l.s4 1966171168
        %v1866 = vunpack.c.0.s8 %v1865
        %v1867 = vlaneseq
        %v1868 = vshrl.u32 %v1867, 7
        %v1869 = vsub.s32 %v1866, %v1868
        %v1870 = vrot.slane %v1856, %v1869
        %v1871 = vcombine.high %v1863, %v1863
        %v1872 = vcombine.high %v1870, %v1870
        %v1874 = vunpack.c.l.s4 1966171168
        %v1875 = vunpack.c.0.s8 %v1874
        %v1876 = vlaneseq
        %v1877 = vshrl.u32 %v1876, 7
        %v1878 = vsub.s32 %v1875, %v1877
        %v1879 = vrot.slane %v1863, %v1878
        %v1881 = vunpack.c.l.s4 1966171168
        %v1882 = vunpack.c.0.s8 %v1881
        %v1883 = vlaneseq
        %v1884 = vshrl.u32 %v1883, 7
        %v1885 = vsub.s32 %v1882, %v1884
        %v1886 = vrot.slane %v1870, %v1885
        %v1888 = vunpack.c.l.s4 1966171168
        %v1889 = vunpack.c.0.s8 %v1888
        %v1890 = vlaneseq
        %v1891 = vshrl.u32 %v1890, 7
        %v1892 = vsub.s32 %v1889, %v1891
        %v1893 = vrot.slane %v1871, %v1892
        %v1895 = vunpack.c.l.s4 1966171168
        %v1896 = vunpack.c.0.s8 %v1895
        %v1897 = vlaneseq
        %v1898 = vshrl.u32 %v1897, 7
        %v1899 = vsub.s32 %v1896, %v1898
        %v1900 = vrot.slane %v1872, %v1899
        %v1901 = vcombine.high %v1879, %v1879
        %v1902 = vcombine.high %v1886, %v1886
        %v1903 = vcombine.high %v1893, %v1893
        %v1904 = vcombine.high %v1900, %v1900
        %v1905 = vlaneseq
        %v1906 = vshrl.u32 %v1905, 7
        %v1907 = vsub.s32 0, %v1906
        %v1908 = vrot.slane %v1879, %v1907
        %v1909 = vlaneseq
        %v1910 = vshrl.u32 %v1909, 7
        %v1911 = vsub.s32 0, %v1910
        %v1912 = vrot.slane %v1893, %v1911
        %v1913 = vlaneseq
        %v1914 = vshrl.u32 %v1913, 7
        %v1915 = vsub.s32 0, %v1914
        %v1916 = vrot.slane %v1901, %v1915
        %v1917 = vlaneseq
        %v1918 = vshrl.u32 %v1917, 7
        %v1919 = vsub.s32 0, %v1918
        %v1920 = vrot.slane %v1903, %v1919
        %v1921 = vlaneseq
        %v1922 = vshrl.u32 %v1921, 7
        %v1923 = vsub.s32 0, %v1922
        %v1924 = vrot.slane %v1886, %v1923
        %v1925 = vlaneseq
        %v1926 = vshrl.u32 %v1925, 7
        %v1927 = vsub.s32 0, %v1926
        %v1928 = vrot.slane %v1900, %v1927
        %v1929 = vlaneseq
        %v1930 = vshrl.u32 %v1929, 7
        %v1931 = vsub.s32 0, %v1930
        %v1932 = vrot.slane %v1902, %v1931
        %v1933 = vlaneseq
        %v1934 = vshrl.u32 %v1933, 7
        %v1935 = vsub.s32 0, %v1934
        %v1936 = vrot.slane %v1904, %v1935
        %v1945 = vsub.f32 %v1908, %v1853
        %v1946 = vsub.f32 %v1912, %v1853
        %v1947 = vsub.f32 %v1916, %v1853
        %v1948 = vsub.f32 %v1920, %v1853
        %v1949 = vsub.f32 %v1924, %v1853
        %v1950 = vsub.f32 %v1928, %v1853
        %v1951 = vsub.f32 %v1932, %v1853
        %v1952 = vsub.f32 %v1936, %v1853
        %v1953 = vand.u32 2147483647, %v1945
        %v1954 = vand.u32 2147483647, %v1946
        %v1955 = vand.u32 2147483647, %v1947
        %v1956 = vand.u32 2147483647, %v1948
        %v1957 = vand.u32 2147483647, %v1949
        %v1958 = vand.u32 2147483647, %v1950
        %v1959 = vand.u32 2147483647, %v1951
        %v1960 = vand.u32 2147483647, %v1952
        %v1961 = vsub.f32 0.0, %v1953
        %v1962 = vsub.f32 0.0, %v1954
        %v1963 = vsub.f32 0.0, %v1955
        %v1964 = vsub.f32 0.0, %v1956
        %v1965 = vsub.f32 0.0, %v1957
        %v1966 = vsub.f32 0.0, %v1958
        %v1967 = vsub.f32 0.0, %v1959
        %v1968 = vsub.f32 0.0, %v1960
        %v1969 = vmul.f32 %v1961, 1.442695
        %v1970 = vpow.pop %v1969
        %v1971 = vmul.f32 %v1962, 1.442695
        %v1972 = vpow.pop %v1971
        %v1973 = vmul.f32 %v1963, 1.442695
        %v1974 = vpow.pop %v1973
        %v1975 = vmul.f32 %v1964, 1.442695
        %v1976 = vpow.pop %v1975
        %v1977 = vmul.f32 %v1965, 1.442695
        %v1978 = vpow.pop %v1977
        %v1979 = vmul.f32 %v1966, 1.442695
        %v1980 = vpow.pop %v1979
        %v1981 = vmul.f32 %v1967, 1.442695
        %v1982 = vpow.pop %v1981
        %v1983 = vmul.f32 %v1968, 1.442695
        %v1984 = vpow.pop %v1983
        %v1985 = vpack.c.bf16 %v1972, %v1970
        %v1986 = vpack.c.bf16 %v1976, %v1974
        %v1987 = vpack.c.bf16 %v1980, %v1978
        %v1988 = vpack.c.bf16 %v1984, %v1982
        %v1989 = vld [vmem:[%s8] sm:$0xf]
        %v1990 = vld [vmem:[%s8 + $0x4] sm:$0xf]
        %v1991 = vld [vmem:[%s8 + $0x8] sm:$0xf]
        %v1992 = vld [vmem:[%s8 + $0xc] sm:$0xf]
        %v1993 = vld [vmem:[%s8 + $0x10] sm:$0xf]
        %v1994 = vld [vmem:[%s8 + $0x14] sm:$0xf]
        %v1995 = vld [vmem:[%s8 + $0x18] sm:$0xf]
        %v1996 = vld [vmem:[%s8 + $0x1c] sm:$0xf]
        %v2001 = vunpack.c.l.b16 %v1993
        %v2002 = vunpack.c.l.b16 %v1994
        %v2003 = vunpack.c.l.b16 %v1995
        %v2004 = vunpack.c.l.b16 %v1996
        %v2005 = vpack.c.b16 %v2002, %v2001
        %v2006 = vpack.c.b16 %v2004, %v2003
        %v2010 = vsel %vm836, %v1985, 0
        %v2013 = vsel %vm836, %v1986, 0
        %v2016 = vsel %vm836, %v1987, 0
        %v2019 = vsel %vm836, %v1988, 0
        %2021 = vmatprep.subr.bf16.mxu0 0
        %2022 = vmatpush1.bf16.msra.mxu0 %v2005
        %2023 = vmatprep.subr.bf16.mxu0 0
        %2024 = vmatpush1.bf16.msra.mxu0 %v2006
        %2025 = vmatprep.subr.bf16.mxu0 0
        %2026 = vmatpush1.bf16.msra.mxu0 0
        %2027 = vmatprep.subr.bf16.mxu0 0
        %2028 = vmatpush1.bf16.msra.mxu0 0
        %2029 = vmatprep.subr.bf16.mxu0 0
        %2030 = vmatpush1.bf16.msra.mxu0 0
        %2031 = vmatprep.subr.bf16.mxu0 0
        %2032 = vmatpush1.bf16.msra.mxu0 0
        %2033 = vmatprep.subr.bf16.mxu0 0
        %2034 = vmatpush1.bf16.msra.mxu0 0
        %2035 = vmatprep.subr.bf16.mxu0 0
        %2036 = vmatpush1.bf16.msra.mxu0 0
        %2037 = vmatprep.subr.bf16.mxu0 0
        %2038 = vmatpush1.bf16.msra.mxu0 0
        %2039 = vmatprep.subr.bf16.mxu0 0
        %2040 = vmatpush1.bf16.msra.mxu0 0
        %2041 = vmatprep.subr.bf16.mxu0 0
        %2042 = vmatpush1.bf16.msra.mxu0 0
        %2043 = vmatprep.subr.bf16.mxu0 0
        %2044 = vmatpush1.bf16.msra.mxu0 0
        %2045 = vmatprep.subr.bf16.mxu0 0
        %2046 = vmatpush1.bf16.msra.mxu0 0
        %2047 = vmatprep.subr.bf16.mxu0 0
        %2048 = vmatpush1.bf16.msra.mxu0 0
        %2049 = vmatprep.subr.bf16.mxu0 0
        %2050 = vmatpush1.bf16.msra.mxu0 0
        %2051 = vmatprep.subr.bf16.mxu0 0
        %2052 = vmatpush1.bf16.msra.mxu0 0
        %2053 = vmatprep.mubr.bf16.mxu0 0
        %2054 = vmatmul.mubr.bf16.gmra.mrb[0].mxu0 %v2010
        %v2055 = vpop.f32.mrb[0].mxu0
        %v2056 = vadd.f32 0.0, %v2055
        %v2057 = vpop.f32.mrb[0].mxu0
        %v2058 = vpop.f32.mrb[0].mxu0
        %v2059 = vadd.f32 0.0, %v2058
        %v2060 = vpop.f32.mrb[0].mxu0
        %2061 = vmatprep.mubr.bf16.mxu0 0
        %2062 = vmatmul.mubr.bf16.gmra.mrb[0].mxu0 %v2013
        %v2063 = vpop.f32.mrb[0].mxu0
        %v2064 = vadd.f32 0.0, %v2063
        %v2065 = vpop.f32.mrb[0].mxu0
        %v2066 = vpop.f32.mrb[0].mxu0
        %v2067 = vadd.f32 0.0, %v2066
        %v2068 = vpop.f32.mrb[0].mxu0
        %2069 = vmatprep.mubr.bf16.mxu0 0
        %2070 = vmatmul.mubr.bf16.gmra.mrb[0].mxu0 %v2016
        %v2071 = vpop.f32.mrb[0].mxu0
        %v2072 = vadd.f32 0.0, %v2071
        %v2073 = vpop.f32.mrb[0].mxu0
        %v2074 = vpop.f32.mrb[0].mxu0
        %v2075 = vadd.f32 0.0, %v2074
        %v2076 = vpop.f32.mrb[0].mxu0
        %2077 = vmatprep.mubr.bf16.mxu0 0
        %2078 = vmatmul.mubr.bf16.gmra.mrb[0].mxu0 %v2019
        %v2079 = vpop.f32.mrb[0].mxu0
        %v2080 = vadd.f32 0.0, %v2079
        %v2081 = vpop.f32.mrb[0].mxu0
        %v2082 = vpop.f32.mrb[0].mxu0
        %v2083 = vadd.f32 0.0, %v2082
        %v2084 = vpop.f32.mrb[0].mxu0
        %2085 = vdwg.mxu0
        %v2090 = vunpack.c.l.b16 %v1989
        %v2091 = vunpack.c.l.b16 %v1990
        %v2092 = vunpack.c.l.b16 %v1991
        %v2093 = vunpack.c.l.b16 %v1992
        %v2094 = vpack.c.b16 %v2091, %v2090
        %v2095 = vpack.c.b16 %v2093, %v2092
        %2098 = vmatprep.subr.bf16.mxu0 0
        %2099 = vmatpush1.bf16.msra.mxu0 %v2094
        %2100 = vmatprep.subr.bf16.mxu0 0
        %2101 = vmatpush1.bf16.msra.mxu0 %v2095
        %2102 = vmatprep.subr.bf16.mxu0 0
        %2103 = vmatpush1.bf16.msra.mxu0 0
        %2104 = vmatprep.subr.bf16.mxu0 0
        %2105 = vmatpush1.bf16.msra.mxu0 0
        %2106 = vmatprep.subr.bf16.mxu0 0
        %2107 = vmatpush1.bf16.msra.mxu0 0
        %2108 = vmatprep.subr.bf16.mxu0 0
        %2109 = vmatpush1.bf16.msra.mxu0 0
        %2110 = vmatprep.subr.bf16.mxu0 0
        %2111 = vmatpush1.bf16.msra.mxu0 0
        %2112 = vmatprep.subr.bf16.mxu0 0
        %2113 = vmatpush1.bf16.msra.mxu0 0
        %2114 = vmatprep.subr.bf16.mxu0 0
        %2115 = vmatpush1.bf16.msra.mxu0 0
        %2116 = vmatprep.subr.bf16.mxu0 0
        %2117 = vmatpush1.bf16.msra.mxu0 0
        %2118 = vmatprep.subr.bf16.mxu0 0
        %2119 = vmatpush1.bf16.msra.mxu0 0
        %2120 = vmatprep.subr.bf16.mxu0 0
        %2121 = vmatpush1.bf16.msra.mxu0 0
        %2122 = vmatprep.subr.bf16.mxu0 0
        %2123 = vmatpush1.bf16.msra.mxu0 0
        %2124 = vmatprep.subr.bf16.mxu0 0
        %2125 = vmatpush1.bf16.msra.mxu0 0
        %2126 = vmatprep.subr.bf16.mxu0 0
        %2127 = vmatpush1.bf16.msra.mxu0 0
        %2128 = vmatprep.subr.bf16.mxu0 0
        %2129 = vmatpush1.bf16.msra.mxu0 0
        %2130 = vmatprep.mubr.bf16.mxu0 0
        %2131 = vmatmul.mubr.bf16.gmra.mrb[0].mxu0 %v838
        %v2132 = vpop.f32.mrb[0].mxu0
        %v2133 = vadd.f32 %v2056, %v2132
        %v2134 = vpop.f32.mrb[0].mxu0
        %v2135 = vpop.f32.mrb[0].mxu0
        %v2136 = vadd.f32 %v2059, %v2135
        %v2137 = vpop.f32.mrb[0].mxu0
        %2138 = vmatprep.mubr.bf16.mxu0 0
        %2139 = vmatmul.mubr.bf16.gmra.mrb[0].mxu0 %v841
        %v2140 = vpop.f32.mrb[0].mxu0
        %v2141 = vadd.f32 %v2064, %v2140
        %v2142 = vpop.f32.mrb[0].mxu0
        %v2143 = vpop.f32.mrb[0].mxu0
        %v2144 = vadd.f32 %v2067, %v2143
        %v2145 = vpop.f32.mrb[0].mxu0
        %2146 = vmatprep.mubr.bf16.mxu0 0
        %2147 = vmatmul.mubr.bf16.gmra.mrb[0].mxu0 %v844
        %v2148 = vpop.f32.mrb[0].mxu0
        %v2149 = vadd.f32 %v2072, %v2148
        %v2150 = vpop.f32.mrb[0].mxu0
        %v2151 = vpop.f32.mrb[0].mxu0
        %v2152 = vadd.f32 %v2075, %v2151
        %v2153 = vpop.f32.mrb[0].mxu0
        %2154 = vmatprep.mubr.bf16.mxu0 0
        %2155 = vmatmul.mubr.bf16.gmra.mrb[0].mxu0 %v847
        %v2156 = vpop.f32.mrb[0].mxu0
        %v2157 = vadd.f32 %v2080, %v2156
        %v2158 = vpop.f32.mrb[0].mxu0
        %v2159 = vpop.f32.mrb[0].mxu0
        %v2160 = vadd.f32 %v2083, %v2159
        %v2161 = vpop.f32.mrb[0].mxu0
        %2162 = vdwg.mxu0
        %vm2163 = vcmp.ge.f32.partialorder %v2133, 0.0
        %vm2164 = vcmp.ge.f32.partialorder %v2136, 0.0
        %vm2165 = vcmp.ge.f32.partialorder %v2141, 0.0
        %vm2166 = vcmp.ge.f32.partialorder %v2144, 0.0
        %vm2167 = vcmp.ge.f32.partialorder %v2149, 0.0
        %vm2168 = vcmp.ge.f32.partialorder %v2152, 0.0
        %vm2169 = vcmp.ge.f32.partialorder %v2157, 0.0
        %vm2170 = vcmp.ge.f32.partialorder %v2160, 0.0
        %v2171 = vmul.f32 %v2133, 0.01
        %v2172 = vmul.f32 %v2136, 0.01
        %v2173 = vmul.f32 %v2141, 0.01
        %v2174 = vmul.f32 %v2144, 0.01
        %v2175 = vmul.f32 %v2149, 0.01
        %v2176 = vmul.f32 %v2152, 0.01
        %v2177 = vmul.f32 %v2157, 0.01
        %v2178 = vmul.f32 %v2160, 0.01
        %v2179 = vsel %vm2163, %v2133, %v2171
        %v2180 = vsel %vm2164, %v2136, %v2172
        %v2181 = vsel %vm2165, %v2141, %v2173
        %v2182 = vsel %vm2166, %v2144, %v2174
        %v2183 = vsel %vm2167, %v2149, %v2175
        %v2184 = vsel %vm2168, %v2152, %v2176
        %v2185 = vsel %vm2169, %v2157, %v2177
        %v2186 = vsel %vm2170, %v2160, %v2178
        %v2187 = vpack.c.bf16 %v2180, %v2179
        %v2188 = vpack.c.bf16 %v2182, %v2181
        %v2189 = vpack.c.bf16 %v2184, %v2183
        %v2190 = vpack.c.bf16 %v2186, %v2185
        %v2191 = vld [vmem:[%s9] sm:$0xf]
        %v2192 = vld [vmem:[%s9 + $0x4] sm:$0xf]
        %v2193 = vld [vmem:[%s9 + $0x8] sm:$0xf]
        %v2194 = vld [vmem:[%s9 + $0xc] sm:$0xf]
        %v2195 = vld [vmem:[%s9 + $0x10] sm:$0xf]
        %v2196 = vld [vmem:[%s9 + $0x14] sm:$0xf]
        %v2197 = vld [vmem:[%s9 + $0x18] sm:$0xf]
        %v2198 = vld [vmem:[%s9 + $0x1c] sm:$0xf]
        %v2207 = vunpack.c.l.b16 %v2191
        %v2208 = vunpack.c.l.b16 %v2192
        %v2209 = vunpack.c.l.b16 %v2193
        %v2210 = vunpack.c.l.b16 %v2194
        %v2211 = vunpack.c.l.b16 %v2195
        %v2212 = vunpack.c.l.b16 %v2196
        %v2213 = vunpack.c.l.b16 %v2197
        %v2214 = vunpack.c.l.b16 %v2198
        %v2215 = vpack.c.b16 %v2208, %v2207
        %v2216 = vpack.c.b16 %v2210, %v2209
        %v2217 = vpack.c.b16 %v2212, %v2211
        %v2218 = vpack.c.b16 %v2214, %v2213
        %v2224 = vsel %vm974, %v2187, 0
        %v2227 = vsel %vm974, %v2188, 0
        %v2230 = vsel %vm974, %v2189, 0
        %v2233 = vsel %vm974, %v2190, 0
        %2235 = vmatprep.subr.bf16.mxu0 0
        %2236 = vmatpush1.bf16.msra.mxu0 %v2215
        %2237 = vmatprep.subr.bf16.mxu0 0
        %2238 = vmatpush1.bf16.msra.mxu0 %v2216
        %2239 = vmatprep.subr.bf16.mxu0 0
        %2240 = vmatpush1.bf16.msra.mxu0 %v2217
        %2241 = vmatprep.subr.bf16.mxu0 0
        %2242 = vmatpush1.bf16.msra.mxu0 %v2218
        %2243 = vmatprep.subr.bf16.mxu0 0
        %2244 = vmatpush1.bf16.msra.mxu0 0
        %2245 = vmatprep.subr.bf16.mxu0 0
        %2246 = vmatpush1.bf16.msra.mxu0 0
        %2247 = vmatprep.subr.bf16.mxu0 0
        %2248 = vmatpush1.bf16.msra.mxu0 0
        %2249 = vmatprep.subr.bf16.mxu0 0
        %2250 = vmatpush1.bf16.msra.mxu0 0
        %2251 = vmatprep.subr.bf16.mxu0 0
        %2252 = vmatpush1.bf16.msra.mxu0 0
        %2253 = vmatprep.subr.bf16.mxu0 0
        %2254 = vmatpush1.bf16.msra.mxu0 0
        %2255 = vmatprep.subr.bf16.mxu0 0
        %2256 = vmatpush1.bf16.msra.mxu0 0
        %2257 = vmatprep.subr.bf16.mxu0 0
        %2258 = vmatpush1.bf16.msra.mxu0 0
        %2259 = vmatprep.subr.bf16.mxu0 0
        %2260 = vmatpush1.bf16.msra.mxu0 0
        %2261 = vmatprep.subr.bf16.mxu0 0
        %2262 = vmatpush1.bf16.msra.mxu0 0
        %2263 = vmatprep.subr.bf16.mxu0 0
        %2264 = vmatpush1.bf16.msra.mxu0 0
        %2265 = vmatprep.subr.bf16.mxu0 0
        %2266 = vmatpush1.bf16.msra.mxu0 0
        %2267 = vmatprep.mubr.bf16.mxu0 0
        %2268 = vmatmul.mubr.bf16.gmra.mrb[0].mxu0 %v2224
        %v2269 = vpop.f32.mrb[0].mxu0
        %v2270 = vadd.f32 0.0, %v2269
        %v2271 = vpop.f32.mrb[0].mxu0
        %v2272 = vpop.f32.mrb[0].mxu0
        %v2273 = vadd.f32 0.0, %v2272
        %v2274 = vpop.f32.mrb[0].mxu0
        %2275 = vmatprep.mubr.bf16.mxu0 0
        %2276 = vmatmul.mubr.bf16.gmra.mrb[0].mxu0 %v2227
        %v2277 = vpop.f32.mrb[0].mxu0
        %v2278 = vadd.f32 0.0, %v2277
        %v2279 = vpop.f32.mrb[0].mxu0
        %v2280 = vpop.f32.mrb[0].mxu0
        %v2281 = vadd.f32 0.0, %v2280
        %v2282 = vpop.f32.mrb[0].mxu0
        %2283 = vmatprep.mubr.bf16.mxu0 0
        %2284 = vmatmul.mubr.bf16.gmra.mrb[0].mxu0 %v2230
        %v2285 = vpop.f32.mrb[0].mxu0
        %v2286 = vadd.f32 0.0, %v2285
        %v2287 = vpop.f32.mrb[0].mxu0
        %v2288 = vpop.f32.mrb[0].mxu0
        %v2289 = vadd.f32 0.0, %v2288
        %v2290 = vpop.f32.mrb[0].mxu0
        %2291 = vmatprep.mubr.bf16.mxu0 0
        %2292 = vmatmul.mubr.bf16.gmra.mrb[0].mxu0 %v2233
        %v2293 = vpop.f32.mrb[0].mxu0
        %v2294 = vadd.f32 0.0, %v2293
        %v2295 = vpop.f32.mrb[0].mxu0
        %v2296 = vpop.f32.mrb[0].mxu0
        %v2297 = vadd.f32 0.0, %v2296
        %v2298 = vpop.f32.mrb[0].mxu0
        %2299 = vdwg.mxu0
        %vm2300 = vcmp.ge.f32.partialorder %v2270, 0.0
        %vm2301 = vcmp.ge.f32.partialorder %v2273, 0.0
        %vm2302 = vcmp.ge.f32.partialorder %v2278, 0.0
        %vm2303 = vcmp.ge.f32.partialorder %v2281, 0.0
        %vm2304 = vcmp.ge.f32.partialorder %v2286, 0.0
        %vm2305 = vcmp.ge.f32.partialorder %v2289, 0.0
        %vm2306 = vcmp.ge.f32.partialorder %v2294, 0.0
        %vm2307 = vcmp.ge.f32.partialorder %v2297, 0.0
        %v2308 = vmul.f32 %v2270, 0.01
        %v2309 = vmul.f32 %v2273, 0.01
        %v2310 = vmul.f32 %v2278, 0.01
        %v2311 = vmul.f32 %v2281, 0.01
        %v2312 = vmul.f32 %v2286, 0.01
        %v2313 = vmul.f32 %v2289, 0.01
        %v2314 = vmul.f32 %v2294, 0.01
        %v2315 = vmul.f32 %v2297, 0.01
        %v2316 = vsel %vm2300, %v2270, %v2308
        %v2317 = vsel %vm2301, %v2273, %v2309
        %v2318 = vsel %vm2302, %v2278, %v2310
        %v2319 = vsel %vm2303, %v2281, %v2311
        %v2320 = vsel %vm2304, %v2286, %v2312
        %v2321 = vsel %vm2305, %v2289, %v2313
        %v2322 = vsel %vm2306, %v2294, %v2314
        %v2323 = vsel %vm2307, %v2297, %v2315
        %v2324 = vpack.c.bf16 %v2317, %v2316
        %v2325 = vpack.c.bf16 %v2319, %v2318
        %v2326 = vpack.c.bf16 %v2321, %v2320
        %v2327 = vpack.c.bf16 %v2323, %v2322
        %v2328 = vld [vmem:[%s10] sm:$0xf]
        %v2329 = vld [vmem:[%s10 + $0x4] sm:$0xf]
        %v2330 = vld [vmem:[%s10 + $0x8] sm:$0xf]
        %v2331 = vld [vmem:[%s10 + $0xc] sm:$0xf]
        %v2336 = vunpack.c.l.b16 %v2328
        %v2337 = vunpack.c.l.b16 %v2329
        %v2338 = vunpack.c.l.b16 %v2330
        %v2339 = vunpack.c.l.b16 %v2331
        %v2340 = vpack.c.b16 %v2337, %v2336
        %v2341 = vpack.c.b16 %v2339, %v2338
        %v2345 = vsel %vm836, %v2324, 0
        %v2348 = vsel %vm836, %v2325, 0
        %v2351 = vsel %vm836, %v2326, 0
        %v2354 = vsel %vm836, %v2327, 0
        %2356 = vmatprep.subr.bf16.mxu0 0
        %2357 = vmatpush1.bf16.msra.mxu0 %v2340
        %2358 = vmatprep.subr.bf16.mxu0 0
        %2359 = vmatpush1.bf16.msra.mxu0 %v2341
        %2360 = vmatprep.subr.bf16.mxu0 0
        %2361 = vmatpush1.bf16.msra.mxu0 0
        %2362 = vmatprep.subr.bf16.mxu0 0
        %2363 = vmatpush1.bf16.msra.mxu0 0
        %2364 = vmatprep.subr.bf16.mxu0 0
        %2365 = vmatpush1.bf16.msra.mxu0 0
        %2366 = vmatprep.subr.bf16.mxu0 0
        %2367 = vmatpush1.bf16.msra.mxu0 0
        %2368 = vmatprep.subr.bf16.mxu0 0
        %2369 = vmatpush1.bf16.msra.mxu0 0
        %2370 = vmatprep.subr.bf16.mxu0 0
        %2371 = vmatpush1.bf16.msra.mxu0 0
        %2372 = vmatprep.subr.bf16.mxu0 0
        %2373 = vmatpush1.bf16.msra.mxu0 0
        %2374 = vmatprep.subr.bf16.mxu0 0
        %2375 = vmatpush1.bf16.msra.mxu0 0
        %2376 = vmatprep.subr.bf16.mxu0 0
        %2377 = vmatpush1.bf16.msra.mxu0 0
        %2378 = vmatprep.subr.bf16.mxu0 0
        %2379 = vmatpush1.bf16.msra.mxu0 0
        %2380 = vmatprep.subr.bf16.mxu0 0
        %2381 = vmatpush1.bf16.msra.mxu0 0
        %2382 = vmatprep.subr.bf16.mxu0 0
        %2383 = vmatpush1.bf16.msra.mxu0 0
        %2384 = vmatprep.subr.bf16.mxu0 0
        %2385 = vmatpush1.bf16.msra.mxu0 0
        %2386 = vmatprep.subr.bf16.mxu0 0
        %2387 = vmatpush1.bf16.msra.mxu0 0
        %2388 = vmatprep.mubr.bf16.mxu0 0
        %2389 = vmatmul.mubr.bf16.gmra.mrb[0].mxu0 %v2345
        %v2390 = vpop.f32.mrb[0].mxu0
        %v2391 = vadd.f32 0.0, %v2390
        %v2392 = vpop.f32.mrb[0].mxu0
        %v2393 = vpop.f32.mrb[0].mxu0
        %v2394 = vadd.f32 0.0, %v2393
        %v2395 = vpop.f32.mrb[0].mxu0
        %2396 = vmatprep.mubr.bf16.mxu0 0
        %2397 = vmatmul.mubr.bf16.gmra.mrb[0].mxu0 %v2348
        %v2398 = vpop.f32.mrb[0].mxu0
        %v2399 = vadd.f32 0.0, %v2398
        %v2400 = vpop.f32.mrb[0].mxu0
        %v2401 = vpop.f32.mrb[0].mxu0
        %v2402 = vadd.f32 0.0, %v2401
        %v2403 = vpop.f32.mrb[0].mxu0
        %2404 = vmatprep.mubr.bf16.mxu0 0
        %2405 = vmatmul.mubr.bf16.gmra.mrb[0].mxu0 %v2351
        %v2406 = vpop.f32.mrb[0].mxu0
        %v2407 = vadd.f32 0.0, %v2406
        %v2408 = vpop.f32.mrb[0].mxu0
        %v2409 = vpop.f32.mrb[0].mxu0
        %v2410 = vadd.f32 0.0, %v2409
        %v2411 = vpop.f32.mrb[0].mxu0
        %2412 = vmatprep.mubr.bf16.mxu0 0
        %2413 = vmatmul.mubr.bf16.gmra.mrb[0].mxu0 %v2354
        %v2414 = vpop.f32.mrb[0].mxu0
        %v2415 = vadd.f32 0.0, %v2414
        %v2416 = vpop.f32.mrb[0].mxu0
        %v2417 = vpop.f32.mrb[0].mxu0
        %v2418 = vadd.f32 0.0, %v2417
        %v2419 = vpop.f32.mrb[0].mxu0
        %2420 = vdwg.mxu0
        %vm2421 = vcmp.ge.f32.partialorder %v2391, 0.0
        %vm2422 = vcmp.ge.f32.partialorder %v2394, 0.0
        %vm2423 = vcmp.ge.f32.partialorder %v2399, 0.0
        %vm2424 = vcmp.ge.f32.partialorder %v2402, 0.0
        %vm2425 = vcmp.ge.f32.partialorder %v2407, 0.0
        %vm2426 = vcmp.ge.f32.partialorder %v2410, 0.0
        %vm2427 = vcmp.ge.f32.partialorder %v2415, 0.0
        %vm2428 = vcmp.ge.f32.partialorder %v2418, 0.0
        %v2429 = vmul.f32 %v2391, 0.01
        %v2430 = vmul.f32 %v2394, 0.01
        %v2431 = vmul.f32 %v2399, 0.01
        %v2432 = vmul.f32 %v2402, 0.01
        %v2433 = vmul.f32 %v2407, 0.01
        %v2434 = vmul.f32 %v2410, 0.01
        %v2435 = vmul.f32 %v2415, 0.01
        %v2436 = vmul.f32 %v2418, 0.01
        %v2437 = vsel %vm2421, %v2391, %v2429
        %v2438 = vsel %vm2422, %v2394, %v2430
        %v2439 = vsel %vm2423, %v2399, %v2431
        %v2440 = vsel %vm2424, %v2402, %v2432
        %v2441 = vsel %vm2425, %v2407, %v2433
        %v2442 = vsel %vm2426, %v2410, %v2434
        %v2443 = vsel %vm2427, %v2415, %v2435
        %v2444 = vsel %vm2428, %v2418, %v2436
        %v2445 = vld [vmem:[%s11] sm:$0x1]
        %v2447 = vlaneseq
        %v2448 = vshrl.u32 %v2447, 7
        %v2449 = vsub.s32 0, %v2448
        %v2450 = vrot.slane %v2445, %v2449
        %v2452 = vmul.f32 %v2437, %v2450
        %v2453 = vmul.f32 %v2438, %v2450
        %v2454 = vmul.f32 %v2439, %v2450
        %v2455 = vmul.f32 %v2440, %v2450
        %v2456 = vmul.f32 %v2441, %v2450
        %v2457 = vmul.f32 %v2442, %v2450
        %v2458 = vmul.f32 %v2443, %v2450
        %v2459 = vmul.f32 %v2444, %v2450
        %v2460 = vsel %vm836, %v2452, 0.0
        %2461 = vadd.xlane.f32.xlu0 %v2460
        %v2462 = vpop.xlane.xlu0 %2461
        %v2463 = vsel %vm836, %v2453, 0.0
        %2464 = vadd.xlane.f32.xlu0 %v2463
        %v2465 = vpop.xlane.xlu0 %2464
        %v2466 = vsel %vm836, %v2454, 0.0
        %2467 = vadd.xlane.f32.xlu0 %v2466
        %v2468 = vpop.xlane.xlu0 %2467
        %v2469 = vsel %vm836, %v2455, 0.0
        %2470 = vadd.xlane.f32.xlu0 %v2469
        %v2471 = vpop.xlane.xlu0 %2470
        %v2472 = vsel %vm836, %v2456, 0.0
        %2473 = vadd.xlane.f32.xlu0 %v2472
        %v2474 = vpop.xlane.xlu0 %2473
        %v2475 = vsel %vm836, %v2457, 0.0
        %2476 = vadd.xlane.f32.xlu0 %v2475
        %v2477 = vpop.xlane.xlu0 %2476
        %v2478 = vsel %vm836, %v2458, 0.0
        %2479 = vadd.xlane.f32.xlu0 %v2478
        %v2480 = vpop.xlane.xlu0 %2479
        %v2481 = vsel %vm836, %v2459, 0.0
        %2482 = vadd.xlane.f32.xlu0 %v2481
        %v2483 = vpop.xlane.xlu0 %2482
        %v2484 = vld [vmem:[#allocation3] sm:$0x1]
        %v2486 = vlaneseq
        %v2487 = vshrl.u32 %v2486, 7
        %v2488 = vsub.s32 0, %v2487
        %v2489 = vrot.slane %v2484, %v2488
        %v2491 = vadd.f32 %v2462, %v2489
        %v2492 = vadd.f32 %v2465, %v2489
        %v2493 = vadd.f32 %v2468, %v2489
        %v2494 = vadd.f32 %v2471, %v2489
        %v2495 = vadd.f32 %v2474, %v2489
        %v2496 = vadd.f32 %v2477, %v2489
        %v2497 = vadd.f32 %v2480, %v2489
        %v2498 = vadd.f32 %v2483, %v2489
        %v2499 = vsub.f32 %v2491, %v1258
        %v2500 = vsub.f32 %v2492, %v1265
        %v2501 = vsub.f32 %v2493, %v1272
        %v2502 = vsub.f32 %v2494, %v1279
        %v2503 = vsub.f32 %v2495, %v1286
        %v2504 = vsub.f32 %v2496, %v1293
        %v2505 = vsub.f32 %v2497, %v1300
        %v2506 = vsub.f32 %v2498, %v1307
        %2515 = vset.pattern.permute.xlu0 0
        %2516 = vperm.xlu0 %2515, %v2499
        %v2517 = vpop.permute.xlu0 %2516
        %2518 = vset.pattern.permute.xlu0 0
        %2519 = vperm.xlu0 %2518, %v2500
        %v2520 = vpop.permute.xlu0 %2519
        %2521 = vset.pattern.permute.xlu0 0
        %2522 = vperm.xlu0 %2521, %v2501
        %v2523 = vpop.permute.xlu0 %2522
        %2524 = vset.pattern.permute.xlu0 0
        %2525 = vperm.xlu0 %2524, %v2502
        %v2526 = vpop.permute.xlu0 %2525
        %2527 = vset.pattern.permute.xlu0 0
        %2528 = vperm.xlu0 %2527, %v2503
        %v2529 = vpop.permute.xlu0 %2528
        %2530 = vset.pattern.permute.xlu0 0
        %2531 = vperm.xlu0 %2530, %v2504
        %v2532 = vpop.permute.xlu0 %2531
        %2533 = vset.pattern.permute.xlu0 0
        %2534 = vperm.xlu0 %2533, %v2505
        %v2535 = vpop.permute.xlu0 %2534
        %2536 = vset.pattern.permute.xlu0 0
        %2537 = vperm.xlu0 %2536, %v2506
        %v2538 = vpop.permute.xlu0 %2537
        %v2539 = vlaneseq
        %v2540 = vshrl.u32 %v2539, 7
        %v2541 = vsub.s32 %v682, %v2540
        %v2542 = vrot.slane %v2517, %v2541
        %v2543 = vlaneseq
        %v2544 = vshrl.u32 %v2543, 7
        %v2545 = vsub.s32 %v682, %v2544
        %v2546 = vrot.slane %v2520, %v2545
        %v2547 = vlaneseq
        %v2548 = vshrl.u32 %v2547, 7
        %v2549 = vsub.s32 %v682, %v2548
        %v2550 = vrot.slane %v2523, %v2549
        %v2551 = vlaneseq
        %v2552 = vshrl.u32 %v2551, 7
        %v2553 = vsub.s32 %v682, %v2552
        %v2554 = vrot.slane %v2526, %v2553
        %v2555 = vlaneseq
        %v2556 = vshrl.u32 %v2555, 7
        %v2557 = vsub.s32 %v682, %v2556
        %v2558 = vrot.slane %v2529, %v2557
        %v2559 = vlaneseq
        %v2560 = vshrl.u32 %v2559, 7
        %v2561 = vsub.s32 %v682, %v2560
        %v2562 = vrot.slane %v2532, %v2561
        %v2563 = vlaneseq
        %v2564 = vshrl.u32 %v2563, 7
        %v2565 = vsub.s32 %v682, %v2564
        %v2566 = vrot.slane %v2535, %v2565
        %v2567 = vlaneseq
        %v2568 = vshrl.u32 %v2567, 7
        %v2569 = vsub.s32 %v682, %v2568
        %v2570 = vrot.slane %v2538, %v2569
        %v2571 = vsel %vm1388, %v2546, %v2542
        %v2572 = vsel %vm1390, %v2550, %v2571
        %v2573 = vsel %vm1392, %v2554, %v2572
        %v2574 = vsel %vm1394, %v2558, %v2573
        %v2575 = vsel %vm1396, %v2562, %v2574
        %v2576 = vsel %vm1398, %v2566, %v2575
        %v2577 = vsel %vm1400, %v2570, %v2576
        %v2579 = vsel %vm1403, %v2577, -inf
        %2580 = vmax.xlane.f32.xlu0 %v2579
        %v2581 = vpop.xlane.xlu0 %2580
        %v2583 = vlaneseq
        %v2584 = vshrl.u32 %v2583, 7
        %v2585 = vsub.s32 0, %v2584
        %v2586 = vrot.slane %v2581, %v2585
        %v2587 = vlaneseq
        %v2588 = vshrl.u32 %v2587, 7
        %v2589 = vsub.s32 1, %v2588
        %v2590 = vrot.slane %v2581, %v2589
        %v2591 = vlaneseq
        %v2592 = vshrl.u32 %v2591, 7
        %v2593 = vsub.s32 2, %v2592
        %v2594 = vrot.slane %v2581, %v2593
        %v2595 = vlaneseq
        %v2596 = vshrl.u32 %v2595, 7
        %v2597 = vsub.s32 3, %v2596
        %v2598 = vrot.slane %v2581, %v2597
        %v2599 = vlaneseq
        %v2600 = vshrl.u32 %v2599, 7
        %v2601 = vsub.s32 4, %v2600
        %v2602 = vrot.slane %v2581, %v2601
        %v2603 = vlaneseq
        %v2604 = vshrl.u32 %v2603, 7
        %v2605 = vsub.s32 5, %v2604
        %v2606 = vrot.slane %v2581, %v2605
        %v2607 = vlaneseq
        %v2608 = vshrl.u32 %v2607, 7
        %v2609 = vsub.s32 6, %v2608
        %v2610 = vrot.slane %v2581, %v2609
        %v2611 = vlaneseq
        %v2612 = vshrl.u32 %v2611, 7
        %v2613 = vsub.s32 7, %v2612
        %v2614 = vrot.slane %v2581, %v2613
        %v2623 = vsub.f32 %v2499, %v2586
        %v2624 = vsub.f32 %v2500, %v2590
        %v2625 = vsub.f32 %v2501, %v2594
        %v2626 = vsub.f32 %v2502, %v2598
        %v2627 = vsub.f32 %v2503, %v2602
        %v2628 = vsub.f32 %v2504, %v2606
        %v2629 = vsub.f32 %v2505, %v2610
        %v2630 = vsub.f32 %v2506, %v2614
        %v2631 = vmul.f32 %v2623, 1.442695
        %v2632 = vpow.pop %v2631
        %v2633 = vmul.f32 %v2624, 1.442695
        %v2634 = vpow.pop %v2633
        %v2635 = vmul.f32 %v2625, 1.442695
        %v2636 = vpow.pop %v2635
        %v2637 = vmul.f32 %v2626, 1.442695
        %v2638 = vpow.pop %v2637
        %v2639 = vmul.f32 %v2627, 1.442695
        %v2640 = vpow.pop %v2639
        %v2641 = vmul.f32 %v2628, 1.442695
        %v2642 = vpow.pop %v2641
        %v2643 = vmul.f32 %v2629, 1.442695
        %v2644 = vpow.pop %v2643
        %v2645 = vmul.f32 %v2630, 1.442695
        %v2646 = vpow.pop %v2645
        %2655 = vset.pattern.permute.xlu0 0
        %2656 = vperm.xlu0 %2655, %v2632
        %v2657 = vpop.permute.xlu0 %2656
        %2658 = vset.pattern.permute.xlu0 0
        %2659 = vperm.xlu0 %2658, %v2634
        %v2660 = vpop.permute.xlu0 %2659
        %2661 = vset.pattern.permute.xlu0 0
        %2662 = vperm.xlu0 %2661, %v2636
        %v2663 = vpop.permute.xlu0 %2662
        %2664 = vset.pattern.permute.xlu0 0
        %2665 = vperm.xlu0 %2664, %v2638
        %v2666 = vpop.permute.xlu0 %2665
        %2667 = vset.pattern.permute.xlu0 0
        %2668 = vperm.xlu0 %2667, %v2640
        %v2669 = vpop.permute.xlu0 %2668
        %2670 = vset.pattern.permute.xlu0 0
        %2671 = vperm.xlu0 %2670, %v2642
        %v2672 = vpop.permute.xlu0 %2671
        %2673 = vset.pattern.permute.xlu0 0
        %2674 = vperm.xlu0 %2673, %v2644
        %v2675 = vpop.permute.xlu0 %2674
        %2676 = vset.pattern.permute.xlu0 0
        %2677 = vperm.xlu0 %2676, %v2646
        %v2678 = vpop.permute.xlu0 %2677
        %v2679 = vlaneseq
        %v2680 = vshrl.u32 %v2679, 7
        %v2681 = vsub.s32 %v682, %v2680
        %v2682 = vrot.slane %v2657, %v2681
        %v2683 = vlaneseq
        %v2684 = vshrl.u32 %v2683, 7
        %v2685 = vsub.s32 %v682, %v2684
        %v2686 = vrot.slane %v2660, %v2685
        %v2687 = vlaneseq
        %v2688 = vshrl.u32 %v2687, 7
        %v2689 = vsub.s32 %v682, %v2688
        %v2690 = vrot.slane %v2663, %v2689
        %v2691 = vlaneseq
        %v2692 = vshrl.u32 %v2691, 7
        %v2693 = vsub.s32 %v682, %v2692
        %v2694 = vrot.slane %v2666, %v2693
        %v2695 = vlaneseq
        %v2696 = vshrl.u32 %v2695, 7
        %v2697 = vsub.s32 %v682, %v2696
        %v2698 = vrot.slane %v2669, %v2697
        %v2699 = vlaneseq
        %v2700 = vshrl.u32 %v2699, 7
        %v2701 = vsub.s32 %v682, %v2700
        %v2702 = vrot.slane %v2672, %v2701
        %v2703 = vlaneseq
        %v2704 = vshrl.u32 %v2703, 7
        %v2705 = vsub.s32 %v682, %v2704
        %v2706 = vrot.slane %v2675, %v2705
        %v2707 = vlaneseq
        %v2708 = vshrl.u32 %v2707, 7
        %v2709 = vsub.s32 %v682, %v2708
        %v2710 = vrot.slane %v2678, %v2709
        %v2711 = vsel %vm1388, %v2686, %v2682
        %v2712 = vsel %vm1390, %v2690, %v2711
        %v2713 = vsel %vm1392, %v2694, %v2712
        %v2714 = vsel %vm1394, %v2698, %v2713
        %v2715 = vsel %vm1396, %v2702, %v2714
        %v2716 = vsel %vm1398, %v2706, %v2715
        %v2717 = vsel %vm1400, %v2710, %v2716
        %v2719 = vsel %vm1403, %v2717, 0.0
        %2720 = vadd.xlane.f32.xlu0 %v2719
        %v2721 = vpop.xlane.xlu0 %2720
        %v2723 = vlaneseq
        %v2724 = vshrl.u32 %v2723, 7
        %v2725 = vsub.s32 0, %v2724
        %v2726 = vrot.slane %v2721, %v2725
        %v2727 = vlaneseq
        %v2728 = vshrl.u32 %v2727, 7
        %v2729 = vsub.s32 1, %v2728
        %v2730 = vrot.slane %v2721, %v2729
        %v2731 = vlaneseq
        %v2732 = vshrl.u32 %v2731, 7
        %v2733 = vsub.s32 2, %v2732
        %v2734 = vrot.slane %v2721, %v2733
        %v2735 = vlaneseq
        %v2736 = vshrl.u32 %v2735, 7
        %v2737 = vsub.s32 3, %v2736
        %v2738 = vrot.slane %v2721, %v2737
        %v2739 = vlaneseq
        %v2740 = vshrl.u32 %v2739, 7
        %v2741 = vsub.s32 4, %v2740
        %v2742 = vrot.slane %v2721, %v2741
        %v2743 = vlaneseq
        %v2744 = vshrl.u32 %v2743, 7
        %v2745 = vsub.s32 5, %v2744
        %v2746 = vrot.slane %v2721, %v2745
        %v2747 = vlaneseq
        %v2748 = vshrl.u32 %v2747, 7
        %v2749 = vsub.s32 6, %v2748
        %v2750 = vrot.slane %v2721, %v2749
        %v2751 = vlaneseq
        %v2752 = vshrl.u32 %v2751, 7
        %v2753 = vsub.s32 7, %v2752
        %v2754 = vrot.slane %v2721, %v2753
        %v2763 = vrcp.pop %v2726
        %v2764 = vmul.f32 %v2632, %v2763
        %v2765 = vrcp.pop %v2730
        %v2766 = vmul.f32 %v2634, %v2765
        %v2767 = vrcp.pop %v2734
        %v2768 = vmul.f32 %v2636, %v2767
        %v2769 = vrcp.pop %v2738
        %v2770 = vmul.f32 %v2638, %v2769
        %v2771 = vrcp.pop %v2742
        %v2772 = vmul.f32 %v2640, %v2771
        %v2773 = vrcp.pop %v2746
        %v2774 = vmul.f32 %v2642, %v2773
        %v2775 = vrcp.pop %v2750
        %v2776 = vmul.f32 %v2644, %v2775
        %v2777 = vrcp.pop %v2754
        %v2778 = vmul.f32 %v2646, %v2777
        %2787 = vset.pattern.permute.xlu0 0
        %2788 = vperm.xlu0 %2787, %v2764
        %v2789 = vpop.permute.xlu0 %2788
        %2790 = vset.pattern.permute.xlu0 0
        %2791 = vperm.xlu0 %2790, %v2766
        %v2792 = vpop.permute.xlu0 %2791
        %2793 = vset.pattern.permute.xlu0 0
        %2794 = vperm.xlu0 %2793, %v2768
        %v2795 = vpop.permute.xlu0 %2794
        %2796 = vset.pattern.permute.xlu0 0
        %2797 = vperm.xlu0 %2796, %v2770
        %v2798 = vpop.permute.xlu0 %2797
        %2799 = vset.pattern.permute.xlu0 0
        %2800 = vperm.xlu0 %2799, %v2772
        %v2801 = vpop.permute.xlu0 %2800
        %2802 = vset.pattern.permute.xlu0 0
        %2803 = vperm.xlu0 %2802, %v2774
        %v2804 = vpop.permute.xlu0 %2803
        %2805 = vset.pattern.permute.xlu0 0
        %2806 = vperm.xlu0 %2805, %v2776
        %v2807 = vpop.permute.xlu0 %2806
        %2808 = vset.pattern.permute.xlu0 0
        %2809 = vperm.xlu0 %2808, %v2778
        %v2810 = vpop.permute.xlu0 %2809
        %v2811 = vlaneseq
        %v2812 = vshrl.u32 %v2811, 7
        %v2813 = vsub.s32 %v682, %v2812
        %v2814 = vrot.slane %v2789, %v2813
        %v2815 = vlaneseq
        %v2816 = vshrl.u32 %v2815, 7
        %v2817 = vsub.s32 %v682, %v2816
        %v2818 = vrot.slane %v2792, %v2817
        %v2819 = vlaneseq
        %v2820 = vshrl.u32 %v2819, 7
        %v2821 = vsub.s32 %v682, %v2820
        %v2822 = vrot.slane %v2795, %v2821
        %v2823 = vlaneseq
        %v2824 = vshrl.u32 %v2823, 7
        %v2825 = vsub.s32 %v682, %v2824
        %v2826 = vrot.slane %v2798, %v2825
        %v2827 = vlaneseq
        %v2828 = vshrl.u32 %v2827, 7
        %v2829 = vsub.s32 %v682, %v2828
        %v2830 = vrot.slane %v2801, %v2829
        %v2831 = vlaneseq
        %v2832 = vshrl.u32 %v2831, 7
        %v2833 = vsub.s32 %v682, %v2832
        %v2834 = vrot.slane %v2804, %v2833
        %v2835 = vlaneseq
        %v2836 = vshrl.u32 %v2835, 7
        %v2837 = vsub.s32 %v682, %v2836
        %v2838 = vrot.slane %v2807, %v2837
        %v2839 = vlaneseq
        %v2840 = vshrl.u32 %v2839, 7
        %v2841 = vsub.s32 %v682, %v2840
        %v2842 = vrot.slane %v2810, %v2841
        %v2843 = vsel %vm1388, %v2818, %v2814
        %v2844 = vsel %vm1390, %v2822, %v2843
        %v2845 = vsel %vm1392, %v2826, %v2844
        %v2846 = vsel %vm1394, %v2830, %v2845
        %v2847 = vsel %vm1396, %v2834, %v2846
        %v2848 = vsel %vm1398, %v2838, %v2847
        %v2849 = vsel %vm1400, %v2842, %v2848
        %s2851 = scalar_lea.vmem %s655, 8 [#allocation4]
        %2852 = vst.msk [vmem:[%s2851] sm:$0xff] %vm1403, %v2849
        %v2853 = vsel %vm683, 0.0, %v2849
        %v2854 = vand.u32 2147483647, %v2853
        %v2855 = vsel %vm1403, %v2854, 0.0
        %2856 = vadd.xlane.f32.xlu0 %v2855
        %v2857 = vpop.xlane.xlu0 %2856
        %v2858 = vmax.f32 %v2857, 1e-12
        %v2859 = vrcp.pop %v2858
        %v2860 = vmul.f32 %v2853, %v2859
        %v2861 = vpack.c.bf16 %v2860, %v2860
        %v2862 = vld [vmem:[%s13] sm:$0xf]
        %v2863 = vld [vmem:[%s13 + $0x4] sm:$0xf]
        %v2864 = vld [vmem:[%s13 + $0x8] sm:$0xf]
        %v2865 = vld [vmem:[%s13 + $0xc] sm:$0xf]
        %v2866 = vld [vmem:[%s13 + $0x10] sm:$0xf]
        %v2867 = vld [vmem:[%s13 + $0x14] sm:$0xf]
        %v2868 = vld [vmem:[%s13 + $0x18] sm:$0xf]
        %v2869 = vld [vmem:[%s13 + $0x1c] sm:$0xf]
        %v2870 = vld [vmem:[%s14] sm:$0xf]
        %v2871 = vld [vmem:[%s14 + $0x4] sm:$0xf]
        %v2872 = vld [vmem:[%s14 + $0x8] sm:$0xf]
        %v2873 = vld [vmem:[%s14 + $0xc] sm:$0xf]
        %v2874 = vld [vmem:[%s14 + $0x10] sm:$0xf]
        %v2875 = vld [vmem:[%s14 + $0x14] sm:$0xf]
        %v2876 = vld [vmem:[%s14 + $0x18] sm:$0xf]
        %v2877 = vld [vmem:[%s14 + $0x1c] sm:$0xf]
        %v2879 = vsel %vm1403, %v2861, 0
        %2881 = vmatprep.subr.bf16.mxu0 0
        %2882 = vmatpush1.bf16.msra.mxu0 %v1699
        %2883 = vmatprep.subr.bf16.mxu0 0
        %2884 = vmatpush1.bf16.msra.mxu0 0
        %2885 = vmatprep.subr.bf16.mxu0 0
        %2886 = vmatpush1.bf16.msra.mxu0 0
        %2887 = vmatprep.subr.bf16.mxu0 0
        %2888 = vmatpush1.bf16.msra.mxu0 0
        %2889 = vmatprep.subr.bf16.mxu0 0
        %2890 = vmatpush1.bf16.msra.mxu0 0
        %2891 = vmatprep.subr.bf16.mxu0 0
        %2892 = vmatpush1.bf16.msra.mxu0 0
        %2893 = vmatprep.subr.bf16.mxu0 0
        %2894 = vmatpush1.bf16.msra.mxu0 0
        %2895 = vmatprep.subr.bf16.mxu0 0
        %2896 = vmatpush1.bf16.msra.mxu0 0
        %2897 = vmatprep.subr.bf16.mxu0 0
        %2898 = vmatpush1.bf16.msra.mxu0 0
        %2899 = vmatprep.subr.bf16.mxu0 0
        %2900 = vmatpush1.bf16.msra.mxu0 0
        %2901 = vmatprep.subr.bf16.mxu0 0
        %2902 = vmatpush1.bf16.msra.mxu0 0
        %2903 = vmatprep.subr.bf16.mxu0 0
        %2904 = vmatpush1.bf16.msra.mxu0 0
        %2905 = vmatprep.subr.bf16.mxu0 0
        %2906 = vmatpush1.bf16.msra.mxu0 0
        %2907 = vmatprep.subr.bf16.mxu0 0
        %2908 = vmatpush1.bf16.msra.mxu0 0
        %2909 = vmatprep.subr.bf16.mxu0 0
        %2910 = vmatpush1.bf16.msra.mxu0 0
        %2911 = vmatprep.subr.bf16.mxu0 0
        %2912 = vmatpush1.bf16.msra.mxu0 0
        %2913 = vmatprep.mubr.bf16.mxu0 0
        %2914 = vmatmul.mubr.bf16.gmra.mrb[0].mxu0 %v2879
        %v2915 = vpop.f32.mrb[0].mxu0
        %v2916 = vadd.f32 0.0, %v2915
        %v2917 = vpop.f32.mrb[0].mxu0
        %v2918 = vpop.f32.mrb[0].mxu0
        %v2919 = vpop.f32.mrb[0].mxu0
        %2920 = vdwg.mxu0
        %v2921 = vpack.c.bf16 %v2916, %v2916
        %v2926 = vunpack.c.l.b16 %v2870
        %v2927 = vunpack.c.l.b16 %v2871
        %v2928 = vunpack.c.l.b16 %v2872
        %v2929 = vunpack.c.l.b16 %v2873
        %v2930 = vpack.c.b16 %v2927, %v2926
        %v2931 = vpack.c.b16 %v2929, %v2928
        %v2935 = vsel %vm836, %v2921, 0
        %2937 = vmatprep.subr.bf16.mxu0 0
        %2938 = vmatpush1.bf16.msra.mxu0 %v2930
        %2939 = vmatprep.subr.bf16.mxu0 0
        %2940 = vmatpush1.bf16.msra.mxu0 %v2931
        %2941 = vmatprep.subr.bf16.mxu0 0
        %2942 = vmatpush1.bf16.msra.mxu0 0
        %2943 = vmatprep.subr.bf16.mxu0 0
        %2944 = vmatpush1.bf16.msra.mxu0 0
        %2945 = vmatprep.subr.bf16.mxu0 0
        %2946 = vmatpush1.bf16.msra.mxu0 0
        %2947 = vmatprep.subr.bf16.mxu0 0
        %2948 = vmatpush1.bf16.msra.mxu0 0
        %2949 = vmatprep.subr.bf16.mxu0 0
        %2950 = vmatpush1.bf16.msra.mxu0 0
        %2951 = vmatprep.subr.bf16.mxu0 0
        %2952 = vmatpush1.bf16.msra.mxu0 0
        %2953 = vmatprep.subr.bf16.mxu0 0
        %2954 = vmatpush1.bf16.msra.mxu0 0
        %2955 = vmatprep.subr.bf16.mxu0 0
        %2956 = vmatpush1.bf16.msra.mxu0 0
        %2957 = vmatprep.subr.bf16.mxu0 0
        %2958 = vmatpush1.bf16.msra.mxu0 0
        %2959 = vmatprep.subr.bf16.mxu0 0
        %2960 = vmatpush1.bf16.msra.mxu0 0
        %2961 = vmatprep.subr.bf16.mxu0 0
        %2962 = vmatpush1.bf16.msra.mxu0 0
        %2963 = vmatprep.subr.bf16.mxu0 0
        %2964 = vmatpush1.bf16.msra.mxu0 0
        %2965 = vmatprep.subr.bf16.mxu0 0
        %2966 = vmatpush1.bf16.msra.mxu0 0
        %2967 = vmatprep.subr.bf16.mxu0 0
        %2968 = vmatpush1.bf16.msra.mxu0 0
        %2969 = vmatprep.mubr.bf16.mxu0 0
        %2970 = vmatmul.mubr.bf16.gmra.mrb[0].mxu0 %v2935
        %v2971 = vpop.f32.mrb[0].mxu0
        %v2972 = vadd.f32 0.0, %v2971
        %v2973 = vpop.f32.mrb[0].mxu0
        %v2974 = vpop.f32.mrb[0].mxu0
        %v2975 = vpop.f32.mrb[0].mxu0
        %2976 = vdwg.mxu0
        %v2981 = vunpack.c.l.b16 %v2862
        %v2982 = vunpack.c.l.b16 %v2863
        %v2983 = vunpack.c.l.b16 %v2864
        %v2984 = vunpack.c.l.b16 %v2865
        %v2985 = vpack.c.b16 %v2982, %v2981
        %v2986 = vpack.c.b16 %v2984, %v2983
        %2989 = vmatprep.subr.bf16.mxu0 0
        %2990 = vmatpush1.bf16.msra.mxu0 %v2985
        %2991 = vmatprep.subr.bf16.mxu0 0
        %2992 = vmatpush1.bf16.msra.mxu0 %v2986
        %2993 = vmatprep.subr.bf16.mxu0 0
        %2994 = vmatpush1.bf16.msra.mxu0 0
        %2995 = vmatprep.subr.bf16.mxu0 0
        %2996 = vmatpush1.bf16.msra.mxu0 0
        %2997 = vmatprep.subr.bf16.mxu0 0
        %2998 = vmatpush1.bf16.msra.mxu0 0
        %2999 = vmatprep.subr.bf16.mxu0 0
        %3000 = vmatpush1.bf16.msra.mxu0 0
        %3001 = vmatprep.subr.bf16.mxu0 0
        %3002 = vmatpush1.bf16.msra.mxu0 0
        %3003 = vmatprep.subr.bf16.mxu0 0
        %3004 = vmatpush1.bf16.msra.mxu0 0
        %3005 = vmatprep.subr.bf16.mxu0 0
        %3006 = vmatpush1.bf16.msra.mxu0 0
        %3007 = vmatprep.subr.bf16.mxu0 0
        %3008 = vmatpush1.bf16.msra.mxu0 0
        %3009 = vmatprep.subr.bf16.mxu0 0
        %3010 = vmatpush1.bf16.msra.mxu0 0
        %3011 = vmatprep.subr.bf16.mxu0 0
        %3012 = vmatpush1.bf16.msra.mxu0 0
        %3013 = vmatprep.subr.bf16.mxu0 0
        %3014 = vmatpush1.bf16.msra.mxu0 0
        %3015 = vmatprep.subr.bf16.mxu0 0
        %3016 = vmatpush1.bf16.msra.mxu0 0
        %3017 = vmatprep.subr.bf16.mxu0 0
        %3018 = vmatpush1.bf16.msra.mxu0 0
        %3019 = vmatprep.subr.bf16.mxu0 0
        %3020 = vmatpush1.bf16.msra.mxu0 0
        %3021 = vmatprep.mubr.bf16.mxu0 0
        %3022 = vmatmul.mubr.bf16.gmra.mrb[0].mxu0 %v1809
        %v3023 = vpop.f32.mrb[0].mxu0
        %v3024 = vadd.f32 %v2972, %v3023
        %v3025 = vpop.f32.mrb[0].mxu0
        %v3026 = vpop.f32.mrb[0].mxu0
        %v3027 = vpop.f32.mrb[0].mxu0
        %3028 = vdwg.mxu0
        %v3030 = vsel %vm1697, %v1854, 0
        %3032 = vmatprep.subr.bf16.mxu0 0
        %3033 = vmatpush1.bf16.msra.mxu0 %v3030
        %3034 = vmatprep.subr.bf16.mxu0 0
        %3035 = vmatpush1.bf16.msra.mxu0 0
        %3036 = vmatprep.subr.bf16.mxu0 0
        %3037 = vmatpush1.bf16.msra.mxu0 0
        %3038 = vmatprep.subr.bf16.mxu0 0
        %3039 = vmatpush1.bf16.msra.mxu0 0
        %3040 = vmatprep.subr.bf16.mxu0 0
        %3041 = vmatpush1.bf16.msra.mxu0 0
        %3042 = vmatprep.subr.bf16.mxu0 0
        %3043 = vmatpush1.bf16.msra.mxu0 0
        %3044 = vmatprep.subr.bf16.mxu0 0
        %3045 = vmatpush1.bf16.msra.mxu0 0
        %3046 = vmatprep.subr.bf16.mxu0 0
        %3047 = vmatpush1.bf16.msra.mxu0 0
        %3048 = vmatprep.subr.bf16.mxu0 0
        %3049 = vmatpush1.bf16.msra.mxu0 0
        %3050 = vmatprep.subr.bf16.mxu0 0
        %3051 = vmatpush1.bf16.msra.mxu0 0
        %3052 = vmatprep.subr.bf16.mxu0 0
        %3053 = vmatpush1.bf16.msra.mxu0 0
        %3054 = vmatprep.subr.bf16.mxu0 0
        %3055 = vmatpush1.bf16.msra.mxu0 0
        %3056 = vmatprep.subr.bf16.mxu0 0
        %3057 = vmatpush1.bf16.msra.mxu0 0
        %3058 = vmatprep.subr.bf16.mxu0 0
        %3059 = vmatpush1.bf16.msra.mxu0 0
        %3060 = vmatprep.subr.bf16.mxu0 0
        %3061 = vmatpush1.bf16.msra.mxu0 0
        %3062 = vmatprep.subr.bf16.mxu0 0
        %3063 = vmatpush1.bf16.msra.mxu0 0
        %3064 = vmatprep.mubr.bf16.mxu0 0
        %3065 = vmatmul.mubr.bf16.gmra.mrb[0].mxu0 %v2879
        %v3066 = vpop.f32.mrb[0].mxu0
        %v3067 = vadd.f32 0.0, %v3066
        %v3068 = vpop.f32.mrb[0].mxu0
        %v3069 = vpop.f32.mrb[0].mxu0
        %v3070 = vpop.f32.mrb[0].mxu0
        %3071 = vdwg.mxu0
        %v3076 = vunpack.c.l.b16 %v2866
        %v3077 = vunpack.c.l.b16 %v2867
        %v3078 = vunpack.c.l.b16 %v2868
        %v3079 = vunpack.c.l.b16 %v2869
        %v3080 = vpack.c.b16 %v3077, %v3076
        %v3081 = vpack.c.b16 %v3079, %v3078
        %v3084 = vsel %vm836, %v1854, 0
        %3086 = vmatprep.subr.bf16.mxu0 0
        %3087 = vmatpush1.bf16.msra.mxu0 %v3080
        %3088 = vmatprep.subr.bf16.mxu0 0
        %3089 = vmatpush1.bf16.msra.mxu0 %v3081
        %3090 = vmatprep.subr.bf16.mxu0 0
        %3091 = vmatpush1.bf16.msra.mxu0 0
        %3092 = vmatprep.subr.bf16.mxu0 0
        %3093 = vmatpush1.bf16.msra.mxu0 0
        %3094 = vmatprep.subr.bf16.mxu0 0
        %3095 = vmatpush1.bf16.msra.mxu0 0
        %3096 = vmatprep.subr.bf16.mxu0 0
        %3097 = vmatpush1.bf16.msra.mxu0 0
        %3098 = vmatprep.subr.bf16.mxu0 0
        %3099 = vmatpush1.bf16.msra.mxu0 0
        %3100 = vmatprep.subr.bf16.mxu0 0
        %3101 = vmatpush1.bf16.msra.mxu0 0
        %3102 = vmatprep.subr.bf16.mxu0 0
        %3103 = vmatpush1.bf16.msra.mxu0 0
        %3104 = vmatprep.subr.bf16.mxu0 0
        %3105 = vmatpush1.bf16.msra.mxu0 0
        %3106 = vmatprep.subr.bf16.mxu0 0
        %3107 = vmatpush1.bf16.msra.mxu0 0
        %3108 = vmatprep.subr.bf16.mxu0 0
        %3109 = vmatpush1.bf16.msra.mxu0 0
        %3110 = vmatprep.subr.bf16.mxu0 0
        %3111 = vmatpush1.bf16.msra.mxu0 0
        %3112 = vmatprep.subr.bf16.mxu0 0
        %3113 = vmatpush1.bf16.msra.mxu0 0
        %3114 = vmatprep.subr.bf16.mxu0 0
        %3115 = vmatpush1.bf16.msra.mxu0 0
        %3116 = vmatprep.subr.bf16.mxu0 0
        %3117 = vmatpush1.bf16.msra.mxu0 0
        %3118 = vmatprep.mubr.bf16.mxu0 0
        %3119 = vmatmul.mubr.bf16.gmra.mrb[0].mxu0 %v3084
        %v3120 = vpop.f32.mrb[0].mxu0
        %v3121 = vadd.f32 0.0, %v3120
        %v3122 = vpop.f32.mrb[0].mxu0
        %v3123 = vpop.f32.mrb[0].mxu0
        %v3124 = vpop.f32.mrb[0].mxu0
        %3125 = vdwg.mxu0
        %v3126 = vadd.f32 %v3024, %v3121
        %v3127 = vpack.c.bf16 %v3067, %v3067
        %v3132 = vunpack.c.l.b16 %v2874
        %v3133 = vunpack.c.l.b16 %v2875
        %v3134 = vunpack.c.l.b16 %v2876
        %v3135 = vunpack.c.l.b16 %v2877
        %v3136 = vpack.c.b16 %v3133, %v3132
        %v3137 = vpack.c.b16 %v3135, %v3134
        %v3141 = vsel %vm836, %v3127, 0
        %3143 = vmatprep.subr.bf16.mxu0 0
        %3144 = vmatpush1.bf16.msra.mxu0 %v3136
        %3145 = vmatprep.subr.bf16.mxu0 0
        %3146 = vmatpush1.bf16.msra.mxu0 %v3137
        %3147 = vmatprep.subr.bf16.mxu0 0
        %3148 = vmatpush1.bf16.msra.mxu0 0
        %3149 = vmatprep.subr.bf16.mxu0 0
        %3150 = vmatpush1.bf16.msra.mxu0 0
        %3151 = vmatprep.subr.bf16.mxu0 0
        %3152 = vmatpush1.bf16.msra.mxu0 0
        %3153 = vmatprep.subr.bf16.mxu0 0
        %3154 = vmatpush1.bf16.msra.mxu0 0
        %3155 = vmatprep.subr.bf16.mxu0 0
        %3156 = vmatpush1.bf16.msra.mxu0 0
        %3157 = vmatprep.subr.bf16.mxu0 0
        %3158 = vmatpush1.bf16.msra.mxu0 0
        %3159 = vmatprep.subr.bf16.mxu0 0
        %3160 = vmatpush1.bf16.msra.mxu0 0
        %3161 = vmatprep.subr.bf16.mxu0 0
        %3162 = vmatpush1.bf16.msra.mxu0 0
        %3163 = vmatprep.subr.bf16.mxu0 0
        %3164 = vmatpush1.bf16.msra.mxu0 0
        %3165 = vmatprep.subr.bf16.mxu0 0
        %3166 = vmatpush1.bf16.msra.mxu0 0
        %3167 = vmatprep.subr.bf16.mxu0 0
        %3168 = vmatpush1.bf16.msra.mxu0 0
        %3169 = vmatprep.subr.bf16.mxu0 0
        %3170 = vmatpush1.bf16.msra.mxu0 0
        %3171 = vmatprep.subr.bf16.mxu0 0
        %3172 = vmatpush1.bf16.msra.mxu0 0
        %3173 = vmatprep.subr.bf16.mxu0 0
        %3174 = vmatpush1.bf16.msra.mxu0 0
        %3175 = vmatprep.mubr.bf16.mxu0 0
        %3176 = vmatmul.mubr.bf16.gmra.mrb[0].mxu0 %v3141
        %v3177 = vpop.f32.mrb[0].mxu0
        %v3178 = vadd.f32 0.0, %v3177
        %v3179 = vpop.f32.mrb[0].mxu0
        %v3180 = vpop.f32.mrb[0].mxu0
        %v3181 = vpop.f32.mrb[0].mxu0
        %3182 = vdwg.mxu0
        %v3183 = vadd.f32 %v3126, %v3178
        %vm3184 = vcmp.ge.f32.partialorder %v3183, 0.0
        %v3185 = vmul.f32 %v3183, 0.01
        %v3186 = vsel %vm3184, %v3183, %v3185
        %v3187 = vpack.c.bf16 %v3186, %v3186
        %v3188 = vld [vmem:[%s15] sm:$0xf]
        %v3189 = vld [vmem:[%s15 + $0x4] sm:$0xf]
        %v3190 = vld [vmem:[%s15 + $0x8] sm:$0xf]
        %v3191 = vld [vmem:[%s15 + $0xc] sm:$0xf]
        %v3192 = vld [vmem:[%s15 + $0x10] sm:$0xf]
        %v3193 = vld [vmem:[%s15 + $0x14] sm:$0xf]
        %v3194 = vld [vmem:[%s15 + $0x18] sm:$0xf]
        %v3195 = vld [vmem:[%s15 + $0x1c] sm:$0xf]
        %v3196 = vld [vmem:[%s15 + $0x20] sm:$0xf]
        %v3197 = vld [vmem:[%s15 + $0x24] sm:$0xf]
        %v3198 = vld [vmem:[%s15 + $0x28] sm:$0xf]
        %v3199 = vld [vmem:[%s15 + $0x2c] sm:$0xf]
        %v3204 = vunpack.c.l.b16 %v3192
        %v3205 = vunpack.c.l.b16 %v3193
        %v3206 = vunpack.c.l.b16 %v3194
        %v3207 = vunpack.c.l.b16 %v3195
        %v3208 = vpack.c.b16 %v3205, %v3204
        %v3209 = vpack.c.b16 %v3207, %v3206
        %3212 = vmatprep.subr.bf16.mxu0 0
        %3213 = vmatpush1.bf16.msra.mxu0 %v3208
        %3214 = vmatprep.subr.bf16.mxu0 0
        %3215 = vmatpush1.bf16.msra.mxu0 %v3209
        %3216 = vmatprep.subr.bf16.mxu0 0
        %3217 = vmatpush1.bf16.msra.mxu0 0
        %3218 = vmatprep.subr.bf16.mxu0 0
        %3219 = vmatpush1.bf16.msra.mxu0 0
        %3220 = vmatprep.subr.bf16.mxu0 0
        %3221 = vmatpush1.bf16.msra.mxu0 0
        %3222 = vmatprep.subr.bf16.mxu0 0
        %3223 = vmatpush1.bf16.msra.mxu0 0
        %3224 = vmatprep.subr.bf16.mxu0 0
        %3225 = vmatpush1.bf16.msra.mxu0 0
        %3226 = vmatprep.subr.bf16.mxu0 0
        %3227 = vmatpush1.bf16.msra.mxu0 0
        %3228 = vmatprep.subr.bf16.mxu0 0
        %3229 = vmatpush1.bf16.msra.mxu0 0
        %3230 = vmatprep.subr.bf16.mxu0 0
        %3231 = vmatpush1.bf16.msra.mxu0 0
        %3232 = vmatprep.subr.bf16.mxu0 0
        %3233 = vmatpush1.bf16.msra.mxu0 0
        %3234 = vmatprep.subr.bf16.mxu0 0
        %3235 = vmatpush1.bf16.msra.mxu0 0
        %3236 = vmatprep.subr.bf16.mxu0 0
        %3237 = vmatpush1.bf16.msra.mxu0 0
        %3238 = vmatprep.subr.bf16.mxu0 0
        %3239 = vmatpush1.bf16.msra.mxu0 0
        %3240 = vmatprep.subr.bf16.mxu0 0
        %3241 = vmatpush1.bf16.msra.mxu0 0
        %3242 = vmatprep.subr.bf16.mxu0 0
        %3243 = vmatpush1.bf16.msra.mxu0 0
        %3244 = vmatprep.mubr.bf16.mxu0 0
        %3245 = vmatmul.mubr.bf16.gmra.mrb[0].mxu0 %v3084
        %v3246 = vpop.f32.mrb[0].mxu0
        %v3247 = vadd.f32 0.0, %v3246
        %v3248 = vpop.f32.mrb[0].mxu0
        %v3249 = vpop.f32.mrb[0].mxu0
        %v3250 = vpop.f32.mrb[0].mxu0
        %3251 = vdwg.mxu0
        %v3256 = vunpack.c.l.b16 %v3188
        %v3257 = vunpack.c.l.b16 %v3189
        %v3258 = vunpack.c.l.b16 %v3190
        %v3259 = vunpack.c.l.b16 %v3191
        %v3260 = vpack.c.b16 %v3257, %v3256
        %v3261 = vpack.c.b16 %v3259, %v3258
        %3264 = vmatprep.subr.bf16.mxu0 0
        %3265 = vmatpush1.bf16.msra.mxu0 %v3260
        %3266 = vmatprep.subr.bf16.mxu0 0
        %3267 = vmatpush1.bf16.msra.mxu0 %v3261
        %3268 = vmatprep.subr.bf16.mxu0 0
        %3269 = vmatpush1.bf16.msra.mxu0 0
        %3270 = vmatprep.subr.bf16.mxu0 0
        %3271 = vmatpush1.bf16.msra.mxu0 0
        %3272 = vmatprep.subr.bf16.mxu0 0
        %3273 = vmatpush1.bf16.msra.mxu0 0
        %3274 = vmatprep.subr.bf16.mxu0 0
        %3275 = vmatpush1.bf16.msra.mxu0 0
        %3276 = vmatprep.subr.bf16.mxu0 0
        %3277 = vmatpush1.bf16.msra.mxu0 0
        %3278 = vmatprep.subr.bf16.mxu0 0
        %3279 = vmatpush1.bf16.msra.mxu0 0
        %3280 = vmatprep.subr.bf16.mxu0 0
        %3281 = vmatpush1.bf16.msra.mxu0 0
        %3282 = vmatprep.subr.bf16.mxu0 0
        %3283 = vmatpush1.bf16.msra.mxu0 0
        %3284 = vmatprep.subr.bf16.mxu0 0
        %3285 = vmatpush1.bf16.msra.mxu0 0
        %3286 = vmatprep.subr.bf16.mxu0 0
        %3287 = vmatpush1.bf16.msra.mxu0 0
        %3288 = vmatprep.subr.bf16.mxu0 0
        %3289 = vmatpush1.bf16.msra.mxu0 0
        %3290 = vmatprep.subr.bf16.mxu0 0
        %3291 = vmatpush1.bf16.msra.mxu0 0
        %3292 = vmatprep.subr.bf16.mxu0 0
        %3293 = vmatpush1.bf16.msra.mxu0 0
        %3294 = vmatprep.subr.bf16.mxu0 0
        %3295 = vmatpush1.bf16.msra.mxu0 0
        %3296 = vmatprep.mubr.bf16.mxu0 0
        %3297 = vmatmul.mubr.bf16.gmra.mrb[0].mxu0 %v1809
        %v3298 = vpop.f32.mrb[0].mxu0
        %v3299 = vadd.f32 %v3247, %v3298
        %v3300 = vpop.f32.mrb[0].mxu0
        %v3301 = vpop.f32.mrb[0].mxu0
        %v3302 = vpop.f32.mrb[0].mxu0
        %3303 = vdwg.mxu0
        %v3308 = vunpack.c.l.b16 %v3196
        %v3309 = vunpack.c.l.b16 %v3197
        %v3310 = vunpack.c.l.b16 %v3198
        %v3311 = vunpack.c.l.b16 %v3199
        %v3312 = vpack.c.b16 %v3309, %v3308
        %v3313 = vpack.c.b16 %v3311, %v3310
        %v3317 = vsel %vm836, %v3187, 0
        %3319 = vmatprep.subr.bf16.mxu0 0
        %3320 = vmatpush1.bf16.msra.mxu0 %v3312
        %3321 = vmatprep.subr.bf16.mxu0 0
        %3322 = vmatpush1.bf16.msra.mxu0 %v3313
        %3323 = vmatprep.subr.bf16.mxu0 0
        %3324 = vmatpush1.bf16.msra.mxu0 0
        %3325 = vmatprep.subr.bf16.mxu0 0
        %3326 = vmatpush1.bf16.msra.mxu0 0
        %3327 = vmatprep.subr.bf16.mxu0 0
        %3328 = vmatpush1.bf16.msra.mxu0 0
        %3329 = vmatprep.subr.bf16.mxu0 0
        %3330 = vmatpush1.bf16.msra.mxu0 0
        %3331 = vmatprep.subr.bf16.mxu0 0
        %3332 = vmatpush1.bf16.msra.mxu0 0
        %3333 = vmatprep.subr.bf16.mxu0 0
        %3334 = vmatpush1.bf16.msra.mxu0 0
        %3335 = vmatprep.subr.bf16.mxu0 0
        %3336 = vmatpush1.bf16.msra.mxu0 0
        %3337 = vmatprep.subr.bf16.mxu0 0
        %3338 = vmatpush1.bf16.msra.mxu0 0
        %3339 = vmatprep.subr.bf16.mxu0 0
        %3340 = vmatpush1.bf16.msra.mxu0 0
        %3341 = vmatprep.subr.bf16.mxu0 0
        %3342 = vmatpush1.bf16.msra.mxu0 0
        %3343 = vmatprep.subr.bf16.mxu0 0
        %3344 = vmatpush1.bf16.msra.mxu0 0
        %3345 = vmatprep.subr.bf16.mxu0 0
        %3346 = vmatpush1.bf16.msra.mxu0 0
        %3347 = vmatprep.subr.bf16.mxu0 0
        %3348 = vmatpush1.bf16.msra.mxu0 0
        %3349 = vmatprep.subr.bf16.mxu0 0
        %3350 = vmatpush1.bf16.msra.mxu0 0
        %3351 = vmatprep.mubr.bf16.mxu0 0
        %3352 = vmatmul.mubr.bf16.gmra.mrb[0].mxu0 %v3317
        %v3353 = vpop.f32.mrb[0].mxu0
        %v3354 = vadd.f32 0.0, %v3353
        %v3355 = vpop.f32.mrb[0].mxu0
        %v3356 = vpop.f32.mrb[0].mxu0
        %v3357 = vpop.f32.mrb[0].mxu0
        %3358 = vdwg.mxu0
        %v3359 = vadd.f32 %v3299, %v3354
        %v3360 = vld [vmem:[%s16] sm:$0x1]
        %v3362 = vlaneseq
        %v3363 = vshrl.u32 %v3362, 7
        %v3364 = vsub.s32 0, %v3363
        %v3365 = vrot.slane %v3360, %v3364
        %v3367 = vadd.f32 %v3359, %v3365
        %vm3368 = vcmp.ge.f32.partialorder %v3367, 0.0
        %v3369 = vmul.f32 %v3367, 0.01
        %v3370 = vsel %vm3368, %v3367, %v3369
        %3371 = vst.msk [vmem:[%s662] sm:$0xff] %vm836, %v3370
        %v3372 = vpack.c.bf16 %v3370, %v3370
        %v3373 = vld [vmem:[%s17] sm:$0xf]
        %v3374 = vld [vmem:[%s17 + $0x4] sm:$0xf]
        %v3375 = vld [vmem:[%s17 + $0x8] sm:$0xf]
        %v3376 = vld [vmem:[%s17 + $0xc] sm:$0xf]
        %v3377 = vld [vmem:[%s18] sm:$0x1]
        %v3379 = vlaneseq
        %v3380 = vshrl.u32 %v3379, 7
        %v3381 = vsub.s32 0, %v3380
        %v3382 = vrot.slane %v3377, %v3381
        %v3388 = vunpack.c.l.b16 %v3373
        %v3389 = vunpack.c.l.b16 %v3374
        %v3390 = vunpack.c.l.b16 %v3375
        %v3391 = vunpack.c.l.b16 %v3376
        %v3392 = vpack.c.b16 %v3389, %v3388
        %v3393 = vpack.c.b16 %v3391, %v3390
        %v3397 = vsel %vm836, %v3372, 0
        %3399 = vmatprep.subr.bf16.mxu0 0
        %3400 = vmatpush1.bf16.msra.mxu0 %v3392
        %3401 = vmatprep.subr.bf16.mxu0 0
        %3402 = vmatpush1.bf16.msra.mxu0 %v3393
        %3403 = vmatprep.subr.bf16.mxu0 0
        %3404 = vmatpush1.bf16.msra.mxu0 0
        %3405 = vmatprep.subr.bf16.mxu0 0
        %3406 = vmatpush1.bf16.msra.mxu0 0
        %3407 = vmatprep.subr.bf16.mxu0 0
        %3408 = vmatpush1.bf16.msra.mxu0 0
        %3409 = vmatprep.subr.bf16.mxu0 0
        %3410 = vmatpush1.bf16.msra.mxu0 0
        %3411 = vmatprep.subr.bf16.mxu0 0
        %3412 = vmatpush1.bf16.msra.mxu0 0
        %3413 = vmatprep.subr.bf16.mxu0 0
        %3414 = vmatpush1.bf16.msra.mxu0 0
        %3415 = vmatprep.subr.bf16.mxu0 0
        %3416 = vmatpush1.bf16.msra.mxu0 0
        %3417 = vmatprep.subr.bf16.mxu0 0
        %3418 = vmatpush1.bf16.msra.mxu0 0
        %3419 = vmatprep.subr.bf16.mxu0 0
        %3420 = vmatpush1.bf16.msra.mxu0 0
        %3421 = vmatprep.subr.bf16.mxu0 0
        %3422 = vmatpush1.bf16.msra.mxu0 0
        %3423 = vmatprep.subr.bf16.mxu0 0
        %3424 = vmatpush1.bf16.msra.mxu0 0
        %3425 = vmatprep.subr.bf16.mxu0 0
        %3426 = vmatpush1.bf16.msra.mxu0 0
        %3427 = vmatprep.subr.bf16.mxu0 0
        %3428 = vmatpush1.bf16.msra.mxu0 0
        %3429 = vmatprep.subr.bf16.mxu0 0
        %3430 = vmatpush1.bf16.msra.mxu0 0
        %3431 = vmatprep.mubr.bf16.mxu0 0
        %3432 = vmatmul.mubr.bf16.gmra.mrb[0].mxu0 %v3397
        %v3433 = vpop.f32.mrb[0].mxu0
        %v3434 = vadd.f32 %v3382, %v3433
        %v3435 = vpop.f32.mrb[0].mxu0
        %v3436 = vpop.f32.mrb[0].mxu0
        %v3437 = vpop.f32.mrb[0].mxu0
        %3438 = vdwg.mxu0
        %vm3439 = vcmask 15360
        %3440 = vst.msk [vmem:[%s676] sm:$0xff] %vm3439, %v3434
        %s3441 = sand.u32 %s455, 1
        %s3442 = scalar_lea.sflag [#allocation5], %s3441
        %s3443 = sand.u32 %s455, 1
        %s3444 = smul.addr %s3443, 16
        %s3445 = scalar_lea.vmem [#allocation4], %s3444
        %s3446 = sand.u32 %s481, 1
        %s3447 = scalar_lea.sflag [#allocation7], %s3446
        %s3448 = sand.u32 %s481, 1
        %s3449 = smul.addr %s3448, 8
        %s3450 = scalar_lea.vmem [#allocation6], %s3449
        %p3451 = scmp.lt.s32.totalorder %s43, 1
        %s3452 = scalar_select %p3451, %s43, 1
        %s3453 = smul.addr %s3452, 8
        %s3454 = scalar_lea.vmem %s21, %s3453
        // Predicated region
        $region97: #{tpu_custom_call.1} parent=95 // pred_check
          %p3455 = pneg %p465
        $region98: #{tpu_custom_call.1} parent=95 // pred_check_branch
          %3457 = sbr.rel (%p3455) target = $region100
        $region99: #{tpu_custom_call.1} parent=95 // pred_region
          %s3459 = ssub.s32 256, 256
          %3460 = vsyncadd %s3442, %s3459
          %s3461 = smul.addr %s43, 2
          %s3462 = smul.addr %s3461, 128
          %s3463 = scalar_lea.hbm %s19, %s3462
          %s3464 = sshll.u32 %s3445, 4
          %s3465 = int_to_ptr.vmem [resolvable:$true] %s3464
          %3470 = dma.vmem_to_hbm [thread:$0]  %s3465, 256, %s3463, %s3442, 128, 128, 8
        $region100: #{tpu_custom_call.1} parent=95 // pred_fallthru
          _
        // Predicated region
        $region101: #{tpu_custom_call.1} parent=95 // pred_check
          %p3471 = pneg %p491
        $region102: #{tpu_custom_call.1} parent=95 // pred_check_branch
          %3473 = sbr.rel (%p3471) target = $region104
        $region103: #{tpu_custom_call.1} parent=95 // pred_region
          %s3475 = ssub.s32 128, 128
          %3476 = vsyncadd %s3447, %s3475
          %s3477 = smul.addr %s43, 128
          %s3478 = scalar_lea.hbm %s20, %s3477
          %s3480 = sshll.u32 %s3450, 4
          %s3481 = int_to_ptr.vmem [resolvable:$true] %s3480
          %3483 = dma.vmem_to_hbm [thread:$0]  %s3481, 128, %s3478, %s3447
        $region104: #{tpu_custom_call.1} parent=95 // pred_fallthru
          _
        // Predicated region
        $region105: #{tpu_custom_call.1} parent=95 // pred_check
          %p3484 = pneg %p517
        $region106: #{tpu_custom_call.1} parent=95 // pred_check_branch
          %3486 = sbr.rel (%p3484) target = $region108
        $region107: #{tpu_custom_call.1} parent=95 // pred_region
          _
        $region108: #{tpu_custom_call.1} parent=95 // pred_fallthru
          _
      $region96: #{tpu_custom_call.1} parent=5 // pred_fallthru
        _
      %p3487 = scmp.le.s32.totalorder 2, %s38
      // Predicated region
      $region109: #{tpu_custom_call.1} parent=5 // pred_check
        %p3488 = pneg %p3487
      $region110: #{tpu_custom_call.1} parent=5 // pred_check_branch
        %3490 = sbr.rel (%p3488) target = $region112
      $region111: #{tpu_custom_call.1} parent=5 // pred_region
        %s3491 = ssub.s32 %s38, 2
        // Predicated region
        $region113: #{tpu_custom_call.1} parent=111 // pred_check
          %p3492 = pneg %p471
        $region114: #{tpu_custom_call.1} parent=111 // pred_check_branch
          %3494 = sbr.rel (%p3492) target = $region116
        $region115: #{tpu_custom_call.1} parent=111 // pred_region
          %s3495 = sand.u32 %s456, 1
          %s3496 = scalar_lea.sflag [#allocation5], %s3495
          %s3497 = sand.u32 %s456, 1
          %s3498 = smul.addr %s3497, 16
          %s3499 = scalar_lea.vmem [#allocation4], %s3498
          %3500 = dma.done %s3496, 256
        $region116: #{tpu_custom_call.1} parent=111 // pred_fallthru
          _
        // Predicated region
        $region117: #{tpu_custom_call.1} parent=111 // pred_check
          %p3501 = pneg %p497
        $region118: #{tpu_custom_call.1} parent=111 // pred_check_branch
          %3503 = sbr.rel (%p3501) target = $region120
        $region119: #{tpu_custom_call.1} parent=111 // pred_region
          %s3504 = sand.u32 %s482, 1
          %s3505 = scalar_lea.sflag [#allocation7], %s3504
          %s3506 = sand.u32 %s482, 1
          %s3507 = smul.addr %s3506, 8
          %s3508 = scalar_lea.vmem [#allocation6], %s3507
          %3509 = dma.done %s3505, 128
        $region120: #{tpu_custom_call.1} parent=111 // pred_fallthru
          _
        // Predicated region
        $region121: #{tpu_custom_call.1} parent=111 // pred_check
          %p3510 = pneg %p523
        $region122: #{tpu_custom_call.1} parent=111 // pred_check_branch
          %3512 = sbr.rel (%p3510) target = $region124
        $region123: #{tpu_custom_call.1} parent=111 // pred_region
          %p3513 = scmp.lt.s32.totalorder %s44, 1
          %s3514 = scalar_select %p3513, %s44, 1
          %s3515 = smul.addr %s3514, 8
          %s3516 = scalar_lea.vmem %s21, %s3515
        $region124: #{tpu_custom_call.1} parent=111 // pred_fallthru
          _
      $region112: #{tpu_custom_call.1} parent=5 // pred_fallthru
        _
    $region6: #{tpu_custom_call.1} parent=1 // loop_footer
      %s42 = sadd.s32 1, %s38
    $region7: #{tpu_custom_call.1} parent=1 // loop_footer_branch
      %37 = sbr.rel target = $region3
    $region8: #{tpu_custom_call.1} parent=1 // loop_exit
      _
    %3517 = vsyncpa [#allocation5], 1
    %s3518 = scalar_lea.sflag [#allocation5], 1
    %3519 = vsyncpa %s3518, 1
    %3520 = vsyncpa [#allocation7], 1
    %s3521 = scalar_lea.sflag [#allocation7], 1
    %3522 = vsyncpa %s3521, 1

</llo_original>
